<compile_context>
chip_gen: v7x
topology: tpu7x:2x2x1
jax: 0.10.0
libtpu: 0.0.40
codegen_flags: <defaults>
</compile_context>

<pallas_src>
import functools

import numpy as np
import jax
import jax.numpy as jnp
from jax.experimental import pallas as pl
from jax.experimental.pallas import tpu as pltpu

PAD_A = 1.0e7      # padding for A points (never matches)
PAD_B = -1.0e7     # padding for B points (never matches)
TILE_NA = 512      # A points per tile (sublane axis of the distance tile)
TILE_NB = 1024     # B points per tile (lane axis of the distance tile)
MIN_PAD = 1024     # smallest shape bucket (must be divisible by both tiles)


def _bf_match_kernel(a_ref, b_ref, o_ref, *, thresh_sq):
    """One (direction d, B-tile i, A-tile k) grid step.

    a_ref: (1, TILE_NA, 2) f32  point-major A tile (x, y columns)
    b_ref: (1, 2, TILE_NB) f32  coordinate-major B tile (row0=x, row1=y)
    o_ref: (1, 1, TILE_NB) f32  resident across k; holds running min of d^2
                                per B point, converted to 0/1 flags at last k.
    """
    k = pl.program_id(2)

    ax = a_ref[0, :, 0:1]          # (TILE_NA, 1)
    ay = a_ref[0, :, 1:2]          # (TILE_NA, 1)
    bx = b_ref[0, 0:1, :]          # (1, TILE_NB)
    by = b_ref[0, 1:2, :]          # (1, TILE_NB)

    dx = bx - ax                   # (TILE_NA, TILE_NB) broadcast on the VPU
    dy = by - ay
    d2 = dx * dx + dy * dy
    tile_min = jnp.min(d2, axis=0, keepdims=True)   # (1, TILE_NB) lane-dense

    @pl.when(k == 0)
    def _():
        o_ref[0] = tile_min

    @pl.when(k != 0)
    def _():
        o_ref[0] = jnp.minimum(o_ref[0], tile_min)

    @pl.when(k == pl.num_programs(2) - 1)
    def _():
        # strict '<' to match the reference `dis[dis < threshold] = 1`
        o_ref[0] = jnp.where(o_ref[0] < thresh_sq, 1.0, 0.0).astype(jnp.float32)


@functools.lru_cache(maxsize=None)
def _build_match_fn(npad, thresh_sq):
    """Compile-once-per-bucket builder of the batched match kernel."""
    nat = npad // TILE_NA
    nbt = npad // TILE_NB
    kernel = functools.partial(_bf_match_kernel, thresh_sq=thresh_sq)
    call = pl.pallas_call(
        kernel,
        out_shape=jax.ShapeDtypeStruct((2, 1, npad), jnp.float32),
        grid=(2, nbt, nat),
        in_specs=[
            # A source, point-major: (2 directions, npad, 2)
            pl.BlockSpec((1, TILE_NA, 2), lambda d, i, k: (d, k, 0)),
            # B source, coordinate-major (lane-dense): (2 directions, 2, npad)
            pl.BlockSpec((1, 2, TILE_NB), lambda d, i, k: (d, 0, i)),
        ],
        # lane-dense per-B-point match flags; host sums them per direction
        out_specs=pl.BlockSpec((1, 1, TILE_NB), lambda d, i, k: (d, 0, i)),
        compiler_params=pltpu.CompilerParams(
            dimension_semantics=("parallel", "parallel", "arbitrary"),
            vmem_limit_bytes=32 * 1024 * 1024,
        ),
    )
    return jax.jit(call)


def _bucket(n):
    n = max(int(n), 1)
    return max(MIN_PAD, 1 << (n - 1).bit_length())


def _pallas_bf_counts(gt_pts, pr_pts, threshold):
    """Both match directions in one kernel call.

    Returns (matched_pr, matched_gt):
      matched_pr = # prediction points with a GT point strictly closer than threshold
      matched_gt = # GT points with a prediction point strictly closer than threshold
    """
    gt_pts = np.asarray(gt_pts, np.float32).reshape(-1, 2)
    pr_pts = np.asarray(pr_pts, np.float32).reshape(-1, 2)
    n_gt, n_pr = gt_pts.shape[0], pr_pts.shape[0]
    npad = _bucket(max(n_gt, n_pr))

    def point_major(pts, n):
        out = np.full((npad, 2), PAD_A, np.float32)
        out[:n] = pts
        return out

    def coord_major(pts, n):
        out = np.full((2, npad), PAD_B, np.float32)
        out[0, :n] = pts[:, 0]
        out[1, :n] = pts[:, 1]
        return out

    # direction 0: A = GT, B = prediction  (precision numerator)
    # direction 1: A = prediction, B = GT  (recall numerator)
    a_src = np.stack([point_major(gt_pts, n_gt), point_major(pr_pts, n_pr)])
    b_src = np.stack([coord_major(pr_pts, n_pr), coord_major(gt_pts, n_gt)])

    fn = _build_match_fn(int(npad), float(threshold) ** 2)
    flags = jax.block_until_ready(fn(jnp.asarray(a_src), jnp.asarray(b_src)))
    flags = np.asarray(flags)
    matched_pr = int(round(float(flags[0, 0].sum())))
    matched_gt = int(round(float(flags[1, 0].sum())))
    return matched_pr, matched_gt


def _boundary_points(mask):
    """Boundary pixels of a binary mask as (N, 2) [x, y] float32 points.

    # TODO(synk): cv2.findContours(RETR_LIST, CHAIN_APPROX_NONE) traces contours
    # per connected component; this 4-neighbor boundary extraction is an
    # equivalent point-set stand-in (data-dependent, kept on host).
    """
    m = mask.astype(bool)
    if not m.any():
        return np.zeros((0, 2), dtype=np.float32)
    padded = np.pad(m, 1, constant_values=False)
    up = padded[:-2, 1:-1]
    down = padded[2:, 1:-1]
    left = padded[1:-1, :-2]
    right = padded[1:-1, 2:]
    boundary = m & ~(up & down & left & right)
    ys, xs = np.nonzero(boundary)
    return np.stack([xs, ys], axis=1).astype(np.float32)


class SingleClassBFScoreGPU:
    """JAX/Pallas port of single_class_bfscore_gpu (no learned parameters)."""

    def __init__(self, threshold=2):
        self.threshold = threshold

    def calc_precision_recall(self, contours_a, contours_b, threshold):
        length_b = len(contours_b)
        if length_b == 0 or len(contours_a) == 0:
            # reference hits the exception path -> 0
            return 0.0, 0, length_b
        matched_b, _ = _pallas_bf_counts(contours_a, contours_b, threshold)
        return matched_b / length_b, matched_b, length_b

    def forward(self, gt_img, pr_img):
        # TODO(synk): mmcv.imread / cv2.threshold file I/O has no Pallas
        # equivalent; decoded grayscale arrays are accepted directly.
        gt_ = np.asarray(gt_img)
        pr_ = np.asarray(pr_img)
        gt_ = np.where(gt_ > 1, 255, 0).astype(np.uint8)
        pr_ = np.where(pr_ > 1, 255, 0).astype(np.uint8)

        classes_gt = np.unique(gt_)
        classes_pr = np.unique(pr_)
        if not np.array_equiv(classes_gt, classes_pr):
            classes = np.sort(np.unique(np.concatenate((classes_gt, classes_pr))))
        else:
            classes = classes_gt

        m = int(np.max(classes))
        bfscores = np.full(m + 1, np.nan, dtype=float)
        # TODO(synk): cv2.contourArea (areas_gt) is computed but unused in the
        # reference return value; omitted here.

        for target_class in classes:
            if target_class == 0:
                continue
            gt = gt_.copy()
            gt[gt != target_class] = 0
            contours_gt = _boundary_points(gt)

            prediction = pr_.copy()
            prediction[prediction != target_class] = 0
            contours_pr = _boundary_points(prediction)

            if len(contours_gt) == 0 or len(contours_pr) == 0:
                precision = recall = 0.0
            else:
                # both directions in a single pallas_call (batched on grid axis 0)
                matched_pr, matched_gt = _pallas_bf_counts(
                    contours_gt, contours_pr, self.threshold)
                precision = matched_pr / len(contours_pr)
                recall = matched_gt / len(contours_gt)

            f1 = 0.0
            if (precision + recall) > 0:
                f1 = 2 * recall * precision / (recall + precision)
            bfscores[target_class] = f1

        with np.errstate(all="ignore"):
            score = np.nanmean(bfscores[1:]) if m >= 1 else np.nan
        if np.isnan(score):
            return 0.0
        return float(score)

    __call__ = forward


if __name__ == "__main__":
    key = jax.random.PRNGKey(0)
    H = W = 16

    # GT: an 8x8 filled square.
    gt = np.zeros((H, W), dtype=np.uint8)
    gt[4:12, 4:12] = 255

    # Prediction: shifted square + deterministic speckle noise from PRNGKey(0).
    pr = np.zeros((H, W), dtype=np.uint8)
    pr[5:13, 3:11] = 255
    noise = np.array(jax.random.bernoulli(key, 0.05, (H, W)))
    pr = np.where(noise, 255, pr).astype(np.uint8)

    model = SingleClassBFScoreGPU(threshold=2)
    score = model.forward(gt, pr)   # Pallas kernel is invoked (and blocked on) inside
    assert 0.0 <= score <= 1.0
    print("KERNEL_OK")
</pallas_src>

<mosaic_0001>
module attributes {stable_mosaic.version = 11 : i64} {
  func.func @_bf_match_kernel(%arg0: i32, %arg1: i32, %arg2: i32, %arg3: memref<1x512x2xf32, #tpu.memory_space<vmem>>, %arg4: memref<1x2x1024xf32, #tpu.memory_space<vmem>>, %arg5: memref<1x1x1024xf32, #tpu.memory_space<vmem>>) attributes {dimension_semantics = [#tpu.dimension_semantics<parallel>, #tpu.dimension_semantics<parallel>, #tpu.dimension_semantics<arbitrary>], iteration_bounds = array<i64: 2, 1, 2>, scalar_prefetch = 0 : i64, scratch_operands = 0 : i64, tpu.core_type = #tpu.core_type<tc>, window_params = [{transform_indices = @transform_0, window_bounds = array<i64: 1, 512, 2>}, {transform_indices = @transform_1, window_bounds = array<i64: 1, 2, 1024>}, {transform_indices = @transform_2, window_bounds = array<i64: 1, 1, 1024>}]} {
    %c0 = arith.constant 0 : index
    %c0_0 = arith.constant 0 : index
    %c0_1 = arith.constant 0 : index
    %0 = vector.load %arg3[%c0, %c0_0, %c0_1] : memref<1x512x2xf32, #tpu.memory_space<vmem>>, vector<1x512x1xf32>
    %1 = vector.shape_cast %0 : vector<1x512x1xf32> to vector<512x1xf32>
    %c0_2 = arith.constant 0 : index
    %c0_3 = arith.constant 0 : index
    %c1 = arith.constant 1 : index
    %2 = vector.load %arg3[%c0_2, %c0_3, %c1] : memref<1x512x2xf32, #tpu.memory_space<vmem>>, vector<1x512x1xf32>
    %3 = vector.shape_cast %2 : vector<1x512x1xf32> to vector<512x1xf32>
    %c0_4 = arith.constant 0 : index
    %c0_5 = arith.constant 0 : index
    %c0_6 = arith.constant 0 : index
    %4 = vector.load %arg4[%c0_4, %c0_5, %c0_6] : memref<1x2x1024xf32, #tpu.memory_space<vmem>>, vector<1x1x1024xf32>
    %5 = vector.shape_cast %4 : vector<1x1x1024xf32> to vector<1x1024xf32>
    %c0_7 = arith.constant 0 : index
    %c1_8 = arith.constant 1 : index
    %c0_9 = arith.constant 0 : index
    %6 = vector.load %arg4[%c0_7, %c1_8, %c0_9] : memref<1x2x1024xf32, #tpu.memory_space<vmem>>, vector<1x1x1024xf32>
    %7 = vector.shape_cast %6 : vector<1x1x1024xf32> to vector<1x1024xf32>
    %8 = vector.broadcast %5 : vector<1x1024xf32> to vector<512x1024xf32>
    %9 = vector.broadcast %1 : vector<512x1xf32> to vector<512x1024xf32>
    %10 = arith.subf %8, %9 : vector<512x1024xf32>
    %11 = vector.broadcast %7 : vector<1x1024xf32> to vector<512x1024xf32>
    %12 = vector.broadcast %3 : vector<512x1xf32> to vector<512x1024xf32>
    %13 = arith.subf %11, %12 : vector<512x1024xf32>
    %14 = arith.mulf %10, %10 : vector<512x1024xf32>
    %15 = arith.mulf %13, %13 : vector<512x1024xf32>
    %16 = arith.addf %14, %15 : vector<512x1024xf32>
    %cst = arith.constant dense<0x7F800000> : vector<1024xf32>
    %17 = vector.multi_reduction <minimumf>, %16, %cst [0] : vector<512x1024xf32> to vector<1024xf32>
    %18 = vector.shape_cast %17 : vector<1024xf32> to vector<1x1024xf32>
    %c0_i32 = arith.constant 0 : i32
    %19 = arith.cmpi eq, %arg2, %c0_i32 : i32
    %20 = arith.extui %19 : i1 to i32
    %c0_i32_10 = arith.constant 0 : i32
    %21 = arith.cmpi ne, %20, %c0_i32_10 : i32
    scf.if %21 {
      %c0_14 = arith.constant 0 : index
      %c0_15 = arith.constant 0 : index
      %c0_16 = arith.constant 0 : index
      %28 = vector.load %arg5[%c0_14, %c0_15, %c0_16] : memref<1x1x1024xf32, #tpu.memory_space<vmem>>, vector<1x1x1024xf32>
      %29 = vector.shape_cast %28 : vector<1x1x1024xf32> to vector<1x1024xf32>
      %30 = vector.shape_cast %18 : vector<1x1024xf32> to vector<1x1x1024xf32>
      tpu.vector_store %arg5[%c0_14, %c0_15, %c0_16], %30 {strides = array<i32>} : memref<1x1x1024xf32, #tpu.memory_space<vmem>>, vector<1x1x1024xf32>,
    } else {
    }
    %c0_i32_11 = arith.constant 0 : i32
    %22 = arith.cmpi ne, %arg2, %c0_i32_11 : i32
    %23 = arith.extui %22 : i1 to i32
    %c0_i32_12 = arith.constant 0 : i32
    %24 = arith.cmpi ne, %23, %c0_i32_12 : i32
    scf.if %24 {
      %c0_14 = arith.constant 0 : index
      %c0_15 = arith.constant 0 : index
      %c0_16 = arith.constant 0 : index
      %28 = vector.load %arg5[%c0_14, %c0_15, %c0_16] : memref<1x1x1024xf32, #tpu.memory_space<vmem>>, vector<1x1x1024xf32>
      %29 = vector.shape_cast %28 : vector<1x1x1024xf32> to vector<1x1024xf32>
      %30 = arith.minimumf %29, %18 : vector<1x1024xf32>
      %c0_17 = arith.constant 0 : index
      %c0_18 = arith.constant 0 : index
      %c0_19 = arith.constant 0 : index
      %31 = vector.load %arg5[%c0_17, %c0_18, %c0_19] : memref<1x1x1024xf32, #tpu.memory_space<vmem>>, vector<1x1x1024xf32>
      %32 = vector.shape_cast %31 : vector<1x1x1024xf32> to vector<1x1024xf32>
      %33 = vector.shape_cast %30 : vector<1x1024xf32> to vector<1x1x1024xf32>
      tpu.vector_store %arg5[%c0_17, %c0_18, %c0_19], %33 {strides = array<i32>} : memref<1x1x1024xf32, #tpu.memory_space<vmem>>, vector<1x1x1024xf32>,
    } else {
    }
    %c1_i32 = arith.constant 1 : i32
    %25 = arith.cmpi eq, %arg2, %c1_i32 : i32
    %26 = arith.extui %25 : i1 to i32
    %c0_i32_13 = arith.constant 0 : i32
    %27 = arith.cmpi ne, %26, %c0_i32_13 : i32
    scf.if %27 {
      %c0_14 = arith.constant 0 : index
      %c0_15 = arith.constant 0 : index
      %c0_16 = arith.constant 0 : index
      %28 = vector.load %arg5[%c0_14, %c0_15, %c0_16] : memref<1x1x1024xf32, #tpu.memory_space<vmem>>, vector<1x1x1024xf32>
      %29 = vector.shape_cast %28 : vector<1x1x1024xf32> to vector<1x1024xf32>
      %cst_17 = arith.constant 4.000000e+00 : f32
      %30 = vector.broadcast %cst_17 : f32 to vector<1x1024xf32>
      %31 = arith.cmpf olt, %29, %30 : vector<1x1024xf32>
      %cst_18 = arith.constant 1.000000e+00 : f32
      %cst_19 = arith.constant 0.000000e+00 : f32
      %32 = vector.broadcast %cst_18 : f32 to vector<1x1024xf32>
      %33 = vector.broadcast %cst_19 : f32 to vector<1x1024xf32>
      %34 = arith.select %31, %32, %33 : vector<1x1024xi1>, vector<1x1024xf32>
      %c0_20 = arith.constant 0 : index
      %c0_21 = arith.constant 0 : index
      %c0_22 = arith.constant 0 : index
      %35 = vector.load %arg5[%c0_20, %c0_21, %c0_22] : memref<1x1x1024xf32, #tpu.memory_space<vmem>>, vector<1x1x1024xf32>
      %36 = vector.shape_cast %35 : vector<1x1x1024xf32> to vector<1x1024xf32>
      %37 = vector.shape_cast %34 : vector<1x1024xf32> to vector<1x1x1024xf32>
      tpu.vector_store %arg5[%c0_20, %c0_21, %c0_22], %37 {strides = array<i32>} : memref<1x1x1024xf32, #tpu.memory_space<vmem>>, vector<1x1x1024xf32>,
    } else {
    }
    return
  }
  func.func @transform_0(%arg0: i32, %arg1: i32, %arg2: i32) -> (i32, i32, i32) {
    %c0_i32 = arith.constant 0 : i32
    %c0_i32_0 = arith.constant 0 : i32
    return %arg0, %arg2, %c0_i32 : i32, i32, i32
  }
  func.func @transform_1(%arg0: i32, %arg1: i32, %arg2: i32) -> (i32, i32, i32) {
    %c0_i32 = arith.constant 0 : i32
    %c0_i32_0 = arith.constant 0 : i32
    return %arg0, %c0_i32, %arg1 : i32, i32, i32
  }
  func.func @transform_2(%arg0: i32, %arg1: i32, %arg2: i32) -> (i32, i32, i32) {
    %c0_i32 = arith.constant 0 : i32
    %c0_i32_0 = arith.constant 0 : i32
    return %arg0, %c0_i32, %arg1 : i32, i32, i32
  }
}

</mosaic_0001>

<llo_original>
// kernel: tpu_custom_call.1
$region0: #{tpu_custom_call.1}
  #allocation0 [shape = 'u32[]', space=smem, size = 0x4, offset = 0x4, fixed_abs, tag = 'smem constant byte address 0x4 - core index']
  #allocation1 [shape = 'u32[144,128]{1,0:T(1,128)}', space=vmem, size = 0x12000, scoped, tag = 'internal scratch']
  %s0 = inlined_call_operand.vmem [shape: f32[2,1024,2], index: 0, kind: input, shape index: {}]
  %s1 = inlined_call_operand.vmem [shape: f32[2,2,1024], index: 1, kind: input, shape index: {}]
  %s2 = inlined_call_operand.hbm [shape: f32[2,1,1024], index: 2, kind: output, shape index: {}]
  %s3 = sld [smem:[#allocation0]]
  $region53: #{tpu_custom_call.1} parent=0
    _
  %s5 = ssub.s32 1, %s3
  %s6 = scalar_select 0, %s5, %s3
  $region1: #{tpu_custom_call.1} parent=0
    #allocation2 [shape = 'u8[8192]{0}', space=vmem, size = 0x2000, scoped, tag = 'output window, operand 0']
    #allocation3 [shape = 's32[2]{0}', space=sflag, size = 0x8, scoped, tag = 'scoped memory for tpu_custom_call.1']
    %7 = vsyncpa [#allocation3], 0
    %s8 = scalar_lea.sflag [#allocation3], 1
    %9 = vsyncpa %s8, 0
    loop: start=0, step=1, limit=6
    $region2: #{tpu_custom_call.1} parent=1 // loop_pre_header
      _
    $region3: #{tpu_custom_call.1} parent=1 // loop_header
      %s11 = sphi 0, %s15
      %p12 = scmp.ge.s32.totalorder %s11, 6
      %s18 = sphi 0, %s37
      %s19 = sphi 0, %s33
      %s20 = sphi 0, %s29
      %s21 = sphi 0, %s18
      %s22 = sphi 0, %s19
      %s23 = sphi 0, %s20
      %s24 = sphi 0, %s21
      %s25 = sphi 0, %s22
      %s26 = sphi 0, %s23
      %s42 = sphi 0, %s44
      %s45 = sphi 0, %s42
      %s46 = sphi 0, %s45
      %s62 = sphi 0, %s46
      %s70 = sphi 0, %s72
      %s73 = sphi 0, %s70
      %s74 = sphi 0, %s73
      %s90 = sphi 0, %s74
      %s98 = sphi 0, %s100
      %s101 = sphi 0, %s98
      %s102 = sphi 0, %s101
      %s118 = sphi 0, %s102
    $region4: #{tpu_custom_call.1} parent=1 // loop_header_branch
      %14 = sbr.rel (%p12) target = $region8
    $region5: #{tpu_custom_call.1} parent=1 // loop_body
      %s16 = ssub.s32 %s11, 1
      %s17 = ssub.s32 %s11, 2
      %s27 = sadd.s32 1, %s20
      %p28 = scmp.ge.s32.totalorder %s27, 2
      %s29 = scalar_select %p28, 0, %s27
      %s30 = sadd.s32 1, %s19
      %s31 = scalar_select %p28, %s30, %s19
      %p32 = scmp.ge.s32.totalorder %s31, 1
      %s33 = scalar_select %p32, 0, %s31
      %s34 = sadd.s32 1, %s18
      %s35 = scalar_select %p32, %s34, %s18
      %p36 = scmp.ge.s32.totalorder %s35, 2
      %s37 = scalar_select %p36, 0, %s35
      %s38 = ssub.s32 %s18, %s37
      %s39 = ssub.s32 %s20, %s29
      %s40 = sor.u32 %s38, %s39
      %p41 = scmp.eq.s32.totalorder %s40, 0
      %s43 = sadd.s32 %s42, 1
      %s44 = scalar_select %p41, %s42, %s43
      %p47 = pneg %p41
      %p48 = scmp.eq.s32.totalorder %s11, 3
      %p49 = por %p47, %p48
      %p50 = scmp.ne.s32.totalorder %s42, %s45
      %p51 = scmp.eq.s32.totalorder %s11, 0
      %p52 = por %p50, %p51
      %p53 = scmp.ne.s32.totalorder %s42, %s45
      %p54 = scmp.eq.s32.totalorder %s16, 3
      %p55 = por %p53, %p54
      %p56 = scmp.ne.s32.totalorder %s45, %s46
      %p57 = scmp.eq.s32.totalorder %s16, 0
      %p58 = por %p56, %p57
      %p59 = scmp.ne.s32.totalorder %s45, %s46
      %p60 = scmp.eq.s32.totalorder %s17, 3
      %p61 = por %p59, %p60
      %p63 = scmp.ne.s32.totalorder %s46, %s62
      %p64 = scmp.eq.s32.totalorder %s17, 0
      %p65 = por %p63, %p64
      %s66 = ssub.s32 %s18, %s37
      %s67 = ssub.s32 %s19, %s33
      %s68 = sor.u32 %s66, %s67
      %p69 = scmp.eq.s32.totalorder %s68, 0
      %s71 = sadd.s32 %s70, 1
      %s72 = scalar_select %p69, %s70, %s71
      %p75 = pneg %p69
      %p76 = scmp.eq.s32.totalorder %s11, 3
      %p77 = por %p75, %p76
      %p78 = scmp.ne.s32.totalorder %s70, %s73
      %p79 = scmp.eq.s32.totalorder %s11, 0
      %p80 = por %p78, %p79
      %p81 = scmp.ne.s32.totalorder %s70, %s73
      %p82 = scmp.eq.s32.totalorder %s16, 3
      %p83 = por %p81, %p82
      %p84 = scmp.ne.s32.totalorder %s73, %s74
      %p85 = scmp.eq.s32.totalorder %s16, 0
      %p86 = por %p84, %p85
      %p87 = scmp.ne.s32.totalorder %s73, %s74
      %p88 = scmp.eq.s32.totalorder %s17, 3
      %p89 = por %p87, %p88
      %p91 = scmp.ne.s32.totalorder %s74, %s90
      %p92 = scmp.eq.s32.totalorder %s17, 0
      %p93 = por %p91, %p92
      %s94 = ssub.s32 %s18, %s37
      %s95 = ssub.s32 %s19, %s33
      %s96 = sor.u32 %s94, %s95
      %p97 = scmp.eq.s32.totalorder %s96, 0
      %s99 = sadd.s32 %s98, 1
      %s100 = scalar_select %p97, %s98, %s99
      %p103 = pneg %p97
      %p104 = scmp.eq.s32.totalorder %s11, 3
      %p105 = por %p103, %p104
      %p106 = scmp.ne.s32.totalorder %s98, %s101
      %p107 = scmp.eq.s32.totalorder %s11, 0
      %p108 = por %p106, %p107
      %p109 = scmp.ne.s32.totalorder %s98, %s101
      %p110 = scmp.eq.s32.totalorder %s16, 3
      %p111 = por %p109, %p110
      %p112 = scmp.ne.s32.totalorder %s101, %s102
      %p113 = scmp.eq.s32.totalorder %s16, 0
      %p114 = por %p112, %p113
      %p115 = scmp.ne.s32.totalorder %s101, %s102
      %p116 = scmp.eq.s32.totalorder %s17, 3
      %p117 = por %p115, %p116
      %p119 = scmp.ne.s32.totalorder %s102, %s118
      %p120 = scmp.eq.s32.totalorder %s17, 0
      %p121 = por %p119, %p120
      %p122 = scmp.le.s32.totalorder 1, %s11
      %p123 = scmp.lt.s32.totalorder %s11, 5
      %p124 = pnand %p122, %p123
      %p125 = pneg %p124
      // Predicated region
      $region9: #{tpu_custom_call.1} parent=5 // pred_check
        _
      $region10: #{tpu_custom_call.1} parent=5 // pred_check_branch
        %127 = sbr.rel (%p124) target = $region12
      $region11: #{tpu_custom_call.1} parent=5 // pred_region
        %s128 = ssub.s32 %s11, 1
      $region12: #{tpu_custom_call.1} parent=5 // pred_fallthru
        _
      %p129 = scmp.lt.s32.totalorder %s11, 4
      // Predicated region
      $region13: #{tpu_custom_call.1} parent=5 // pred_check
        %p130 = pneg %p129
      $region14: #{tpu_custom_call.1} parent=5 // pred_check_branch
        %132 = sbr.rel (%p130) target = $region16
      $region15: #{tpu_custom_call.1} parent=5 // pred_region
        // Predicated region
        $region17: #{tpu_custom_call.1} parent=15 // pred_check
          %p133 = pneg %p52
        $region18: #{tpu_custom_call.1} parent=15 // pred_check_branch
          %135 = sbr.rel (%p133) target = $region20
        $region19: #{tpu_custom_call.1} parent=15 // pred_region
          %s136 = smul.u32 64, %s20
          %p137 = scmp.lt.s32.totalorder %s18, 1
          %s138 = scalar_select %p137, %s18, 1
          %p139 = scmp.lt.s32.totalorder %s136, 127
          %s140 = scalar_select %p139, %s136, 127
          %s141 = smul.addr %s138, 128
          %s142 = sadd.s32 %s140, %s141
          %s143 = smul.addr %s142, 8
          %s144 = scalar_lea.vmem %s0, %s143
          %s145 = smul.u32 64, %s20
        $region20: #{tpu_custom_call.1} parent=15 // pred_fallthru
          _
        // Predicated region
        $region21: #{tpu_custom_call.1} parent=15 // pred_check
          %p146 = pneg %p80
        $region22: #{tpu_custom_call.1} parent=15 // pred_check_branch
          %148 = sbr.rel (%p146) target = $region24
        $region23: #{tpu_custom_call.1} parent=15 // pred_region
          %s149 = smul.u32 8, %s19
          %p150 = scmp.lt.s32.totalorder %s18, 1
          %s151 = scalar_select %p150, %s18, 1
          %p152 = scmp.lt.s32.totalorder %s149, 7
          %s153 = scalar_select %p152, %s149, 7
          %s154 = smul.addr %s151, 8
          %s155 = sadd.s32 %s153, %s154
          %s156 = smul.addr %s155, 2
          %s157 = scalar_lea.vmem %s1, %s156
          %s158 = smul.u32 8, %s19
        $region24: #{tpu_custom_call.1} parent=15 // pred_fallthru
          _
      $region16: #{tpu_custom_call.1} parent=5 // pred_fallthru
        _
      %p159 = scmp.le.s32.totalorder 1, %s11
      %p160 = scmp.lt.s32.totalorder %s11, 5
      %p161 = pnand %p159, %p160
      %p162 = pneg %p161
      // Predicated region
      $region25: #{tpu_custom_call.1} parent=5 // pred_check
        _
      $region26: #{tpu_custom_call.1} parent=5 // pred_check_branch
        %164 = sbr.rel (%p161) target = $region28
      $region27: #{tpu_custom_call.1} parent=5 // pred_region
        %s165 = ssub.s32 %s11, 1
        %s166 = smul.u32 64, %s23
        %p167 = scmp.lt.s32.totalorder %s21, 1
        %s168 = scalar_select %p167, %s21, 1
        %p169 = scmp.lt.s32.totalorder %s166, 127
        %s170 = scalar_select %p169, %s166, 127
        %s171 = smul.addr %s168, 128
        %s172 = sadd.s32 %s170, %s171
        %s173 = smul.addr %s172, 8
        %s174 = scalar_lea.vmem %s0, %s173
        %p175 = pneg %p58
        %p176 = pneg %p55
        %s177 = smul.u32 8, %s22
        %p178 = scmp.lt.s32.totalorder %s21, 1
        %s179 = scalar_select %p178, %s21, 1
        %p180 = scmp.lt.s32.totalorder %s177, 7
        %s181 = scalar_select %p180, %s177, 7
        %s182 = smul.addr %s179, 8
        %s183 = sadd.s32 %s181, %s182
        %s184 = smul.addr %s183, 2
        %s185 = scalar_lea.vmem %s1, %s184
        %p186 = pneg %p86
        %p187 = pneg %p83
        %p188 = pneg %p114
        %p189 = pneg %p111
        %s190 = sand.u32 %s101, 1
        %s191 = scalar_lea.sflag [#allocation3], %s190
        %s192 = sand.u32 %s101, 1
        %s193 = smul.addr %s192, 8
        %s194 = scalar_lea.vmem [#allocation2], %s193
        %s195 = smul.u32 64, %s23
        %p196 = scmp.lt.s32.totalorder %s21, 1
        %s197 = scalar_select %p196, %s21, 1
        %p198 = scmp.lt.s32.totalorder %s195, 127
        %s199 = scalar_select %p198, %s195, 127
        %s200 = smul.addr %s197, 128
        %s201 = sadd.s32 %s199, %s200
        %s202 = smul.addr %s201, 8
        %s203 = scalar_lea.vmem %s0, %s202
        %s204 = smul.u32 64, %s23
        %s205 = smul.u32 8, %s22
        %p206 = scmp.lt.s32.totalorder %s21, 1
        %s207 = scalar_select %p206, %s21, 1
        %p208 = scmp.lt.s32.totalorder %s205, 7
        %s209 = scalar_select %p208, %s205, 7
        %s210 = smul.addr %s207, 8
        %s211 = sadd.s32 %s209, %s210
        %s212 = smul.addr %s211, 2
        %s213 = scalar_lea.vmem %s1, %s212
        %s214 = smul.u32 8, %s22
        %s215 = smul.u32 8, %s22
        %v216 = vld [vmem:[%s203] sm:$0xff]
        %v217 = vld [vmem:[%s203 + $0x8] sm:$0xff]
        %v218 = vld [vmem:[%s203 + $0x10] sm:$0xff]
        %v219 = vld [vmem:[%s203 + $0x18] sm:$0xff]
        %v220 = vld [vmem:[%s203 + $0x20] sm:$0xff]
        %v221 = vld [vmem:[%s203 + $0x28] sm:$0xff]
        %v222 = vld [vmem:[%s203 + $0x30] sm:$0xff]
        %v223 = vld [vmem:[%s203 + $0x38] sm:$0xff]
        %v224 = vld [vmem:[%s203 + $0x40] sm:$0xff]
        %v225 = vld [vmem:[%s203 + $0x48] sm:$0xff]
        %v226 = vld [vmem:[%s203 + $0x50] sm:$0xff]
        %v227 = vld [vmem:[%s203 + $0x58] sm:$0xff]
        %v228 = vld [vmem:[%s203 + $0x60] sm:$0xff]
        %v229 = vld [vmem:[%s203 + $0x68] sm:$0xff]
        %v230 = vld [vmem:[%s203 + $0x70] sm:$0xff]
        %v231 = vld [vmem:[%s203 + $0x78] sm:$0xff]
        %v232 = vld [vmem:[%s203 + $0x80] sm:$0xff]
        %v233 = vld [vmem:[%s203 + $0x88] sm:$0xff]
        %v234 = vld [vmem:[%s203 + $0x90] sm:$0xff]
        %v235 = vld [vmem:[%s203 + $0x98] sm:$0xff]
        %v236 = vld [vmem:[%s203 + $0xa0] sm:$0xff]
        %v237 = vld [vmem:[%s203 + $0xa8] sm:$0xff]
        %v238 = vld [vmem:[%s203 + $0xb0] sm:$0xff]
        %v239 = vld [vmem:[%s203 + $0xb8] sm:$0xff]
        %v240 = vld [vmem:[%s203 + $0xc0] sm:$0xff]
        %v241 = vld [vmem:[%s203 + $0xc8] sm:$0xff]
        %v242 = vld [vmem:[%s203 + $0xd0] sm:$0xff]
        %v243 = vld [vmem:[%s203 + $0xd8] sm:$0xff]
        %v244 = vld [vmem:[%s203 + $0xe0] sm:$0xff]
        %v245 = vld [vmem:[%s203 + $0xe8] sm:$0xff]
        %v246 = vld [vmem:[%s203 + $0xf0] sm:$0xff]
        %v247 = vld [vmem:[%s203 + $0xf8] sm:$0xff]
        %v248 = vld [vmem:[%s203 + $0x100] sm:$0xff]
        %v249 = vld [vmem:[%s203 + $0x108] sm:$0xff]
        %v250 = vld [vmem:[%s203 + $0x110] sm:$0xff]
        %v251 = vld [vmem:[%s203 + $0x118] sm:$0xff]
        %v252 = vld [vmem:[%s203 + $0x120] sm:$0xff]
        %v253 = vld [vmem:[%s203 + $0x128] sm:$0xff]
        %v254 = vld [vmem:[%s203 + $0x130] sm:$0xff]
        %v255 = vld [vmem:[%s203 + $0x138] sm:$0xff]
        %v256 = vld [vmem:[%s203 + $0x140] sm:$0xff]
        %v257 = vld [vmem:[%s203 + $0x148] sm:$0xff]
        %v258 = vld [vmem:[%s203 + $0x150] sm:$0xff]
        %v259 = vld [vmem:[%s203 + $0x158] sm:$0xff]
        %v260 = vld [vmem:[%s203 + $0x160] sm:$0xff]
        %v261 = vld [vmem:[%s203 + $0x168] sm:$0xff]
        %v262 = vld [vmem:[%s203 + $0x170] sm:$0xff]
        %v263 = vld [vmem:[%s203 + $0x178] sm:$0xff]
        %v264 = vld [vmem:[%s203 + $0x180] sm:$0xff]
        %v265 = vld [vmem:[%s203 + $0x188] sm:$0xff]
        %v266 = vld [vmem:[%s203 + $0x190] sm:$0xff]
        %v267 = vld [vmem:[%s203 + $0x198] sm:$0xff]
        %v268 = vld [vmem:[%s203 + $0x1a0] sm:$0xff]
        %v269 = vld [vmem:[%s203 + $0x1a8] sm:$0xff]
        %v270 = vld [vmem:[%s203 + $0x1b0] sm:$0xff]
        %v271 = vld [vmem:[%s203 + $0x1b8] sm:$0xff]
        %v272 = vld [vmem:[%s203 + $0x1c0] sm:$0xff]
        %v273 = vld [vmem:[%s203 + $0x1c8] sm:$0xff]
        %v274 = vld [vmem:[%s203 + $0x1d0] sm:$0xff]
        %v275 = vld [vmem:[%s203 + $0x1d8] sm:$0xff]
        %v276 = vld [vmem:[%s203 + $0x1e0] sm:$0xff]
        %v277 = vld [vmem:[%s203 + $0x1e8] sm:$0xff]
        %v278 = vld [vmem:[%s203 + $0x1f0] sm:$0xff]
        %v279 = vld [vmem:[%s203 + $0x1f8] sm:$0xff]
        %v280 = vld [vmem:[%s213] ss:$2 sm:$0xff]
        %s281 = scalar_lea.vmem %s213, 1
        %v282 = vld [vmem:[%s281] ss:$2 sm:$0xff]
        %v284 = vlaneseq
        %v285 = vshrl.u32 %v284, 7
        %v286 = vsub.s32 0, %v285
        %v287 = vrot.slane %v280, %v286
        %v288 = vlaneseq
        %v289 = vshrl.u32 %v288, 7
        %v290 = vsub.s32 1, %v289
        %v291 = vrot.slane %v280, %v290
        %v292 = vlaneseq
        %v293 = vshrl.u32 %v292, 7
        %v294 = vsub.s32 2, %v293
        %v295 = vrot.slane %v280, %v294
        %v296 = vlaneseq
        %v297 = vshrl.u32 %v296, 7
        %v298 = vsub.s32 3, %v297
        %v299 = vrot.slane %v280, %v298
        %v300 = vlaneseq
        %v301 = vshrl.u32 %v300, 7
        %v302 = vsub.s32 4, %v301
        %v303 = vrot.slane %v280, %v302
        %v304 = vlaneseq
        %v305 = vshrl.u32 %v304, 7
        %v306 = vsub.s32 5, %v305
        %v307 = vrot.slane %v280, %v306
        %v308 = vlaneseq
        %v309 = vshrl.u32 %v308, 7
        %v310 = vsub.s32 6, %v309
        %v311 = vrot.slane %v280, %v310
        %v312 = vlaneseq
        %v313 = vshrl.u32 %v312, 7
        %v314 = vsub.s32 7, %v313
        %v315 = vrot.slane %v280, %v314
        %325 = vset.pattern.permute.xlu0 0
        %326 = vperm.xlu0 %325, %v216
        %v327 = vpop.permute.xlu0 %326
        %330 = vset.pattern.permute.xlu0 0
        %331 = vperm.xlu0 %330, %v217
        %v332 = vpop.permute.xlu0 %331
        %335 = vset.pattern.permute.xlu0 0
        %336 = vperm.xlu0 %335, %v218
        %v337 = vpop.permute.xlu0 %336
        %340 = vset.pattern.permute.xlu0 0
        %341 = vperm.xlu0 %340, %v219
        %v342 = vpop.permute.xlu0 %341
        %345 = vset.pattern.permute.xlu0 0
        %346 = vperm.xlu0 %345, %v220
        %v347 = vpop.permute.xlu0 %346
        %350 = vset.pattern.permute.xlu0 0
        %351 = vperm.xlu0 %350, %v221
        %v352 = vpop.permute.xlu0 %351
        %355 = vset.pattern.permute.xlu0 0
        %356 = vperm.xlu0 %355, %v222
        %v357 = vpop.permute.xlu0 %356
        %360 = vset.pattern.permute.xlu0 0
        %361 = vperm.xlu0 %360, %v223
        %v362 = vpop.permute.xlu0 %361
        %365 = vset.pattern.permute.xlu0 0
        %366 = vperm.xlu0 %365, %v224
        %v367 = vpop.permute.xlu0 %366
        %370 = vset.pattern.permute.xlu0 0
        %371 = vperm.xlu0 %370, %v225
        %v372 = vpop.permute.xlu0 %371
        %375 = vset.pattern.permute.xlu0 0
        %376 = vperm.xlu0 %375, %v226
        %v377 = vpop.permute.xlu0 %376
        %380 = vset.pattern.permute.xlu0 0
        %381 = vperm.xlu0 %380, %v227
        %v382 = vpop.permute.xlu0 %381
        %385 = vset.pattern.permute.xlu0 0
        %386 = vperm.xlu0 %385, %v228
        %v387 = vpop.permute.xlu0 %386
        %390 = vset.pattern.permute.xlu0 0
        %391 = vperm.xlu0 %390, %v229
        %v392 = vpop.permute.xlu0 %391
        %395 = vset.pattern.permute.xlu0 0
        %396 = vperm.xlu0 %395, %v230
        %v397 = vpop.permute.xlu0 %396
        %400 = vset.pattern.permute.xlu0 0
        %401 = vperm.xlu0 %400, %v231
        %v402 = vpop.permute.xlu0 %401
        %405 = vset.pattern.permute.xlu0 0
        %406 = vperm.xlu0 %405, %v232
        %v407 = vpop.permute.xlu0 %406
        %410 = vset.pattern.permute.xlu0 0
        %411 = vperm.xlu0 %410, %v233
        %v412 = vpop.permute.xlu0 %411
        %415 = vset.pattern.permute.xlu0 0
        %416 = vperm.xlu0 %415, %v234
        %v417 = vpop.permute.xlu0 %416
        %420 = vset.pattern.permute.xlu0 0
        %421 = vperm.xlu0 %420, %v235
        %v422 = vpop.permute.xlu0 %421
        %425 = vset.pattern.permute.xlu0 0
        %426 = vperm.xlu0 %425, %v236
        %v427 = vpop.permute.xlu0 %426
        %430 = vset.pattern.permute.xlu0 0
        %431 = vperm.xlu0 %430, %v237
        %v432 = vpop.permute.xlu0 %431
        %435 = vset.pattern.permute.xlu0 0
        %436 = vperm.xlu0 %435, %v238
        %v437 = vpop.permute.xlu0 %436
        %440 = vset.pattern.permute.xlu0 0
        %441 = vperm.xlu0 %440, %v239
        %v442 = vpop.permute.xlu0 %441
        %445 = vset.pattern.permute.xlu0 0
        %446 = vperm.xlu0 %445, %v240
        %v447 = vpop.permute.xlu0 %446
        %450 = vset.pattern.permute.xlu0 0
        %451 = vperm.xlu0 %450, %v241
        %v452 = vpop.permute.xlu0 %451
        %455 = vset.pattern.permute.xlu0 0
        %456 = vperm.xlu0 %455, %v242
        %v457 = vpop.permute.xlu0 %456
        %460 = vset.pattern.permute.xlu0 0
        %461 = vperm.xlu0 %460, %v243
        %v462 = vpop.permute.xlu0 %461
        %465 = vset.pattern.permute.xlu0 0
        %466 = vperm.xlu0 %465, %v244
        %v467 = vpop.permute.xlu0 %466
        %470 = vset.pattern.permute.xlu0 0
        %471 = vperm.xlu0 %470, %v245
        %v472 = vpop.permute.xlu0 %471
        %475 = vset.pattern.permute.xlu0 0
        %476 = vperm.xlu0 %475, %v246
        %v477 = vpop.permute.xlu0 %476
        %480 = vset.pattern.permute.xlu0 0
        %481 = vperm.xlu0 %480, %v247
        %v482 = vpop.permute.xlu0 %481
        %485 = vset.pattern.permute.xlu0 0
        %486 = vperm.xlu0 %485, %v248
        %v487 = vpop.permute.xlu0 %486
        %490 = vset.pattern.permute.xlu0 0
        %491 = vperm.xlu0 %490, %v249
        %v492 = vpop.permute.xlu0 %491
        %495 = vset.pattern.permute.xlu0 0
        %496 = vperm.xlu0 %495, %v250
        %v497 = vpop.permute.xlu0 %496
        %500 = vset.pattern.permute.xlu0 0
        %501 = vperm.xlu0 %500, %v251
        %v502 = vpop.permute.xlu0 %501
        %505 = vset.pattern.permute.xlu0 0
        %506 = vperm.xlu0 %505, %v252
        %v507 = vpop.permute.xlu0 %506
        %510 = vset.pattern.permute.xlu0 0
        %511 = vperm.xlu0 %510, %v253
        %v512 = vpop.permute.xlu0 %511
        %515 = vset.pattern.permute.xlu0 0
        %516 = vperm.xlu0 %515, %v254
        %v517 = vpop.permute.xlu0 %516
        %520 = vset.pattern.permute.xlu0 0
        %521 = vperm.xlu0 %520, %v255
        %v522 = vpop.permute.xlu0 %521
        %525 = vset.pattern.permute.xlu0 0
        %526 = vperm.xlu0 %525, %v256
        %v527 = vpop.permute.xlu0 %526
        %530 = vset.pattern.permute.xlu0 0
        %531 = vperm.xlu0 %530, %v257
        %v532 = vpop.permute.xlu0 %531
        %535 = vset.pattern.permute.xlu0 0
        %536 = vperm.xlu0 %535, %v258
        %v537 = vpop.permute.xlu0 %536
        %540 = vset.pattern.permute.xlu0 0
        %541 = vperm.xlu0 %540, %v259
        %v542 = vpop.permute.xlu0 %541
        %545 = vset.pattern.permute.xlu0 0
        %546 = vperm.xlu0 %545, %v260
        %v547 = vpop.permute.xlu0 %546
        %550 = vset.pattern.permute.xlu0 0
        %551 = vperm.xlu0 %550, %v261
        %v552 = vpop.permute.xlu0 %551
        %555 = vset.pattern.permute.xlu0 0
        %556 = vperm.xlu0 %555, %v262
        %v557 = vpop.permute.xlu0 %556
        %560 = vset.pattern.permute.xlu0 0
        %561 = vperm.xlu0 %560, %v263
        %v562 = vpop.permute.xlu0 %561
        %565 = vset.pattern.permute.xlu0 0
        %566 = vperm.xlu0 %565, %v264
        %v567 = vpop.permute.xlu0 %566
        %570 = vset.pattern.permute.xlu0 0
        %571 = vperm.xlu0 %570, %v265
        %v572 = vpop.permute.xlu0 %571
        %575 = vset.pattern.permute.xlu0 0
        %576 = vperm.xlu0 %575, %v266
        %v577 = vpop.permute.xlu0 %576
        %580 = vset.pattern.permute.xlu0 0
        %581 = vperm.xlu0 %580, %v267
        %v582 = vpop.permute.xlu0 %581
        %585 = vset.pattern.permute.xlu0 0
        %586 = vperm.xlu0 %585, %v268
        %v587 = vpop.permute.xlu0 %586
        %590 = vset.pattern.permute.xlu0 0
        %591 = vperm.xlu0 %590, %v269
        %v592 = vpop.permute.xlu0 %591
        %595 = vset.pattern.permute.xlu0 0
        %596 = vperm.xlu0 %595, %v270
        %v597 = vpop.permute.xlu0 %596
        %600 = vset.pattern.permute.xlu0 0
        %601 = vperm.xlu0 %600, %v271
        %v602 = vpop.permute.xlu0 %601
        %605 = vset.pattern.permute.xlu0 0
        %606 = vperm.xlu0 %605, %v272
        %v607 = vpop.permute.xlu0 %606
        %610 = vset.pattern.permute.xlu0 0
        %611 = vperm.xlu0 %610, %v273
        %v612 = vpop.permute.xlu0 %611
        %615 = vset.pattern.permute.xlu0 0
        %616 = vperm.xlu0 %615, %v274
        %v617 = vpop.permute.xlu0 %616
        %620 = vset.pattern.permute.xlu0 0
        %621 = vperm.xlu0 %620, %v275
        %v622 = vpop.permute.xlu0 %621
        %625 = vset.pattern.permute.xlu0 0
        %626 = vperm.xlu0 %625, %v276
        %v627 = vpop.permute.xlu0 %626
        %630 = vset.pattern.permute.xlu0 0
        %631 = vperm.xlu0 %630, %v277
        %v632 = vpop.permute.xlu0 %631
        %635 = vset.pattern.permute.xlu0 0
        %636 = vperm.xlu0 %635, %v278
        %v637 = vpop.permute.xlu0 %636
        %640 = vset.pattern.permute.xlu0 0
        %641 = vperm.xlu0 %640, %v279
        %v642 = vpop.permute.xlu0 %641
        %v644 = vsub.f32 %v287, %v327
        %v645 = vsub.f32 %v291, %v327
        %v646 = vsub.f32 %v295, %v327
        %v647 = vsub.f32 %v299, %v327
        %v648 = vsub.f32 %v303, %v327
        %v649 = vsub.f32 %v307, %v327
        %v650 = vsub.f32 %v311, %v327
        %v651 = vsub.f32 %v315, %v327
        %v652 = vsub.f32 %v287, %v332
        %v653 = vsub.f32 %v291, %v332
        %v654 = vsub.f32 %v295, %v332
        %v655 = vsub.f32 %v299, %v332
        %v656 = vsub.f32 %v303, %v332
        %v657 = vsub.f32 %v307, %v332
        %v658 = vsub.f32 %v311, %v332
        %v659 = vsub.f32 %v315, %v332
        %v660 = vsub.f32 %v287, %v337
        %v661 = vsub.f32 %v291, %v337
        %v662 = vsub.f32 %v295, %v337
        %v663 = vsub.f32 %v299, %v337
        %v664 = vsub.f32 %v303, %v337
        %v665 = vsub.f32 %v307, %v337
        %v666 = vsub.f32 %v311, %v337
        %v667 = vsub.f32 %v315, %v337
        %v668 = vsub.f32 %v287, %v342
        %v669 = vsub.f32 %v291, %v342
        %v670 = vsub.f32 %v295, %v342
        %v671 = vsub.f32 %v299, %v342
        %v672 = vsub.f32 %v303, %v342
        %v673 = vsub.f32 %v307, %v342
        %v674 = vsub.f32 %v311, %v342
        %v675 = vsub.f32 %v315, %v342
        %v676 = vsub.f32 %v287, %v347
        %v677 = vsub.f32 %v291, %v347
        %v678 = vsub.f32 %v295, %v347
        %v679 = vsub.f32 %v299, %v347
        %v680 = vsub.f32 %v303, %v347
        %v681 = vsub.f32 %v307, %v347
        %v682 = vsub.f32 %v311, %v347
        %v683 = vsub.f32 %v315, %v347
        %v684 = vsub.f32 %v287, %v352
        %v685 = vsub.f32 %v291, %v352
        %v686 = vsub.f32 %v295, %v352
        %v687 = vsub.f32 %v299, %v352
        %v688 = vsub.f32 %v303, %v352
        %v689 = vsub.f32 %v307, %v352
        %v690 = vsub.f32 %v311, %v352
        %v691 = vsub.f32 %v315, %v352
        %v692 = vsub.f32 %v287, %v357
        %v693 = vsub.f32 %v291, %v357
        %v694 = vsub.f32 %v295, %v357
        %v695 = vsub.f32 %v299, %v357
        %v696 = vsub.f32 %v303, %v357
        %v697 = vsub.f32 %v307, %v357
        %v698 = vsub.f32 %v311, %v357
        %v699 = vsub.f32 %v315, %v357
        %v700 = vsub.f32 %v287, %v362
        %v701 = vsub.f32 %v291, %v362
        %v702 = vsub.f32 %v295, %v362
        %v703 = vsub.f32 %v299, %v362
        %v704 = vsub.f32 %v303, %v362
        %v705 = vsub.f32 %v307, %v362
        %v706 = vsub.f32 %v311, %v362
        %v707 = vsub.f32 %v315, %v362
        %v708 = vsub.f32 %v287, %v367
        %v709 = vsub.f32 %v291, %v367
        %v710 = vsub.f32 %v295, %v367
        %v711 = vsub.f32 %v299, %v367
        %v712 = vsub.f32 %v303, %v367
        %v713 = vsub.f32 %v307, %v367
        %v714 = vsub.f32 %v311, %v367
        %v715 = vsub.f32 %v315, %v367
        %v716 = vsub.f32 %v287, %v372
        %v717 = vsub.f32 %v291, %v372
        %v718 = vsub.f32 %v295, %v372
        %v719 = vsub.f32 %v299, %v372
        %v720 = vsub.f32 %v303, %v372
        %v721 = vsub.f32 %v307, %v372
        %v722 = vsub.f32 %v311, %v372
        %v723 = vsub.f32 %v315, %v372
        %v724 = vsub.f32 %v287, %v377
        %v725 = vsub.f32 %v291, %v377
        %v726 = vsub.f32 %v295, %v377
        %v727 = vsub.f32 %v299, %v377
        %v728 = vsub.f32 %v303, %v377
        %v729 = vsub.f32 %v307, %v377
        %v730 = vsub.f32 %v311, %v377
        %v731 = vsub.f32 %v315, %v377
        %v732 = vsub.f32 %v287, %v382
        %v733 = vsub.f32 %v291, %v382
        %v734 = vsub.f32 %v295, %v382
        %v735 = vsub.f32 %v299, %v382
        %v736 = vsub.f32 %v303, %v382
        %v737 = vsub.f32 %v307, %v382
        %v738 = vsub.f32 %v311, %v382
        %v739 = vsub.f32 %v315, %v382
        %v740 = vsub.f32 %v287, %v387
        %v741 = vsub.f32 %v291, %v387
        %v742 = vsub.f32 %v295, %v387
        %v743 = vsub.f32 %v299, %v387
        %v744 = vsub.f32 %v303, %v387
        %v745 = vsub.f32 %v307, %v387
        %v746 = vsub.f32 %v311, %v387
        %v747 = vsub.f32 %v315, %v387
        %v748 = vsub.f32 %v287, %v392
        %v749 = vsub.f32 %v291, %v392
        %v750 = vsub.f32 %v295, %v392
        %v751 = vsub.f32 %v299, %v392
        %v752 = vsub.f32 %v303, %v392
        %v753 = vsub.f32 %v307, %v392
        %v754 = vsub.f32 %v311, %v392
        %v755 = vsub.f32 %v315, %v392
        %v756 = vsub.f32 %v287, %v397
        %v757 = vsub.f32 %v291, %v397
        %v758 = vsub.f32 %v295, %v397
        %v759 = vsub.f32 %v299, %v397
        %v760 = vsub.f32 %v303, %v397
        %v761 = vsub.f32 %v307, %v397
        %v762 = vsub.f32 %v311, %v397
        %v763 = vsub.f32 %v315, %v397
        %v764 = vsub.f32 %v287, %v402
        %v765 = vsub.f32 %v291, %v402
        %v766 = vsub.f32 %v295, %v402
        %v767 = vsub.f32 %v299, %v402
        %v768 = vsub.f32 %v303, %v402
        %v769 = vsub.f32 %v307, %v402
        %v770 = vsub.f32 %v311, %v402
        %v771 = vsub.f32 %v315, %v402
        %v772 = vsub.f32 %v287, %v407
        %v773 = vsub.f32 %v291, %v407
        %v774 = vsub.f32 %v295, %v407
        %v775 = vsub.f32 %v299, %v407
        %v776 = vsub.f32 %v303, %v407
        %v777 = vsub.f32 %v307, %v407
        %v778 = vsub.f32 %v311, %v407
        %v779 = vsub.f32 %v315, %v407
        %v780 = vsub.f32 %v287, %v412
        %v781 = vsub.f32 %v291, %v412
        %v782 = vsub.f32 %v295, %v412
        %v783 = vsub.f32 %v299, %v412
        %v784 = vsub.f32 %v303, %v412
        %v785 = vsub.f32 %v307, %v412
        %v786 = vsub.f32 %v311, %v412
        %v787 = vsub.f32 %v315, %v412
        %v788 = vsub.f32 %v287, %v417
        %v789 = vsub.f32 %v291, %v417
        %v790 = vsub.f32 %v295, %v417
        %v791 = vsub.f32 %v299, %v417
        %v792 = vsub.f32 %v303, %v417
        %v793 = vsub.f32 %v307, %v417
        %v794 = vsub.f32 %v311, %v417
        %v795 = vsub.f32 %v315, %v417
        %v796 = vsub.f32 %v287, %v422
        %v797 = vsub.f32 %v291, %v422
        %v798 = vsub.f32 %v295, %v422
        %v799 = vsub.f32 %v299, %v422
        %v800 = vsub.f32 %v303, %v422
        %v801 = vsub.f32 %v307, %v422
        %v802 = vsub.f32 %v311, %v422
        %v803 = vsub.f32 %v315, %v422
        %v804 = vsub.f32 %v287, %v427
        %v805 = vsub.f32 %v291, %v427
        %v806 = vsub.f32 %v295, %v427
        %v807 = vsub.f32 %v299, %v427
        %v808 = vsub.f32 %v303, %v427
        %v809 = vsub.f32 %v307, %v427
        %v810 = vsub.f32 %v311, %v427
        %v811 = vsub.f32 %v315, %v427
        %v812 = vsub.f32 %v287, %v432
        %v813 = vsub.f32 %v291, %v432
        %v814 = vsub.f32 %v295, %v432
        %v815 = vsub.f32 %v299, %v432
        %v816 = vsub.f32 %v303, %v432
        %v817 = vsub.f32 %v307, %v432
        %v818 = vsub.f32 %v311, %v432
        %v819 = vsub.f32 %v315, %v432
        %v820 = vsub.f32 %v287, %v437
        %v821 = vsub.f32 %v291, %v437
        %v822 = vsub.f32 %v295, %v437
        %v823 = vsub.f32 %v299, %v437
        %v824 = vsub.f32 %v303, %v437
        %v825 = vsub.f32 %v307, %v437
        %v826 = vsub.f32 %v311, %v437
        %v827 = vsub.f32 %v315, %v437
        %v828 = vsub.f32 %v287, %v442
        %v829 = vsub.f32 %v291, %v442
        %v830 = vsub.f32 %v295, %v442
        %v831 = vsub.f32 %v299, %v442
        %v832 = vsub.f32 %v303, %v442
        %v833 = vsub.f32 %v307, %v442
        %v834 = vsub.f32 %v311, %v442
        %v835 = vsub.f32 %v315, %v442
        %v836 = vsub.f32 %v287, %v447
        %v837 = vsub.f32 %v291, %v447
        %v838 = vsub.f32 %v295, %v447
        %v839 = vsub.f32 %v299, %v447
        %v840 = vsub.f32 %v303, %v447
        %v841 = vsub.f32 %v307, %v447
        %v842 = vsub.f32 %v311, %v447
        %v843 = vsub.f32 %v315, %v447
        %v844 = vsub.f32 %v287, %v452
        %v845 = vsub.f32 %v291, %v452
        %v846 = vsub.f32 %v295, %v452
        %v847 = vsub.f32 %v299, %v452
        %v848 = vsub.f32 %v303, %v452
        %v849 = vsub.f32 %v307, %v452
        %v850 = vsub.f32 %v311, %v452
        %v851 = vsub.f32 %v315, %v452
        %v852 = vsub.f32 %v287, %v457
        %v853 = vsub.f32 %v291, %v457
        %v854 = vsub.f32 %v295, %v457
        %v855 = vsub.f32 %v299, %v457
        %v856 = vsub.f32 %v303, %v457
        %v857 = vsub.f32 %v307, %v457
        %v858 = vsub.f32 %v311, %v457
        %v859 = vsub.f32 %v315, %v457
        %v860 = vsub.f32 %v287, %v462
        %v861 = vsub.f32 %v291, %v462
        %v862 = vsub.f32 %v295, %v462
        %v863 = vsub.f32 %v299, %v462
        %v864 = vsub.f32 %v303, %v462
        %v865 = vsub.f32 %v307, %v462
        %v866 = vsub.f32 %v311, %v462
        %v867 = vsub.f32 %v315, %v462
        %v868 = vsub.f32 %v287, %v467
        %v869 = vsub.f32 %v291, %v467
        %v870 = vsub.f32 %v295, %v467
        %v871 = vsub.f32 %v299, %v467
        %v872 = vsub.f32 %v303, %v467
        %v873 = vsub.f32 %v307, %v467
        %v874 = vsub.f32 %v311, %v467
        %v875 = vsub.f32 %v315, %v467
        %v876 = vsub.f32 %v287, %v472
        %v877 = vsub.f32 %v291, %v472
        %v878 = vsub.f32 %v295, %v472
        %v879 = vsub.f32 %v299, %v472
        %v880 = vsub.f32 %v303, %v472
        %v881 = vsub.f32 %v307, %v472
        %v882 = vsub.f32 %v311, %v472
        %v883 = vsub.f32 %v315, %v472
        %v884 = vsub.f32 %v287, %v477
        %v885 = vsub.f32 %v291, %v477
        %v886 = vsub.f32 %v295, %v477
        %v887 = vsub.f32 %v299, %v477
        %v888 = vsub.f32 %v303, %v477
        %v889 = vsub.f32 %v307, %v477
        %v890 = vsub.f32 %v311, %v477
        %v891 = vsub.f32 %v315, %v477
        %v892 = vsub.f32 %v287, %v482
        %v893 = vsub.f32 %v291, %v482
        %v894 = vsub.f32 %v295, %v482
        %v895 = vsub.f32 %v299, %v482
        %v896 = vsub.f32 %v303, %v482
        %v897 = vsub.f32 %v307, %v482
        %v898 = vsub.f32 %v311, %v482
        %v899 = vsub.f32 %v315, %v482
        %v900 = vsub.f32 %v287, %v487
        %v901 = vsub.f32 %v291, %v487
        %v902 = vsub.f32 %v295, %v487
        %v903 = vsub.f32 %v299, %v487
        %v904 = vsub.f32 %v303, %v487
        %v905 = vsub.f32 %v307, %v487
        %v906 = vsub.f32 %v311, %v487
        %v907 = vsub.f32 %v315, %v487
        %v908 = vsub.f32 %v287, %v492
        %v909 = vsub.f32 %v291, %v492
        %v910 = vsub.f32 %v295, %v492
        %v911 = vsub.f32 %v299, %v492
        %v912 = vsub.f32 %v303, %v492
        %v913 = vsub.f32 %v307, %v492
        %v914 = vsub.f32 %v311, %v492
        %v915 = vsub.f32 %v315, %v492
        %v916 = vsub.f32 %v287, %v497
        %v917 = vsub.f32 %v291, %v497
        %v918 = vsub.f32 %v295, %v497
        %v919 = vsub.f32 %v299, %v497
        %v920 = vsub.f32 %v303, %v497
        %v921 = vsub.f32 %v307, %v497
        %v922 = vsub.f32 %v311, %v497
        %v923 = vsub.f32 %v315, %v497
        %v924 = vsub.f32 %v287, %v502
        %v925 = vsub.f32 %v291, %v502
        %v926 = vsub.f32 %v295, %v502
        %v927 = vsub.f32 %v299, %v502
        %v928 = vsub.f32 %v303, %v502
        %v929 = vsub.f32 %v307, %v502
        %v930 = vsub.f32 %v311, %v502
        %v931 = vsub.f32 %v315, %v502
        %v932 = vsub.f32 %v287, %v507
        %v933 = vsub.f32 %v291, %v507
        %v934 = vsub.f32 %v295, %v507
        %v935 = vsub.f32 %v299, %v507
        %v936 = vsub.f32 %v303, %v507
        %v937 = vsub.f32 %v307, %v507
        %v938 = vsub.f32 %v311, %v507
        %v939 = vsub.f32 %v315, %v507
        %v940 = vsub.f32 %v287, %v512
        %v941 = vsub.f32 %v291, %v512
        %v942 = vsub.f32 %v295, %v512
        %v943 = vsub.f32 %v299, %v512
        %v944 = vsub.f32 %v303, %v512
        %v945 = vsub.f32 %v307, %v512
        %v946 = vsub.f32 %v311, %v512
        %v947 = vsub.f32 %v315, %v512
        %v948 = vsub.f32 %v287, %v517
        %v949 = vsub.f32 %v291, %v517
        %v950 = vsub.f32 %v295, %v517
        %v951 = vsub.f32 %v299, %v517
        %v952 = vsub.f32 %v303, %v517
        %v953 = vsub.f32 %v307, %v517
        %v954 = vsub.f32 %v311, %v517
        %v955 = vsub.f32 %v315, %v517
        %v956 = vsub.f32 %v287, %v522
        %v957 = vsub.f32 %v291, %v522
        %v958 = vsub.f32 %v295, %v522
        %v959 = vsub.f32 %v299, %v522
        %v960 = vsub.f32 %v303, %v522
        %v961 = vsub.f32 %v307, %v522
        %v962 = vsub.f32 %v311, %v522
        %v963 = vsub.f32 %v315, %v522
        %v964 = vsub.f32 %v287, %v527
        %v965 = vsub.f32 %v291, %v527
        %v966 = vsub.f32 %v295, %v527
        %v967 = vsub.f32 %v299, %v527
        %v968 = vsub.f32 %v303, %v527
        %v969 = vsub.f32 %v307, %v527
        %v970 = vsub.f32 %v311, %v527
        %v971 = vsub.f32 %v315, %v527
        %v972 = vsub.f32 %v287, %v532
        %v973 = vsub.f32 %v291, %v532
        %v974 = vsub.f32 %v295, %v532
        %v975 = vsub.f32 %v299, %v532
        %v976 = vsub.f32 %v303, %v532
        %v977 = vsub.f32 %v307, %v532
        %v978 = vsub.f32 %v311, %v532
        %v979 = vsub.f32 %v315, %v532
        %v980 = vsub.f32 %v287, %v537
        %v981 = vsub.f32 %v291, %v537
        %v982 = vsub.f32 %v295, %v537
        %v983 = vsub.f32 %v299, %v537
        %v984 = vsub.f32 %v303, %v537
        %v985 = vsub.f32 %v307, %v537
        %v986 = vsub.f32 %v311, %v537
        %v987 = vsub.f32 %v315, %v537
        %v988 = vsub.f32 %v287, %v542
        %v989 = vsub.f32 %v291, %v542
        %v990 = vsub.f32 %v295, %v542
        %v991 = vsub.f32 %v299, %v542
        %v992 = vsub.f32 %v303, %v542
        %v993 = vsub.f32 %v307, %v542
        %v994 = vsub.f32 %v311, %v542
        %v995 = vsub.f32 %v315, %v542
        %v996 = vsub.f32 %v287, %v547
        %v997 = vsub.f32 %v291, %v547
        %v998 = vsub.f32 %v295, %v547
        %v999 = vsub.f32 %v299, %v547
        %v1000 = vsub.f32 %v303, %v547
        %v1001 = vsub.f32 %v307, %v547
        %v1002 = vsub.f32 %v311, %v547
        %v1003 = vsub.f32 %v315, %v547
        %v1004 = vsub.f32 %v287, %v552
        %v1005 = vsub.f32 %v291, %v552
        %v1006 = vsub.f32 %v295, %v552
        %v1007 = vsub.f32 %v299, %v552
        %v1008 = vsub.f32 %v303, %v552
        %v1009 = vsub.f32 %v307, %v552
        %v1010 = vsub.f32 %v311, %v552
        %v1011 = vsub.f32 %v315, %v552
        %v1012 = vsub.f32 %v287, %v557
        %v1013 = vsub.f32 %v291, %v557
        %v1014 = vsub.f32 %v295, %v557
        %v1015 = vsub.f32 %v299, %v557
        %v1016 = vsub.f32 %v303, %v557
        %v1017 = vsub.f32 %v307, %v557
        %v1018 = vsub.f32 %v311, %v557
        %v1019 = vsub.f32 %v315, %v557
        %v1020 = vsub.f32 %v287, %v562
        %v1021 = vsub.f32 %v291, %v562
        %v1022 = vsub.f32 %v295, %v562
        %v1023 = vsub.f32 %v299, %v562
        %v1024 = vsub.f32 %v303, %v562
        %v1025 = vsub.f32 %v307, %v562
        %v1026 = vsub.f32 %v311, %v562
        %v1027 = vsub.f32 %v315, %v562
        %v1028 = vsub.f32 %v287, %v567
        %v1029 = vsub.f32 %v291, %v567
        %v1030 = vsub.f32 %v295, %v567
        %v1031 = vsub.f32 %v299, %v567
        %v1032 = vsub.f32 %v303, %v567
        %v1033 = vsub.f32 %v307, %v567
        %v1034 = vsub.f32 %v311, %v567
        %v1035 = vsub.f32 %v315, %v567
        %v1036 = vsub.f32 %v287, %v572
        %v1037 = vsub.f32 %v291, %v572
        %v1038 = vsub.f32 %v295, %v572
        %v1039 = vsub.f32 %v299, %v572
        %v1040 = vsub.f32 %v303, %v572
        %v1041 = vsub.f32 %v307, %v572
        %v1042 = vsub.f32 %v311, %v572
        %v1043 = vsub.f32 %v315, %v572
        %v1044 = vsub.f32 %v287, %v577
        %v1045 = vsub.f32 %v291, %v577
        %v1046 = vsub.f32 %v295, %v577
        %v1047 = vsub.f32 %v299, %v577
        %v1048 = vsub.f32 %v303, %v577
        %v1049 = vsub.f32 %v307, %v577
        %v1050 = vsub.f32 %v311, %v577
        %v1051 = vsub.f32 %v315, %v577
        %v1052 = vsub.f32 %v287, %v582
        %v1053 = vsub.f32 %v291, %v582
        %v1054 = vsub.f32 %v295, %v582
        %v1055 = vsub.f32 %v299, %v582
        %v1056 = vsub.f32 %v303, %v582
        %v1057 = vsub.f32 %v307, %v582
        %v1058 = vsub.f32 %v311, %v582
        %v1059 = vsub.f32 %v315, %v582
        %v1060 = vsub.f32 %v287, %v587
        %v1061 = vsub.f32 %v291, %v587
        %v1062 = vsub.f32 %v295, %v587
        %v1063 = vsub.f32 %v299, %v587
        %v1064 = vsub.f32 %v303, %v587
        %v1065 = vsub.f32 %v307, %v587
        %v1066 = vsub.f32 %v311, %v587
        %v1067 = vsub.f32 %v315, %v587
        %v1068 = vsub.f32 %v287, %v592
        %v1069 = vsub.f32 %v291, %v592
        %v1070 = vsub.f32 %v295, %v592
        %v1071 = vsub.f32 %v299, %v592
        %v1072 = vsub.f32 %v303, %v592
        %v1073 = vsub.f32 %v307, %v592
        %v1074 = vsub.f32 %v311, %v592
        %v1075 = vsub.f32 %v315, %v592
        %v1076 = vsub.f32 %v287, %v597
        %v1077 = vsub.f32 %v291, %v597
        %v1078 = vsub.f32 %v295, %v597
        %v1079 = vsub.f32 %v299, %v597
        %v1080 = vsub.f32 %v303, %v597
        %v1081 = vsub.f32 %v307, %v597
        %v1082 = vsub.f32 %v311, %v597
        %v1083 = vsub.f32 %v315, %v597
        %v1084 = vsub.f32 %v287, %v602
        %v1085 = vsub.f32 %v291, %v602
        %v1086 = vsub.f32 %v295, %v602
        %v1087 = vsub.f32 %v299, %v602
        %v1088 = vsub.f32 %v303, %v602
        %v1089 = vsub.f32 %v307, %v602
        %v1090 = vsub.f32 %v311, %v602
        %v1091 = vsub.f32 %v315, %v602
        %v1092 = vsub.f32 %v287, %v607
        %v1093 = vsub.f32 %v291, %v607
        %v1094 = vsub.f32 %v295, %v607
        %v1095 = vsub.f32 %v299, %v607
        %v1096 = vsub.f32 %v303, %v607
        %v1097 = vsub.f32 %v307, %v607
        %v1098 = vsub.f32 %v311, %v607
        %v1099 = vsub.f32 %v315, %v607
        %v1100 = vsub.f32 %v287, %v612
        %v1101 = vsub.f32 %v291, %v612
        %v1102 = vsub.f32 %v295, %v612
        %v1103 = vsub.f32 %v299, %v612
        %v1104 = vsub.f32 %v303, %v612
        %v1105 = vsub.f32 %v307, %v612
        %v1106 = vsub.f32 %v311, %v612
        %v1107 = vsub.f32 %v315, %v612
        %v1108 = vsub.f32 %v287, %v617
        %v1109 = vsub.f32 %v291, %v617
        %v1110 = vsub.f32 %v295, %v617
        %v1111 = vsub.f32 %v299, %v617
        %v1112 = vsub.f32 %v303, %v617
        %v1113 = vsub.f32 %v307, %v617
        %v1114 = vsub.f32 %v311, %v617
        %v1115 = vsub.f32 %v315, %v617
        %v1116 = vsub.f32 %v287, %v622
        %v1117 = vsub.f32 %v291, %v622
        %v1118 = vsub.f32 %v295, %v622
        %v1119 = vsub.f32 %v299, %v622
        %v1120 = vsub.f32 %v303, %v622
        %v1121 = vsub.f32 %v307, %v622
        %v1122 = vsub.f32 %v311, %v622
        %v1123 = vsub.f32 %v315, %v622
        %v1124 = vsub.f32 %v287, %v627
        %v1125 = vsub.f32 %v291, %v627
        %v1126 = vsub.f32 %v295, %v627
        %v1127 = vsub.f32 %v299, %v627
        %v1128 = vsub.f32 %v303, %v627
        %v1129 = vsub.f32 %v307, %v627
        %v1130 = vsub.f32 %v311, %v627
        %v1131 = vsub.f32 %v315, %v627
        %v1132 = vsub.f32 %v287, %v632
        %v1133 = vsub.f32 %v291, %v632
        %v1134 = vsub.f32 %v295, %v632
        %v1135 = vsub.f32 %v299, %v632
        %v1136 = vsub.f32 %v303, %v632
        %v1137 = vsub.f32 %v307, %v632
        %v1138 = vsub.f32 %v311, %v632
        %v1139 = vsub.f32 %v315, %v632
        %v1140 = vsub.f32 %v287, %v637
        %v1141 = vsub.f32 %v291, %v637
        %v1142 = vsub.f32 %v295, %v637
        %v1143 = vsub.f32 %v299, %v637
        %v1144 = vsub.f32 %v303, %v637
        %v1145 = vsub.f32 %v307, %v637
        %v1146 = vsub.f32 %v311, %v637
        %v1147 = vsub.f32 %v315, %v637
        %v1148 = vsub.f32 %v287, %v642
        %v1149 = vsub.f32 %v291, %v642
        %v1150 = vsub.f32 %v295, %v642
        %v1151 = vsub.f32 %v299, %v642
        %v1152 = vsub.f32 %v303, %v642
        %v1153 = vsub.f32 %v307, %v642
        %v1154 = vsub.f32 %v311, %v642
        %v1155 = vsub.f32 %v315, %v642
        %v1157 = vlaneseq
        %v1158 = vshrl.u32 %v1157, 7
        %v1159 = vsub.s32 0, %v1158
        %v1160 = vrot.slane %v282, %v1159
        %v1161 = vlaneseq
        %v1162 = vshrl.u32 %v1161, 7
        %v1163 = vsub.s32 1, %v1162
        %v1164 = vrot.slane %v282, %v1163
        %v1165 = vlaneseq
        %v1166 = vshrl.u32 %v1165, 7
        %v1167 = vsub.s32 2, %v1166
        %v1168 = vrot.slane %v282, %v1167
        %v1169 = vlaneseq
        %v1170 = vshrl.u32 %v1169, 7
        %v1171 = vsub.s32 3, %v1170
        %v1172 = vrot.slane %v282, %v1171
        %v1173 = vlaneseq
        %v1174 = vshrl.u32 %v1173, 7
        %v1175 = vsub.s32 4, %v1174
        %v1176 = vrot.slane %v282, %v1175
        %v1177 = vlaneseq
        %v1178 = vshrl.u32 %v1177, 7
        %v1179 = vsub.s32 5, %v1178
        %v1180 = vrot.slane %v282, %v1179
        %v1181 = vlaneseq
        %v1182 = vshrl.u32 %v1181, 7
        %v1183 = vsub.s32 6, %v1182
        %v1184 = vrot.slane %v282, %v1183
        %v1185 = vlaneseq
        %v1186 = vshrl.u32 %v1185, 7
        %v1187 = vsub.s32 7, %v1186
        %v1188 = vrot.slane %v282, %v1187
        %1197 = vset.pattern.permute.xlu0 1
        %1198 = vperm.xlu0 %1197, %v216
        %v1199 = vpop.permute.xlu0 %1198
        %1201 = vset.pattern.permute.xlu0 1
        %1202 = vperm.xlu0 %1201, %v217
        %v1203 = vpop.permute.xlu0 %1202
        %1205 = vset.pattern.permute.xlu0 1
        %1206 = vperm.xlu0 %1205, %v218
        %v1207 = vpop.permute.xlu0 %1206
        %1209 = vset.pattern.permute.xlu0 1
        %1210 = vperm.xlu0 %1209, %v219
        %v1211 = vpop.permute.xlu0 %1210
        %1213 = vset.pattern.permute.xlu0 1
        %1214 = vperm.xlu0 %1213, %v220
        %v1215 = vpop.permute.xlu0 %1214
        %1217 = vset.pattern.permute.xlu0 1
        %1218 = vperm.xlu0 %1217, %v221
        %v1219 = vpop.permute.xlu0 %1218
        %1221 = vset.pattern.permute.xlu0 1
        %1222 = vperm.xlu0 %1221, %v222
        %v1223 = vpop.permute.xlu0 %1222
        %1225 = vset.pattern.permute.xlu0 1
        %1226 = vperm.xlu0 %1225, %v223
        %v1227 = vpop.permute.xlu0 %1226
        %1229 = vset.pattern.permute.xlu0 1
        %1230 = vperm.xlu0 %1229, %v224
        %v1231 = vpop.permute.xlu0 %1230
        %1233 = vset.pattern.permute.xlu0 1
        %1234 = vperm.xlu0 %1233, %v225
        %v1235 = vpop.permute.xlu0 %1234
        %1237 = vset.pattern.permute.xlu0 1
        %1238 = vperm.xlu0 %1237, %v226
        %v1239 = vpop.permute.xlu0 %1238
        %1241 = vset.pattern.permute.xlu0 1
        %1242 = vperm.xlu0 %1241, %v227
        %v1243 = vpop.permute.xlu0 %1242
        %1245 = vset.pattern.permute.xlu0 1
        %1246 = vperm.xlu0 %1245, %v228
        %v1247 = vpop.permute.xlu0 %1246
        %1249 = vset.pattern.permute.xlu0 1
        %1250 = vperm.xlu0 %1249, %v229
        %v1251 = vpop.permute.xlu0 %1250
        %1253 = vset.pattern.permute.xlu0 1
        %1254 = vperm.xlu0 %1253, %v230
        %v1255 = vpop.permute.xlu0 %1254
        %1257 = vset.pattern.permute.xlu0 1
        %1258 = vperm.xlu0 %1257, %v231
        %v1259 = vpop.permute.xlu0 %1258
        %1261 = vset.pattern.permute.xlu0 1
        %1262 = vperm.xlu0 %1261, %v232
        %v1263 = vpop.permute.xlu0 %1262
        %1265 = vset.pattern.permute.xlu0 1
        %1266 = vperm.xlu0 %1265, %v233
        %v1267 = vpop.permute.xlu0 %1266
        %1269 = vset.pattern.permute.xlu0 1
        %1270 = vperm.xlu0 %1269, %v234
        %v1271 = vpop.permute.xlu0 %1270
        %1273 = vset.pattern.permute.xlu0 1
        %1274 = vperm.xlu0 %1273, %v235
        %v1275 = vpop.permute.xlu0 %1274
        %1277 = vset.pattern.permute.xlu0 1
        %1278 = vperm.xlu0 %1277, %v236
        %v1279 = vpop.permute.xlu0 %1278
        %1281 = vset.pattern.permute.xlu0 1
        %1282 = vperm.xlu0 %1281, %v237
        %v1283 = vpop.permute.xlu0 %1282
        %1285 = vset.pattern.permute.xlu0 1
        %1286 = vperm.xlu0 %1285, %v238
        %v1287 = vpop.permute.xlu0 %1286
        %1289 = vset.pattern.permute.xlu0 1
        %1290 = vperm.xlu0 %1289, %v239
        %v1291 = vpop.permute.xlu0 %1290
        %1293 = vset.pattern.permute.xlu0 1
        %1294 = vperm.xlu0 %1293, %v240
        %v1295 = vpop.permute.xlu0 %1294
        %1297 = vset.pattern.permute.xlu0 1
        %1298 = vperm.xlu0 %1297, %v241
        %v1299 = vpop.permute.xlu0 %1298
        %1301 = vset.pattern.permute.xlu0 1
        %1302 = vperm.xlu0 %1301, %v242
        %v1303 = vpop.permute.xlu0 %1302
        %1305 = vset.pattern.permute.xlu0 1
        %1306 = vperm.xlu0 %1305, %v243
        %v1307 = vpop.permute.xlu0 %1306
        %1309 = vset.pattern.permute.xlu0 1
        %1310 = vperm.xlu0 %1309, %v244
        %v1311 = vpop.permute.xlu0 %1310
        %1313 = vset.pattern.permute.xlu0 1
        %1314 = vperm.xlu0 %1313, %v245
        %v1315 = vpop.permute.xlu0 %1314
        %1317 = vset.pattern.permute.xlu0 1
        %1318 = vperm.xlu0 %1317, %v246
        %v1319 = vpop.permute.xlu0 %1318
        %1321 = vset.pattern.permute.xlu0 1
        %1322 = vperm.xlu0 %1321, %v247
        %v1323 = vpop.permute.xlu0 %1322
        %1325 = vset.pattern.permute.xlu0 1
        %1326 = vperm.xlu0 %1325, %v248
        %v1327 = vpop.permute.xlu0 %1326
        %1329 = vset.pattern.permute.xlu0 1
        %1330 = vperm.xlu0 %1329, %v249
        %v1331 = vpop.permute.xlu0 %1330
        %1333 = vset.pattern.permute.xlu0 1
        %1334 = vperm.xlu0 %1333, %v250
        %v1335 = vpop.permute.xlu0 %1334
        %1337 = vset.pattern.permute.xlu0 1
        %1338 = vperm.xlu0 %1337, %v251
        %v1339 = vpop.permute.xlu0 %1338
        %1341 = vset.pattern.permute.xlu0 1
        %1342 = vperm.xlu0 %1341, %v252
        %v1343 = vpop.permute.xlu0 %1342
        %1345 = vset.pattern.permute.xlu0 1
        %1346 = vperm.xlu0 %1345, %v253
        %v1347 = vpop.permute.xlu0 %1346
        %1349 = vset.pattern.permute.xlu0 1
        %1350 = vperm.xlu0 %1349, %v254
        %v1351 = vpop.permute.xlu0 %1350
        %1353 = vset.pattern.permute.xlu0 1
        %1354 = vperm.xlu0 %1353, %v255
        %v1355 = vpop.permute.xlu0 %1354
        %1357 = vset.pattern.permute.xlu0 1
        %1358 = vperm.xlu0 %1357, %v256
        %v1359 = vpop.permute.xlu0 %1358
        %1361 = vset.pattern.permute.xlu0 1
        %1362 = vperm.xlu0 %1361, %v257
        %v1363 = vpop.permute.xlu0 %1362
        %1365 = vset.pattern.permute.xlu0 1
        %1366 = vperm.xlu0 %1365, %v258
        %v1367 = vpop.permute.xlu0 %1366
        %1369 = vset.pattern.permute.xlu0 1
        %1370 = vperm.xlu0 %1369, %v259
        %v1371 = vpop.permute.xlu0 %1370
        %1373 = vset.pattern.permute.xlu0 1
        %1374 = vperm.xlu0 %1373, %v260
        %v1375 = vpop.permute.xlu0 %1374
        %1377 = vset.pattern.permute.xlu0 1
        %1378 = vperm.xlu0 %1377, %v261
        %v1379 = vpop.permute.xlu0 %1378
        %1381 = vset.pattern.permute.xlu0 1
        %1382 = vperm.xlu0 %1381, %v262
        %v1383 = vpop.permute.xlu0 %1382
        %1385 = vset.pattern.permute.xlu0 1
        %1386 = vperm.xlu0 %1385, %v263
        %v1387 = vpop.permute.xlu0 %1386
        %1389 = vset.pattern.permute.xlu0 1
        %1390 = vperm.xlu0 %1389, %v264
        %v1391 = vpop.permute.xlu0 %1390
        %1393 = vset.pattern.permute.xlu0 1
        %1394 = vperm.xlu0 %1393, %v265
        %v1395 = vpop.permute.xlu0 %1394
        %1397 = vset.pattern.permute.xlu0 1
        %1398 = vperm.xlu0 %1397, %v266
        %v1399 = vpop.permute.xlu0 %1398
        %1401 = vset.pattern.permute.xlu0 1
        %1402 = vperm.xlu0 %1401, %v267
        %v1403 = vpop.permute.xlu0 %1402
        %1405 = vset.pattern.permute.xlu0 1
        %1406 = vperm.xlu0 %1405, %v268
        %v1407 = vpop.permute.xlu0 %1406
        %1409 = vset.pattern.permute.xlu0 1
        %1410 = vperm.xlu0 %1409, %v269
        %v1411 = vpop.permute.xlu0 %1410
        %1413 = vset.pattern.permute.xlu0 1
        %1414 = vperm.xlu0 %1413, %v270
        %v1415 = vpop.permute.xlu0 %1414
        %1417 = vset.pattern.permute.xlu0 1
        %1418 = vperm.xlu0 %1417, %v271
        %v1419 = vpop.permute.xlu0 %1418
        %1421 = vset.pattern.permute.xlu0 1
        %1422 = vperm.xlu0 %1421, %v272
        %v1423 = vpop.permute.xlu0 %1422
        %1425 = vset.pattern.permute.xlu0 1
        %1426 = vperm.xlu0 %1425, %v273
        %v1427 = vpop.permute.xlu0 %1426
        %1429 = vset.pattern.permute.xlu0 1
        %1430 = vperm.xlu0 %1429, %v274
        %v1431 = vpop.permute.xlu0 %1430
        %1433 = vset.pattern.permute.xlu0 1
        %1434 = vperm.xlu0 %1433, %v275
        %v1435 = vpop.permute.xlu0 %1434
        %1437 = vset.pattern.permute.xlu0 1
        %1438 = vperm.xlu0 %1437, %v276
        %v1439 = vpop.permute.xlu0 %1438
        %1441 = vset.pattern.permute.xlu0 1
        %1442 = vperm.xlu0 %1441, %v277
        %v1443 = vpop.permute.xlu0 %1442
        %1445 = vset.pattern.permute.xlu0 1
        %1446 = vperm.xlu0 %1445, %v278
        %v1447 = vpop.permute.xlu0 %1446
        %1449 = vset.pattern.permute.xlu0 1
        %1450 = vperm.xlu0 %1449, %v279
        %v1451 = vpop.permute.xlu0 %1450
        %v1453 = vsub.f32 %v1160, %v1199
        %v1454 = vsub.f32 %v1164, %v1199
        %v1455 = vsub.f32 %v1168, %v1199
        %v1456 = vsub.f32 %v1172, %v1199
        %v1457 = vsub.f32 %v1176, %v1199
        %v1458 = vsub.f32 %v1180, %v1199
        %v1459 = vsub.f32 %v1184, %v1199
        %v1460 = vsub.f32 %v1188, %v1199
        %v1461 = vsub.f32 %v1160, %v1203
        %v1462 = vsub.f32 %v1164, %v1203
        %v1463 = vsub.f32 %v1168, %v1203
        %v1464 = vsub.f32 %v1172, %v1203
        %v1465 = vsub.f32 %v1176, %v1203
        %v1466 = vsub.f32 %v1180, %v1203
        %v1467 = vsub.f32 %v1184, %v1203
        %v1468 = vsub.f32 %v1188, %v1203
        %v1469 = vsub.f32 %v1160, %v1207
        %v1470 = vsub.f32 %v1164, %v1207
        %v1471 = vsub.f32 %v1168, %v1207
        %v1472 = vsub.f32 %v1172, %v1207
        %v1473 = vsub.f32 %v1176, %v1207
        %v1474 = vsub.f32 %v1180, %v1207
        %v1475 = vsub.f32 %v1184, %v1207
        %v1476 = vsub.f32 %v1188, %v1207
        %v1477 = vsub.f32 %v1160, %v1211
        %v1478 = vsub.f32 %v1164, %v1211
        %v1479 = vsub.f32 %v1168, %v1211
        %v1480 = vsub.f32 %v1172, %v1211
        %v1481 = vsub.f32 %v1176, %v1211
        %v1482 = vsub.f32 %v1180, %v1211
        %v1483 = vsub.f32 %v1184, %v1211
        %v1484 = vsub.f32 %v1188, %v1211
        %v1485 = vsub.f32 %v1160, %v1215
        %v1486 = vsub.f32 %v1164, %v1215
        %v1487 = vsub.f32 %v1168, %v1215
        %v1488 = vsub.f32 %v1172, %v1215
        %v1489 = vsub.f32 %v1176, %v1215
        %v1490 = vsub.f32 %v1180, %v1215
        %v1491 = vsub.f32 %v1184, %v1215
        %v1492 = vsub.f32 %v1188, %v1215
        %v1493 = vsub.f32 %v1160, %v1219
        %v1494 = vsub.f32 %v1164, %v1219
        %v1495 = vsub.f32 %v1168, %v1219
        %v1496 = vsub.f32 %v1172, %v1219
        %v1497 = vsub.f32 %v1176, %v1219
        %v1498 = vsub.f32 %v1180, %v1219
        %v1499 = vsub.f32 %v1184, %v1219
        %v1500 = vsub.f32 %v1188, %v1219
        %v1501 = vsub.f32 %v1160, %v1223
        %v1502 = vsub.f32 %v1164, %v1223
        %v1503 = vsub.f32 %v1168, %v1223
        %v1504 = vsub.f32 %v1172, %v1223
        %v1505 = vsub.f32 %v1176, %v1223
        %v1506 = vsub.f32 %v1180, %v1223
        %v1507 = vsub.f32 %v1184, %v1223
        %v1508 = vsub.f32 %v1188, %v1223
        %v1509 = vsub.f32 %v1160, %v1227
        %v1510 = vsub.f32 %v1164, %v1227
        %v1511 = vsub.f32 %v1168, %v1227
        %v1512 = vsub.f32 %v1172, %v1227
        %v1513 = vsub.f32 %v1176, %v1227
        %v1514 = vsub.f32 %v1180, %v1227
        %v1515 = vsub.f32 %v1184, %v1227
        %v1516 = vsub.f32 %v1188, %v1227
        %v1517 = vsub.f32 %v1160, %v1231
        %v1518 = vsub.f32 %v1164, %v1231
        %v1519 = vsub.f32 %v1168, %v1231
        %v1520 = vsub.f32 %v1172, %v1231
        %v1521 = vsub.f32 %v1176, %v1231
        %v1522 = vsub.f32 %v1180, %v1231
        %v1523 = vsub.f32 %v1184, %v1231
        %v1524 = vsub.f32 %v1188, %v1231
        %v1525 = vsub.f32 %v1160, %v1235
        %v1526 = vsub.f32 %v1164, %v1235
        %v1527 = vsub.f32 %v1168, %v1235
        %v1528 = vsub.f32 %v1172, %v1235
        %v1529 = vsub.f32 %v1176, %v1235
        %v1530 = vsub.f32 %v1180, %v1235
        %v1531 = vsub.f32 %v1184, %v1235
        %v1532 = vsub.f32 %v1188, %v1235
        %v1533 = vsub.f32 %v1160, %v1239
        %v1534 = vsub.f32 %v1164, %v1239
        %v1535 = vsub.f32 %v1168, %v1239
        %v1536 = vsub.f32 %v1172, %v1239
        %v1537 = vsub.f32 %v1176, %v1239
        %v1538 = vsub.f32 %v1180, %v1239
        %v1539 = vsub.f32 %v1184, %v1239
        %v1540 = vsub.f32 %v1188, %v1239
        %v1541 = vsub.f32 %v1160, %v1243
        %v1542 = vsub.f32 %v1164, %v1243
        %v1543 = vsub.f32 %v1168, %v1243
        %v1544 = vsub.f32 %v1172, %v1243
        %v1545 = vsub.f32 %v1176, %v1243
        %v1546 = vsub.f32 %v1180, %v1243
        %v1547 = vsub.f32 %v1184, %v1243
        %v1548 = vsub.f32 %v1188, %v1243
        %v1549 = vsub.f32 %v1160, %v1247
        %v1550 = vsub.f32 %v1164, %v1247
        %v1551 = vsub.f32 %v1168, %v1247
        %v1552 = vsub.f32 %v1172, %v1247
        %v1553 = vsub.f32 %v1176, %v1247
        %v1554 = vsub.f32 %v1180, %v1247
        %v1555 = vsub.f32 %v1184, %v1247
        %v1556 = vsub.f32 %v1188, %v1247
        %v1557 = vsub.f32 %v1160, %v1251
        %v1558 = vsub.f32 %v1164, %v1251
        %v1559 = vsub.f32 %v1168, %v1251
        %v1560 = vsub.f32 %v1172, %v1251
        %v1561 = vsub.f32 %v1176, %v1251
        %v1562 = vsub.f32 %v1180, %v1251
        %v1563 = vsub.f32 %v1184, %v1251
        %v1564 = vsub.f32 %v1188, %v1251
        %v1565 = vsub.f32 %v1160, %v1255
        %v1566 = vsub.f32 %v1164, %v1255
        %v1567 = vsub.f32 %v1168, %v1255
        %v1568 = vsub.f32 %v1172, %v1255
        %v1569 = vsub.f32 %v1176, %v1255
        %v1570 = vsub.f32 %v1180, %v1255
        %v1571 = vsub.f32 %v1184, %v1255
        %v1572 = vsub.f32 %v1188, %v1255
        %v1573 = vsub.f32 %v1160, %v1259
        %v1574 = vsub.f32 %v1164, %v1259
        %v1575 = vsub.f32 %v1168, %v1259
        %v1576 = vsub.f32 %v1172, %v1259
        %v1577 = vsub.f32 %v1176, %v1259
        %v1578 = vsub.f32 %v1180, %v1259
        %v1579 = vsub.f32 %v1184, %v1259
        %v1580 = vsub.f32 %v1188, %v1259
        %v1581 = vsub.f32 %v1160, %v1263
        %v1582 = vsub.f32 %v1164, %v1263
        %v1583 = vsub.f32 %v1168, %v1263
        %v1584 = vsub.f32 %v1172, %v1263
        %v1585 = vsub.f32 %v1176, %v1263
        %v1586 = vsub.f32 %v1180, %v1263
        %v1587 = vsub.f32 %v1184, %v1263
        %v1588 = vsub.f32 %v1188, %v1263
        %v1589 = vsub.f32 %v1160, %v1267
        %v1590 = vsub.f32 %v1164, %v1267
        %v1591 = vsub.f32 %v1168, %v1267
        %v1592 = vsub.f32 %v1172, %v1267
        %v1593 = vsub.f32 %v1176, %v1267
        %v1594 = vsub.f32 %v1180, %v1267
        %v1595 = vsub.f32 %v1184, %v1267
        %v1596 = vsub.f32 %v1188, %v1267
        %v1597 = vsub.f32 %v1160, %v1271
        %v1598 = vsub.f32 %v1164, %v1271
        %v1599 = vsub.f32 %v1168, %v1271
        %v1600 = vsub.f32 %v1172, %v1271
        %v1601 = vsub.f32 %v1176, %v1271
        %v1602 = vsub.f32 %v1180, %v1271
        %v1603 = vsub.f32 %v1184, %v1271
        %v1604 = vsub.f32 %v1188, %v1271
        %v1605 = vsub.f32 %v1160, %v1275
        %v1606 = vsub.f32 %v1164, %v1275
        %v1607 = vsub.f32 %v1168, %v1275
        %v1608 = vsub.f32 %v1172, %v1275
        %v1609 = vsub.f32 %v1176, %v1275
        %v1610 = vsub.f32 %v1180, %v1275
        %v1611 = vsub.f32 %v1184, %v1275
        %v1612 = vsub.f32 %v1188, %v1275
        %v1613 = vsub.f32 %v1160, %v1279
        %v1614 = vsub.f32 %v1164, %v1279
        %v1615 = vsub.f32 %v1168, %v1279
        %v1616 = vsub.f32 %v1172, %v1279
        %v1617 = vsub.f32 %v1176, %v1279
        %v1618 = vsub.f32 %v1180, %v1279
        %v1619 = vsub.f32 %v1184, %v1279
        %v1620 = vsub.f32 %v1188, %v1279
        %v1621 = vsub.f32 %v1160, %v1283
        %v1622 = vsub.f32 %v1164, %v1283
        %v1623 = vsub.f32 %v1168, %v1283
        %v1624 = vsub.f32 %v1172, %v1283
        %v1625 = vsub.f32 %v1176, %v1283
        %v1626 = vsub.f32 %v1180, %v1283
        %v1627 = vsub.f32 %v1184, %v1283
        %v1628 = vsub.f32 %v1188, %v1283
        %v1629 = vsub.f32 %v1160, %v1287
        %v1630 = vsub.f32 %v1164, %v1287
        %v1631 = vsub.f32 %v1168, %v1287
        %v1632 = vsub.f32 %v1172, %v1287
        %v1633 = vsub.f32 %v1176, %v1287
        %v1634 = vsub.f32 %v1180, %v1287
        %v1635 = vsub.f32 %v1184, %v1287
        %v1636 = vsub.f32 %v1188, %v1287
        %v1637 = vsub.f32 %v1160, %v1291
        %v1638 = vsub.f32 %v1164, %v1291
        %v1639 = vsub.f32 %v1168, %v1291
        %v1640 = vsub.f32 %v1172, %v1291
        %v1641 = vsub.f32 %v1176, %v1291
        %v1642 = vsub.f32 %v1180, %v1291
        %v1643 = vsub.f32 %v1184, %v1291
        %v1644 = vsub.f32 %v1188, %v1291
        %v1645 = vsub.f32 %v1160, %v1295
        %v1646 = vsub.f32 %v1164, %v1295
        %v1647 = vsub.f32 %v1168, %v1295
        %v1648 = vsub.f32 %v1172, %v1295
        %v1649 = vsub.f32 %v1176, %v1295
        %v1650 = vsub.f32 %v1180, %v1295
        %v1651 = vsub.f32 %v1184, %v1295
        %v1652 = vsub.f32 %v1188, %v1295
        %v1653 = vsub.f32 %v1160, %v1299
        %v1654 = vsub.f32 %v1164, %v1299
        %v1655 = vsub.f32 %v1168, %v1299
        %v1656 = vsub.f32 %v1172, %v1299
        %v1657 = vsub.f32 %v1176, %v1299
        %v1658 = vsub.f32 %v1180, %v1299
        %v1659 = vsub.f32 %v1184, %v1299
        %v1660 = vsub.f32 %v1188, %v1299
        %v1661 = vsub.f32 %v1160, %v1303
        %v1662 = vsub.f32 %v1164, %v1303
        %v1663 = vsub.f32 %v1168, %v1303
        %v1664 = vsub.f32 %v1172, %v1303
        %v1665 = vsub.f32 %v1176, %v1303
        %v1666 = vsub.f32 %v1180, %v1303
        %v1667 = vsub.f32 %v1184, %v1303
        %v1668 = vsub.f32 %v1188, %v1303
        %v1669 = vsub.f32 %v1160, %v1307
        %v1670 = vsub.f32 %v1164, %v1307
        %v1671 = vsub.f32 %v1168, %v1307
        %v1672 = vsub.f32 %v1172, %v1307
        %v1673 = vsub.f32 %v1176, %v1307
        %v1674 = vsub.f32 %v1180, %v1307
        %v1675 = vsub.f32 %v1184, %v1307
        %v1676 = vsub.f32 %v1188, %v1307
        %v1677 = vsub.f32 %v1160, %v1311
        %v1678 = vsub.f32 %v1164, %v1311
        %v1679 = vsub.f32 %v1168, %v1311
        %v1680 = vsub.f32 %v1172, %v1311
        %v1681 = vsub.f32 %v1176, %v1311
        %v1682 = vsub.f32 %v1180, %v1311
        %v1683 = vsub.f32 %v1184, %v1311
        %v1684 = vsub.f32 %v1188, %v1311
        %v1685 = vsub.f32 %v1160, %v1315
        %v1686 = vsub.f32 %v1164, %v1315
        %v1687 = vsub.f32 %v1168, %v1315
        %v1688 = vsub.f32 %v1172, %v1315
        %v1689 = vsub.f32 %v1176, %v1315
        %v1690 = vsub.f32 %v1180, %v1315
        %v1691 = vsub.f32 %v1184, %v1315
        %v1692 = vsub.f32 %v1188, %v1315
        %v1693 = vsub.f32 %v1160, %v1319
        %v1694 = vsub.f32 %v1164, %v1319
        %v1695 = vsub.f32 %v1168, %v1319
        %v1696 = vsub.f32 %v1172, %v1319
        %v1697 = vsub.f32 %v1176, %v1319
        %v1698 = vsub.f32 %v1180, %v1319
        %v1699 = vsub.f32 %v1184, %v1319
        %v1700 = vsub.f32 %v1188, %v1319
        %v1701 = vsub.f32 %v1160, %v1323
        %v1702 = vsub.f32 %v1164, %v1323
        %v1703 = vsub.f32 %v1168, %v1323
        %v1704 = vsub.f32 %v1172, %v1323
        %v1705 = vsub.f32 %v1176, %v1323
        %v1706 = vsub.f32 %v1180, %v1323
        %v1707 = vsub.f32 %v1184, %v1323
        %v1708 = vsub.f32 %v1188, %v1323
        %v1709 = vsub.f32 %v1160, %v1327
        %v1710 = vsub.f32 %v1164, %v1327
        %v1711 = vsub.f32 %v1168, %v1327
        %v1712 = vsub.f32 %v1172, %v1327
        %v1713 = vsub.f32 %v1176, %v1327
        %v1714 = vsub.f32 %v1180, %v1327
        %v1715 = vsub.f32 %v1184, %v1327
        %v1716 = vsub.f32 %v1188, %v1327
        %v1717 = vsub.f32 %v1160, %v1331
        %v1718 = vsub.f32 %v1164, %v1331
        %v1719 = vsub.f32 %v1168, %v1331
        %v1720 = vsub.f32 %v1172, %v1331
        %v1721 = vsub.f32 %v1176, %v1331
        %v1722 = vsub.f32 %v1180, %v1331
        %v1723 = vsub.f32 %v1184, %v1331
        %v1724 = vsub.f32 %v1188, %v1331
        %v1725 = vsub.f32 %v1160, %v1335
        %v1726 = vsub.f32 %v1164, %v1335
        %v1727 = vsub.f32 %v1168, %v1335
        %v1728 = vsub.f32 %v1172, %v1335
        %v1729 = vsub.f32 %v1176, %v1335
        %v1730 = vsub.f32 %v1180, %v1335
        %v1731 = vsub.f32 %v1184, %v1335
        %v1732 = vsub.f32 %v1188, %v1335
        %v1733 = vsub.f32 %v1160, %v1339
        %v1734 = vsub.f32 %v1164, %v1339
        %v1735 = vsub.f32 %v1168, %v1339
        %v1736 = vsub.f32 %v1172, %v1339
        %v1737 = vsub.f32 %v1176, %v1339
        %v1738 = vsub.f32 %v1180, %v1339
        %v1739 = vsub.f32 %v1184, %v1339
        %v1740 = vsub.f32 %v1188, %v1339
        %v1741 = vsub.f32 %v1160, %v1343
        %v1742 = vsub.f32 %v1164, %v1343
        %v1743 = vsub.f32 %v1168, %v1343
        %v1744 = vsub.f32 %v1172, %v1343
        %v1745 = vsub.f32 %v1176, %v1343
        %v1746 = vsub.f32 %v1180, %v1343
        %v1747 = vsub.f32 %v1184, %v1343
        %v1748 = vsub.f32 %v1188, %v1343
        %v1749 = vsub.f32 %v1160, %v1347
        %v1750 = vsub.f32 %v1164, %v1347
        %v1751 = vsub.f32 %v1168, %v1347
        %v1752 = vsub.f32 %v1172, %v1347
        %v1753 = vsub.f32 %v1176, %v1347
        %v1754 = vsub.f32 %v1180, %v1347
        %v1755 = vsub.f32 %v1184, %v1347
        %v1756 = vsub.f32 %v1188, %v1347
        %v1757 = vsub.f32 %v1160, %v1351
        %v1758 = vsub.f32 %v1164, %v1351
        %v1759 = vsub.f32 %v1168, %v1351
        %v1760 = vsub.f32 %v1172, %v1351
        %v1761 = vsub.f32 %v1176, %v1351
        %v1762 = vsub.f32 %v1180, %v1351
        %v1763 = vsub.f32 %v1184, %v1351
        %v1764 = vsub.f32 %v1188, %v1351
        %v1765 = vsub.f32 %v1160, %v1355
        %v1766 = vsub.f32 %v1164, %v1355
        %v1767 = vsub.f32 %v1168, %v1355
        %v1768 = vsub.f32 %v1172, %v1355
        %v1769 = vsub.f32 %v1176, %v1355
        %v1770 = vsub.f32 %v1180, %v1355
        %v1771 = vsub.f32 %v1184, %v1355
        %v1772 = vsub.f32 %v1188, %v1355
        %v1773 = vsub.f32 %v1160, %v1359
        %v1774 = vsub.f32 %v1164, %v1359
        %v1775 = vsub.f32 %v1168, %v1359
        %v1776 = vsub.f32 %v1172, %v1359
        %v1777 = vsub.f32 %v1176, %v1359
        %v1778 = vsub.f32 %v1180, %v1359
        %v1779 = vsub.f32 %v1184, %v1359
        %v1780 = vsub.f32 %v1188, %v1359
        %v1781 = vsub.f32 %v1160, %v1363
        %v1782 = vsub.f32 %v1164, %v1363
        %v1783 = vsub.f32 %v1168, %v1363
        %v1784 = vsub.f32 %v1172, %v1363
        %v1785 = vsub.f32 %v1176, %v1363
        %v1786 = vsub.f32 %v1180, %v1363
        %v1787 = vsub.f32 %v1184, %v1363
        %v1788 = vsub.f32 %v1188, %v1363
        %v1789 = vsub.f32 %v1160, %v1367
        %v1790 = vsub.f32 %v1164, %v1367
        %v1791 = vsub.f32 %v1168, %v1367
        %v1792 = vsub.f32 %v1172, %v1367
        %v1793 = vsub.f32 %v1176, %v1367
        %v1794 = vsub.f32 %v1180, %v1367
        %v1795 = vsub.f32 %v1184, %v1367
        %v1796 = vsub.f32 %v1188, %v1367
        %v1797 = vsub.f32 %v1160, %v1371
        %v1798 = vsub.f32 %v1164, %v1371
        %v1799 = vsub.f32 %v1168, %v1371
        %v1800 = vsub.f32 %v1172, %v1371
        %v1801 = vsub.f32 %v1176, %v1371
        %v1802 = vsub.f32 %v1180, %v1371
        %v1803 = vsub.f32 %v1184, %v1371
        %v1804 = vsub.f32 %v1188, %v1371
        %v1805 = vsub.f32 %v1160, %v1375
        %v1806 = vsub.f32 %v1164, %v1375
        %v1807 = vsub.f32 %v1168, %v1375
        %v1808 = vsub.f32 %v1172, %v1375
        %v1809 = vsub.f32 %v1176, %v1375
        %v1810 = vsub.f32 %v1180, %v1375
        %v1811 = vsub.f32 %v1184, %v1375
        %v1812 = vsub.f32 %v1188, %v1375
        %v1813 = vsub.f32 %v1160, %v1379
        %v1814 = vsub.f32 %v1164, %v1379
        %v1815 = vsub.f32 %v1168, %v1379
        %v1816 = vsub.f32 %v1172, %v1379
        %v1817 = vsub.f32 %v1176, %v1379
        %v1818 = vsub.f32 %v1180, %v1379
        %v1819 = vsub.f32 %v1184, %v1379
        %v1820 = vsub.f32 %v1188, %v1379
        %v1821 = vsub.f32 %v1160, %v1383
        %v1822 = vsub.f32 %v1164, %v1383
        %v1823 = vsub.f32 %v1168, %v1383
        %v1824 = vsub.f32 %v1172, %v1383
        %v1825 = vsub.f32 %v1176, %v1383
        %v1826 = vsub.f32 %v1180, %v1383
        %v1827 = vsub.f32 %v1184, %v1383
        %v1828 = vsub.f32 %v1188, %v1383
        %v1829 = vsub.f32 %v1160, %v1387
        %v1830 = vsub.f32 %v1164, %v1387
        %v1831 = vsub.f32 %v1168, %v1387
        %v1832 = vsub.f32 %v1172, %v1387
        %v1833 = vsub.f32 %v1176, %v1387
        %v1834 = vsub.f32 %v1180, %v1387
        %v1835 = vsub.f32 %v1184, %v1387
        %v1836 = vsub.f32 %v1188, %v1387
        %v1837 = vsub.f32 %v1160, %v1391
        %v1838 = vsub.f32 %v1164, %v1391
        %v1839 = vsub.f32 %v1168, %v1391
        %v1840 = vsub.f32 %v1172, %v1391
        %v1841 = vsub.f32 %v1176, %v1391
        %v1842 = vsub.f32 %v1180, %v1391
        %v1843 = vsub.f32 %v1184, %v1391
        %v1844 = vsub.f32 %v1188, %v1391
        %v1845 = vsub.f32 %v1160, %v1395
        %v1846 = vsub.f32 %v1164, %v1395
        %v1847 = vsub.f32 %v1168, %v1395
        %v1848 = vsub.f32 %v1172, %v1395
        %v1849 = vsub.f32 %v1176, %v1395
        %v1850 = vsub.f32 %v1180, %v1395
        %v1851 = vsub.f32 %v1184, %v1395
        %v1852 = vsub.f32 %v1188, %v1395
        %v1853 = vsub.f32 %v1160, %v1399
        %v1854 = vsub.f32 %v1164, %v1399
        %v1855 = vsub.f32 %v1168, %v1399
        %v1856 = vsub.f32 %v1172, %v1399
        %v1857 = vsub.f32 %v1176, %v1399
        %v1858 = vsub.f32 %v1180, %v1399
        %v1859 = vsub.f32 %v1184, %v1399
        %v1860 = vsub.f32 %v1188, %v1399
        %v1861 = vsub.f32 %v1160, %v1403
        %v1862 = vsub.f32 %v1164, %v1403
        %v1863 = vsub.f32 %v1168, %v1403
        %v1864 = vsub.f32 %v1172, %v1403
        %v1865 = vsub.f32 %v1176, %v1403
        %v1866 = vsub.f32 %v1180, %v1403
        %v1867 = vsub.f32 %v1184, %v1403
        %v1868 = vsub.f32 %v1188, %v1403
        %v1869 = vsub.f32 %v1160, %v1407
        %v1870 = vsub.f32 %v1164, %v1407
        %v1871 = vsub.f32 %v1168, %v1407
        %v1872 = vsub.f32 %v1172, %v1407
        %v1873 = vsub.f32 %v1176, %v1407
        %v1874 = vsub.f32 %v1180, %v1407
        %v1875 = vsub.f32 %v1184, %v1407
        %v1876 = vsub.f32 %v1188, %v1407
        %v1877 = vsub.f32 %v1160, %v1411
        %v1878 = vsub.f32 %v1164, %v1411
        %v1879 = vsub.f32 %v1168, %v1411
        %v1880 = vsub.f32 %v1172, %v1411
        %v1881 = vsub.f32 %v1176, %v1411
        %v1882 = vsub.f32 %v1180, %v1411
        %v1883 = vsub.f32 %v1184, %v1411
        %v1884 = vsub.f32 %v1188, %v1411
        %v1885 = vsub.f32 %v1160, %v1415
        %v1886 = vsub.f32 %v1164, %v1415
        %v1887 = vsub.f32 %v1168, %v1415
        %v1888 = vsub.f32 %v1172, %v1415
        %v1889 = vsub.f32 %v1176, %v1415
        %v1890 = vsub.f32 %v1180, %v1415
        %v1891 = vsub.f32 %v1184, %v1415
        %v1892 = vsub.f32 %v1188, %v1415
        %v1893 = vsub.f32 %v1160, %v1419
        %v1894 = vsub.f32 %v1164, %v1419
        %v1895 = vsub.f32 %v1168, %v1419
        %v1896 = vsub.f32 %v1172, %v1419
        %v1897 = vsub.f32 %v1176, %v1419
        %v1898 = vsub.f32 %v1180, %v1419
        %v1899 = vsub.f32 %v1184, %v1419
        %v1900 = vsub.f32 %v1188, %v1419
        %v1901 = vsub.f32 %v1160, %v1423
        %v1902 = vsub.f32 %v1164, %v1423
        %v1903 = vsub.f32 %v1168, %v1423
        %v1904 = vsub.f32 %v1172, %v1423
        %v1905 = vsub.f32 %v1176, %v1423
        %v1906 = vsub.f32 %v1180, %v1423
        %v1907 = vsub.f32 %v1184, %v1423
        %v1908 = vsub.f32 %v1188, %v1423
        %v1909 = vsub.f32 %v1160, %v1427
        %v1910 = vsub.f32 %v1164, %v1427
        %v1911 = vsub.f32 %v1168, %v1427
        %v1912 = vsub.f32 %v1172, %v1427
        %v1913 = vsub.f32 %v1176, %v1427
        %v1914 = vsub.f32 %v1180, %v1427
        %v1915 = vsub.f32 %v1184, %v1427
        %v1916 = vsub.f32 %v1188, %v1427
        %v1917 = vsub.f32 %v1160, %v1431
        %v1918 = vsub.f32 %v1164, %v1431
        %v1919 = vsub.f32 %v1168, %v1431
        %v1920 = vsub.f32 %v1172, %v1431
        %v1921 = vsub.f32 %v1176, %v1431
        %v1922 = vsub.f32 %v1180, %v1431
        %v1923 = vsub.f32 %v1184, %v1431
        %v1924 = vsub.f32 %v1188, %v1431
        %v1925 = vsub.f32 %v1160, %v1435
        %v1926 = vsub.f32 %v1164, %v1435
        %v1927 = vsub.f32 %v1168, %v1435
        %v1928 = vsub.f32 %v1172, %v1435
        %v1929 = vsub.f32 %v1176, %v1435
        %v1930 = vsub.f32 %v1180, %v1435
        %v1931 = vsub.f32 %v1184, %v1435
        %v1932 = vsub.f32 %v1188, %v1435
        %v1933 = vsub.f32 %v1160, %v1439
        %v1934 = vsub.f32 %v1164, %v1439
        %v1935 = vsub.f32 %v1168, %v1439
        %v1936 = vsub.f32 %v1172, %v1439
        %v1937 = vsub.f32 %v1176, %v1439
        %v1938 = vsub.f32 %v1180, %v1439
        %v1939 = vsub.f32 %v1184, %v1439
        %v1940 = vsub.f32 %v1188, %v1439
        %v1941 = vsub.f32 %v1160, %v1443
        %v1942 = vsub.f32 %v1164, %v1443
        %v1943 = vsub.f32 %v1168, %v1443
        %v1944 = vsub.f32 %v1172, %v1443
        %v1945 = vsub.f32 %v1176, %v1443
        %v1946 = vsub.f32 %v1180, %v1443
        %v1947 = vsub.f32 %v1184, %v1443
        %v1948 = vsub.f32 %v1188, %v1443
        %v1949 = vsub.f32 %v1160, %v1447
        %v1950 = vsub.f32 %v1164, %v1447
        %v1951 = vsub.f32 %v1168, %v1447
        %v1952 = vsub.f32 %v1172, %v1447
        %v1953 = vsub.f32 %v1176, %v1447
        %v1954 = vsub.f32 %v1180, %v1447
        %v1955 = vsub.f32 %v1184, %v1447
        %v1956 = vsub.f32 %v1188, %v1447
        %v1957 = vsub.f32 %v1160, %v1451
        %v1958 = vsub.f32 %v1164, %v1451
        %v1959 = vsub.f32 %v1168, %v1451
        %v1960 = vsub.f32 %v1172, %v1451
        %v1961 = vsub.f32 %v1176, %v1451
        %v1962 = vsub.f32 %v1180, %v1451
        %v1963 = vsub.f32 %v1184, %v1451
        %v1964 = vsub.f32 %v1188, %v1451
        %v1965 = vmul.f32 %v644, %v644
        %v1966 = vmul.f32 %v645, %v645
        %v1967 = vmul.f32 %v646, %v646
        %v1968 = vmul.f32 %v647, %v647
        %v1969 = vmul.f32 %v648, %v648
        %v1970 = vmul.f32 %v649, %v649
        %v1971 = vmul.f32 %v650, %v650
        %v1972 = vmul.f32 %v651, %v651
        %v1973 = vmul.f32 %v652, %v652
        %v1974 = vmul.f32 %v653, %v653
        %v1975 = vmul.f32 %v654, %v654
        %v1976 = vmul.f32 %v655, %v655
        %v1977 = vmul.f32 %v656, %v656
        %v1978 = vmul.f32 %v657, %v657
        %v1979 = vmul.f32 %v658, %v658
        %v1980 = vmul.f32 %v659, %v659
        %v1981 = vmul.f32 %v660, %v660
        %v1982 = vmul.f32 %v661, %v661
        %v1983 = vmul.f32 %v662, %v662
        %v1984 = vmul.f32 %v663, %v663
        %v1985 = vmul.f32 %v664, %v664
        %v1986 = vmul.f32 %v665, %v665
        %v1987 = vmul.f32 %v666, %v666
        %v1988 = vmul.f32 %v667, %v667
        %v1989 = vmul.f32 %v668, %v668
        %v1990 = vmul.f32 %v669, %v669
        %v1991 = vmul.f32 %v670, %v670
        %v1992 = vmul.f32 %v671, %v671
        %v1993 = vmul.f32 %v672, %v672
        %v1994 = vmul.f32 %v673, %v673
        %v1995 = vmul.f32 %v674, %v674
        %v1996 = vmul.f32 %v675, %v675
        %v1997 = vmul.f32 %v676, %v676
        %v1998 = vmul.f32 %v677, %v677
        %v1999 = vmul.f32 %v678, %v678
        %v2000 = vmul.f32 %v679, %v679
        %v2001 = vmul.f32 %v680, %v680
        %v2002 = vmul.f32 %v681, %v681
        %v2003 = vmul.f32 %v682, %v682
        %v2004 = vmul.f32 %v683, %v683
        %v2005 = vmul.f32 %v684, %v684
        %v2006 = vmul.f32 %v685, %v685
        %v2007 = vmul.f32 %v686, %v686
        %v2008 = vmul.f32 %v687, %v687
        %v2009 = vmul.f32 %v688, %v688
        %v2010 = vmul.f32 %v689, %v689
        %v2011 = vmul.f32 %v690, %v690
        %v2012 = vmul.f32 %v691, %v691
        %v2013 = vmul.f32 %v692, %v692
        %v2014 = vmul.f32 %v693, %v693
        %v2015 = vmul.f32 %v694, %v694
        %v2016 = vmul.f32 %v695, %v695
        %v2017 = vmul.f32 %v696, %v696
        %v2018 = vmul.f32 %v697, %v697
        %v2019 = vmul.f32 %v698, %v698
        %v2020 = vmul.f32 %v699, %v699
        %v2021 = vmul.f32 %v700, %v700
        %v2022 = vmul.f32 %v701, %v701
        %v2023 = vmul.f32 %v702, %v702
        %v2024 = vmul.f32 %v703, %v703
        %v2025 = vmul.f32 %v704, %v704
        %v2026 = vmul.f32 %v705, %v705
        %v2027 = vmul.f32 %v706, %v706
        %v2028 = vmul.f32 %v707, %v707
        %v2029 = vmul.f32 %v708, %v708
        %v2030 = vmul.f32 %v709, %v709
        %v2031 = vmul.f32 %v710, %v710
        %v2032 = vmul.f32 %v711, %v711
        %v2033 = vmul.f32 %v712, %v712
        %v2034 = vmul.f32 %v713, %v713
        %v2035 = vmul.f32 %v714, %v714
        %v2036 = vmul.f32 %v715, %v715
        %v2037 = vmul.f32 %v716, %v716
        %v2038 = vmul.f32 %v717, %v717
        %v2039 = vmul.f32 %v718, %v718
        %v2040 = vmul.f32 %v719, %v719
        %v2041 = vmul.f32 %v720, %v720
        %v2042 = vmul.f32 %v721, %v721
        %v2043 = vmul.f32 %v722, %v722
        %v2044 = vmul.f32 %v723, %v723
        %v2045 = vmul.f32 %v724, %v724
        %v2046 = vmul.f32 %v725, %v725
        %v2047 = vmul.f32 %v726, %v726
        %v2048 = vmul.f32 %v727, %v727
        %v2049 = vmul.f32 %v728, %v728
        %v2050 = vmul.f32 %v729, %v729
        %v2051 = vmul.f32 %v730, %v730
        %v2052 = vmul.f32 %v731, %v731
        %v2053 = vmul.f32 %v732, %v732
        %v2054 = vmul.f32 %v733, %v733
        %v2055 = vmul.f32 %v734, %v734
        %v2056 = vmul.f32 %v735, %v735
        %v2057 = vmul.f32 %v736, %v736
        %v2058 = vmul.f32 %v737, %v737
        %v2059 = vmul.f32 %v738, %v738
        %v2060 = vmul.f32 %v739, %v739
        %v2061 = vmul.f32 %v740, %v740
        %v2062 = vmul.f32 %v741, %v741
        %v2063 = vmul.f32 %v742, %v742
        %v2064 = vmul.f32 %v743, %v743
        %v2065 = vmul.f32 %v744, %v744
        %v2066 = vmul.f32 %v745, %v745
        %v2067 = vmul.f32 %v746, %v746
        %v2068 = vmul.f32 %v747, %v747
        %v2069 = vmul.f32 %v748, %v748
        %v2070 = vmul.f32 %v749, %v749
        %v2071 = vmul.f32 %v750, %v750
        %v2072 = vmul.f32 %v751, %v751
        %v2073 = vmul.f32 %v752, %v752
        %v2074 = vmul.f32 %v753, %v753
        %v2075 = vmul.f32 %v754, %v754
        %v2076 = vmul.f32 %v755, %v755
        %v2077 = vmul.f32 %v756, %v756
        %v2078 = vmul.f32 %v757, %v757
        %v2079 = vmul.f32 %v758, %v758
        %v2080 = vmul.f32 %v759, %v759
        %v2081 = vmul.f32 %v760, %v760
        %v2082 = vmul.f32 %v761, %v761
        %v2083 = vmul.f32 %v762, %v762
        %v2084 = vmul.f32 %v763, %v763
        %v2085 = vmul.f32 %v764, %v764
        %v2086 = vmul.f32 %v765, %v765
        %v2087 = vmul.f32 %v766, %v766
        %v2088 = vmul.f32 %v767, %v767
        %v2089 = vmul.f32 %v768, %v768
        %v2090 = vmul.f32 %v769, %v769
        %v2091 = vmul.f32 %v770, %v770
        %v2092 = vmul.f32 %v771, %v771
        %v2093 = vmul.f32 %v772, %v772
        %v2094 = vmul.f32 %v773, %v773
        %v2095 = vmul.f32 %v774, %v774
        %v2096 = vmul.f32 %v775, %v775
        %v2097 = vmul.f32 %v776, %v776
        %v2098 = vmul.f32 %v777, %v777
        %v2099 = vmul.f32 %v778, %v778
        %v2100 = vmul.f32 %v779, %v779
        %v2101 = vmul.f32 %v780, %v780
        %v2102 = vmul.f32 %v781, %v781
        %v2103 = vmul.f32 %v782, %v782
        %v2104 = vmul.f32 %v783, %v783
        %v2105 = vmul.f32 %v784, %v784
        %v2106 = vmul.f32 %v785, %v785
        %v2107 = vmul.f32 %v786, %v786
        %v2108 = vmul.f32 %v787, %v787
        %v2109 = vmul.f32 %v788, %v788
        %v2110 = vmul.f32 %v789, %v789
        %v2111 = vmul.f32 %v790, %v790
        %v2112 = vmul.f32 %v791, %v791
        %v2113 = vmul.f32 %v792, %v792
        %v2114 = vmul.f32 %v793, %v793
        %v2115 = vmul.f32 %v794, %v794
        %v2116 = vmul.f32 %v795, %v795
        %v2117 = vmul.f32 %v796, %v796
        %v2118 = vmul.f32 %v797, %v797
        %v2119 = vmul.f32 %v798, %v798
        %v2120 = vmul.f32 %v799, %v799
        %v2121 = vmul.f32 %v800, %v800
        %v2122 = vmul.f32 %v801, %v801
        %v2123 = vmul.f32 %v802, %v802
        %v2124 = vmul.f32 %v803, %v803
        %v2125 = vmul.f32 %v804, %v804
        %v2126 = vmul.f32 %v805, %v805
        %v2127 = vmul.f32 %v806, %v806
        %v2128 = vmul.f32 %v807, %v807
        %v2129 = vmul.f32 %v808, %v808
        %v2130 = vmul.f32 %v809, %v809
        %v2131 = vmul.f32 %v810, %v810
        %v2132 = vmul.f32 %v811, %v811
        %v2133 = vmul.f32 %v812, %v812
        %v2134 = vmul.f32 %v813, %v813
        %v2135 = vmul.f32 %v814, %v814
        %v2136 = vmul.f32 %v815, %v815
        %v2137 = vmul.f32 %v816, %v816
        %v2138 = vmul.f32 %v817, %v817
        %v2139 = vmul.f32 %v818, %v818
        %v2140 = vmul.f32 %v819, %v819
        %v2141 = vmul.f32 %v820, %v820
        %v2142 = vmul.f32 %v821, %v821
        %v2143 = vmul.f32 %v822, %v822
        %v2144 = vmul.f32 %v823, %v823
        %v2145 = vmul.f32 %v824, %v824
        %v2146 = vmul.f32 %v825, %v825
        %v2147 = vmul.f32 %v826, %v826
        %v2148 = vmul.f32 %v827, %v827
        %v2149 = vmul.f32 %v828, %v828
        %v2150 = vmul.f32 %v829, %v829
        %v2151 = vmul.f32 %v830, %v830
        %v2152 = vmul.f32 %v831, %v831
        %v2153 = vmul.f32 %v832, %v832
        %v2154 = vmul.f32 %v833, %v833
        %v2155 = vmul.f32 %v834, %v834
        %v2156 = vmul.f32 %v835, %v835
        %v2157 = vmul.f32 %v836, %v836
        %v2158 = vmul.f32 %v837, %v837
        %v2159 = vmul.f32 %v838, %v838
        %v2160 = vmul.f32 %v839, %v839
        %v2161 = vmul.f32 %v840, %v840
        %v2162 = vmul.f32 %v841, %v841
        %v2163 = vmul.f32 %v842, %v842
        %v2164 = vmul.f32 %v843, %v843
        %v2165 = vmul.f32 %v844, %v844
        %v2166 = vmul.f32 %v845, %v845
        %v2167 = vmul.f32 %v846, %v846
        %v2168 = vmul.f32 %v847, %v847
        %v2169 = vmul.f32 %v848, %v848
        %v2170 = vmul.f32 %v849, %v849
        %v2171 = vmul.f32 %v850, %v850
        %v2172 = vmul.f32 %v851, %v851
        %v2173 = vmul.f32 %v852, %v852
        %v2174 = vmul.f32 %v853, %v853
        %v2175 = vmul.f32 %v854, %v854
        %v2176 = vmul.f32 %v855, %v855
        %v2177 = vmul.f32 %v856, %v856
        %v2178 = vmul.f32 %v857, %v857
        %v2179 = vmul.f32 %v858, %v858
        %v2180 = vmul.f32 %v859, %v859
        %v2181 = vmul.f32 %v860, %v860
        %v2182 = vmul.f32 %v861, %v861
        %v2183 = vmul.f32 %v862, %v862
        %v2184 = vmul.f32 %v863, %v863
        %v2185 = vmul.f32 %v864, %v864
        %v2186 = vmul.f32 %v865, %v865
        %v2187 = vmul.f32 %v866, %v866
        %v2188 = vmul.f32 %v867, %v867
        %v2189 = vmul.f32 %v868, %v868
        %v2190 = vmul.f32 %v869, %v869
        %v2191 = vmul.f32 %v870, %v870
        %v2192 = vmul.f32 %v871, %v871
        %v2193 = vmul.f32 %v872, %v872
        %v2194 = vmul.f32 %v873, %v873
        %v2195 = vmul.f32 %v874, %v874
        %v2196 = vmul.f32 %v875, %v875
        %v2197 = vmul.f32 %v876, %v876
        %v2198 = vmul.f32 %v877, %v877
        %v2199 = vmul.f32 %v878, %v878
        %v2200 = vmul.f32 %v879, %v879
        %v2201 = vmul.f32 %v880, %v880
        %v2202 = vmul.f32 %v881, %v881
        %v2203 = vmul.f32 %v882, %v882
        %v2204 = vmul.f32 %v883, %v883
        %v2205 = vmul.f32 %v884, %v884
        %v2206 = vmul.f32 %v885, %v885
        %v2207 = vmul.f32 %v886, %v886
        %v2208 = vmul.f32 %v887, %v887
        %v2209 = vmul.f32 %v888, %v888
        %v2210 = vmul.f32 %v889, %v889
        %v2211 = vmul.f32 %v890, %v890
        %v2212 = vmul.f32 %v891, %v891
        %v2213 = vmul.f32 %v892, %v892
        %v2214 = vmul.f32 %v893, %v893
        %v2215 = vmul.f32 %v894, %v894
        %v2216 = vmul.f32 %v895, %v895
        %v2217 = vmul.f32 %v896, %v896
        %v2218 = vmul.f32 %v897, %v897
        %v2219 = vmul.f32 %v898, %v898
        %v2220 = vmul.f32 %v899, %v899
        %v2221 = vmul.f32 %v900, %v900
        %v2222 = vmul.f32 %v901, %v901
        %v2223 = vmul.f32 %v902, %v902
        %v2224 = vmul.f32 %v903, %v903
        %v2225 = vmul.f32 %v904, %v904
        %v2226 = vmul.f32 %v905, %v905
        %v2227 = vmul.f32 %v906, %v906
        %v2228 = vmul.f32 %v907, %v907
        %v2229 = vmul.f32 %v908, %v908
        %v2230 = vmul.f32 %v909, %v909
        %v2231 = vmul.f32 %v910, %v910
        %v2232 = vmul.f32 %v911, %v911
        %v2233 = vmul.f32 %v912, %v912
        %v2234 = vmul.f32 %v913, %v913
        %v2235 = vmul.f32 %v914, %v914
        %v2236 = vmul.f32 %v915, %v915
        %v2237 = vmul.f32 %v916, %v916
        %v2238 = vmul.f32 %v917, %v917
        %v2239 = vmul.f32 %v918, %v918
        %v2240 = vmul.f32 %v919, %v919
        %v2241 = vmul.f32 %v920, %v920
        %v2242 = vmul.f32 %v921, %v921
        %v2243 = vmul.f32 %v922, %v922
        %v2244 = vmul.f32 %v923, %v923
        %v2245 = vmul.f32 %v924, %v924
        %v2246 = vmul.f32 %v925, %v925
        %v2247 = vmul.f32 %v926, %v926
        %v2248 = vmul.f32 %v927, %v927
        %v2249 = vmul.f32 %v928, %v928
        %v2250 = vmul.f32 %v929, %v929
        %v2251 = vmul.f32 %v930, %v930
        %v2252 = vmul.f32 %v931, %v931
        %v2253 = vmul.f32 %v932, %v932
        %v2254 = vmul.f32 %v933, %v933
        %v2255 = vmul.f32 %v934, %v934
        %v2256 = vmul.f32 %v935, %v935
        %v2257 = vmul.f32 %v936, %v936
        %v2258 = vmul.f32 %v937, %v937
        %v2259 = vmul.f32 %v938, %v938
        %v2260 = vmul.f32 %v939, %v939
        %v2261 = vmul.f32 %v940, %v940
        %v2262 = vmul.f32 %v941, %v941
        %v2263 = vmul.f32 %v942, %v942
        %v2264 = vmul.f32 %v943, %v943
        %v2265 = vmul.f32 %v944, %v944
        %v2266 = vmul.f32 %v945, %v945
        %v2267 = vmul.f32 %v946, %v946
        %v2268 = vmul.f32 %v947, %v947
        %v2269 = vmul.f32 %v948, %v948
        %v2270 = vmul.f32 %v949, %v949
        %v2271 = vmul.f32 %v950, %v950
        %v2272 = vmul.f32 %v951, %v951
        %v2273 = vmul.f32 %v952, %v952
        %v2274 = vmul.f32 %v953, %v953
        %v2275 = vmul.f32 %v954, %v954
        %v2276 = vmul.f32 %v955, %v955
        %v2277 = vmul.f32 %v956, %v956
        %v2278 = vmul.f32 %v957, %v957
        %v2279 = vmul.f32 %v958, %v958
        %v2280 = vmul.f32 %v959, %v959
        %v2281 = vmul.f32 %v960, %v960
        %v2282 = vmul.f32 %v961, %v961
        %v2283 = vmul.f32 %v962, %v962
        %v2284 = vmul.f32 %v963, %v963
        %v2285 = vmul.f32 %v964, %v964
        %v2286 = vmul.f32 %v965, %v965
        %v2287 = vmul.f32 %v966, %v966
        %v2288 = vmul.f32 %v967, %v967
        %v2289 = vmul.f32 %v968, %v968
        %v2290 = vmul.f32 %v969, %v969
        %v2291 = vmul.f32 %v970, %v970
        %v2292 = vmul.f32 %v971, %v971
        %v2293 = vmul.f32 %v972, %v972
        %v2294 = vmul.f32 %v973, %v973
        %v2295 = vmul.f32 %v974, %v974
        %v2296 = vmul.f32 %v975, %v975
        %v2297 = vmul.f32 %v976, %v976
        %v2298 = vmul.f32 %v977, %v977
        %v2299 = vmul.f32 %v978, %v978
        %v2300 = vmul.f32 %v979, %v979
        %v2301 = vmul.f32 %v980, %v980
        %v2302 = vmul.f32 %v981, %v981
        %v2303 = vmul.f32 %v982, %v982
        %v2304 = vmul.f32 %v983, %v983
        %v2305 = vmul.f32 %v984, %v984
        %v2306 = vmul.f32 %v985, %v985
        %v2307 = vmul.f32 %v986, %v986
        %v2308 = vmul.f32 %v987, %v987
        %v2309 = vmul.f32 %v988, %v988
        %v2310 = vmul.f32 %v989, %v989
        %v2311 = vmul.f32 %v990, %v990
        %v2312 = vmul.f32 %v991, %v991
        %v2313 = vmul.f32 %v992, %v992
        %v2314 = vmul.f32 %v993, %v993
        %v2315 = vmul.f32 %v994, %v994
        %v2316 = vmul.f32 %v995, %v995
        %v2317 = vmul.f32 %v996, %v996
        %v2318 = vmul.f32 %v997, %v997
        %v2319 = vmul.f32 %v998, %v998
        %v2320 = vmul.f32 %v999, %v999
        %v2321 = vmul.f32 %v1000, %v1000
        %v2322 = vmul.f32 %v1001, %v1001
        %v2323 = vmul.f32 %v1002, %v1002
        %v2324 = vmul.f32 %v1003, %v1003
        %v2325 = vmul.f32 %v1004, %v1004
        %v2326 = vmul.f32 %v1005, %v1005
        %v2327 = vmul.f32 %v1006, %v1006
        %v2328 = vmul.f32 %v1007, %v1007
        %v2329 = vmul.f32 %v1008, %v1008
        %v2330 = vmul.f32 %v1009, %v1009
        %v2331 = vmul.f32 %v1010, %v1010
        %v2332 = vmul.f32 %v1011, %v1011
        %v2333 = vmul.f32 %v1012, %v1012
        %v2334 = vmul.f32 %v1013, %v1013
        %v2335 = vmul.f32 %v1014, %v1014
        %v2336 = vmul.f32 %v1015, %v1015
        %v2337 = vmul.f32 %v1016, %v1016
        %v2338 = vmul.f32 %v1017, %v1017
        %v2339 = vmul.f32 %v1018, %v1018
        %v2340 = vmul.f32 %v1019, %v1019
        %v2341 = vmul.f32 %v1020, %v1020
        %v2342 = vmul.f32 %v1021, %v1021
        %v2343 = vmul.f32 %v1022, %v1022
        %v2344 = vmul.f32 %v1023, %v1023
        %v2345 = vmul.f32 %v1024, %v1024
        %v2346 = vmul.f32 %v1025, %v1025
        %v2347 = vmul.f32 %v1026, %v1026
        %v2348 = vmul.f32 %v1027, %v1027
        %v2349 = vmul.f32 %v1028, %v1028
        %v2350 = vmul.f32 %v1029, %v1029
        %v2351 = vmul.f32 %v1030, %v1030
        %v2352 = vmul.f32 %v1031, %v1031
        %v2353 = vmul.f32 %v1032, %v1032
        %v2354 = vmul.f32 %v1033, %v1033
        %v2355 = vmul.f32 %v1034, %v1034
        %v2356 = vmul.f32 %v1035, %v1035
        %v2357 = vmul.f32 %v1036, %v1036
        %v2358 = vmul.f32 %v1037, %v1037
        %v2359 = vmul.f32 %v1038, %v1038
        %v2360 = vmul.f32 %v1039, %v1039
        %v2361 = vmul.f32 %v1040, %v1040
        %v2362 = vmul.f32 %v1041, %v1041
        %v2363 = vmul.f32 %v1042, %v1042
        %v2364 = vmul.f32 %v1043, %v1043
        %v2365 = vmul.f32 %v1044, %v1044
        %v2366 = vmul.f32 %v1045, %v1045
        %v2367 = vmul.f32 %v1046, %v1046
        %v2368 = vmul.f32 %v1047, %v1047
        %v2369 = vmul.f32 %v1048, %v1048
        %v2370 = vmul.f32 %v1049, %v1049
        %v2371 = vmul.f32 %v1050, %v1050
        %v2372 = vmul.f32 %v1051, %v1051
        %v2373 = vmul.f32 %v1052, %v1052
        %v2374 = vmul.f32 %v1053, %v1053
        %v2375 = vmul.f32 %v1054, %v1054
        %v2376 = vmul.f32 %v1055, %v1055
        %v2377 = vmul.f32 %v1056, %v1056
        %v2378 = vmul.f32 %v1057, %v1057
        %v2379 = vmul.f32 %v1058, %v1058
        %v2380 = vmul.f32 %v1059, %v1059
        %v2381 = vmul.f32 %v1060, %v1060
        %v2382 = vmul.f32 %v1061, %v1061
        %v2383 = vmul.f32 %v1062, %v1062
        %v2384 = vmul.f32 %v1063, %v1063
        %v2385 = vmul.f32 %v1064, %v1064
        %v2386 = vmul.f32 %v1065, %v1065
        %v2387 = vmul.f32 %v1066, %v1066
        %v2388 = vmul.f32 %v1067, %v1067
        %v2389 = vmul.f32 %v1068, %v1068
        %v2390 = vmul.f32 %v1069, %v1069
        %v2391 = vmul.f32 %v1070, %v1070
        %v2392 = vmul.f32 %v1071, %v1071
        %v2393 = vmul.f32 %v1072, %v1072
        %v2394 = vmul.f32 %v1073, %v1073
        %v2395 = vmul.f32 %v1074, %v1074
        %v2396 = vmul.f32 %v1075, %v1075
        %v2397 = vmul.f32 %v1076, %v1076
        %v2398 = vmul.f32 %v1077, %v1077
        %v2399 = vmul.f32 %v1078, %v1078
        %v2400 = vmul.f32 %v1079, %v1079
        %v2401 = vmul.f32 %v1080, %v1080
        %v2402 = vmul.f32 %v1081, %v1081
        %v2403 = vmul.f32 %v1082, %v1082
        %v2404 = vmul.f32 %v1083, %v1083
        %v2405 = vmul.f32 %v1084, %v1084
        %v2406 = vmul.f32 %v1085, %v1085
        %v2407 = vmul.f32 %v1086, %v1086
        %v2408 = vmul.f32 %v1087, %v1087
        %v2409 = vmul.f32 %v1088, %v1088
        %v2410 = vmul.f32 %v1089, %v1089
        %v2411 = vmul.f32 %v1090, %v1090
        %v2412 = vmul.f32 %v1091, %v1091
        %v2413 = vmul.f32 %v1092, %v1092
        %v2414 = vmul.f32 %v1093, %v1093
        %v2415 = vmul.f32 %v1094, %v1094
        %v2416 = vmul.f32 %v1095, %v1095
        %v2417 = vmul.f32 %v1096, %v1096
        %v2418 = vmul.f32 %v1097, %v1097
        %v2419 = vmul.f32 %v1098, %v1098
        %v2420 = vmul.f32 %v1099, %v1099
        %v2421 = vmul.f32 %v1100, %v1100
        %v2422 = vmul.f32 %v1101, %v1101
        %v2423 = vmul.f32 %v1102, %v1102
        %v2424 = vmul.f32 %v1103, %v1103
        %v2425 = vmul.f32 %v1104, %v1104
        %v2426 = vmul.f32 %v1105, %v1105
        %v2427 = vmul.f32 %v1106, %v1106
        %v2428 = vmul.f32 %v1107, %v1107
        %v2429 = vmul.f32 %v1108, %v1108
        %v2430 = vmul.f32 %v1109, %v1109
        %v2431 = vmul.f32 %v1110, %v1110
        %v2432 = vmul.f32 %v1111, %v1111
        %v2433 = vmul.f32 %v1112, %v1112
        %v2434 = vmul.f32 %v1113, %v1113
        %v2435 = vmul.f32 %v1114, %v1114
        %v2436 = vmul.f32 %v1115, %v1115
        %v2437 = vmul.f32 %v1116, %v1116
        %v2438 = vmul.f32 %v1117, %v1117
        %v2439 = vmul.f32 %v1118, %v1118
        %v2440 = vmul.f32 %v1119, %v1119
        %v2441 = vmul.f32 %v1120, %v1120
        %v2442 = vmul.f32 %v1121, %v1121
        %v2443 = vmul.f32 %v1122, %v1122
        %v2444 = vmul.f32 %v1123, %v1123
        %v2445 = vmul.f32 %v1124, %v1124
        %v2446 = vmul.f32 %v1125, %v1125
        %v2447 = vmul.f32 %v1126, %v1126
        %v2448 = vmul.f32 %v1127, %v1127
        %v2449 = vmul.f32 %v1128, %v1128
        %v2450 = vmul.f32 %v1129, %v1129
        %v2451 = vmul.f32 %v1130, %v1130
        %v2452 = vmul.f32 %v1131, %v1131
        %v2453 = vmul.f32 %v1132, %v1132
        %v2454 = vmul.f32 %v1133, %v1133
        %v2455 = vmul.f32 %v1134, %v1134
        %v2456 = vmul.f32 %v1135, %v1135
        %v2457 = vmul.f32 %v1136, %v1136
        %v2458 = vmul.f32 %v1137, %v1137
        %v2459 = vmul.f32 %v1138, %v1138
        %v2460 = vmul.f32 %v1139, %v1139
        %v2461 = vmul.f32 %v1140, %v1140
        %v2462 = vmul.f32 %v1141, %v1141
        %v2463 = vmul.f32 %v1142, %v1142
        %v2464 = vmul.f32 %v1143, %v1143
        %v2465 = vmul.f32 %v1144, %v1144
        %v2466 = vmul.f32 %v1145, %v1145
        %v2467 = vmul.f32 %v1146, %v1146
        %v2468 = vmul.f32 %v1147, %v1147
        %v2469 = vmul.f32 %v1148, %v1148
        %v2470 = vmul.f32 %v1149, %v1149
        %v2471 = vmul.f32 %v1150, %v1150
        %v2472 = vmul.f32 %v1151, %v1151
        %v2473 = vmul.f32 %v1152, %v1152
        %v2474 = vmul.f32 %v1153, %v1153
        %v2475 = vmul.f32 %v1154, %v1154
        %v2476 = vmul.f32 %v1155, %v1155
        %v2477 = vmul.f32 %v1453, %v1453
        %v2478 = vmul.f32 %v1454, %v1454
        %v2479 = vmul.f32 %v1455, %v1455
        %v2480 = vmul.f32 %v1456, %v1456
        %v2481 = vmul.f32 %v1457, %v1457
        %v2482 = vmul.f32 %v1458, %v1458
        %v2483 = vmul.f32 %v1459, %v1459
        %v2484 = vmul.f32 %v1460, %v1460
        %v2485 = vmul.f32 %v1461, %v1461
        %v2486 = vmul.f32 %v1462, %v1462
        %v2487 = vmul.f32 %v1463, %v1463
        %v2488 = vmul.f32 %v1464, %v1464
        %v2489 = vmul.f32 %v1465, %v1465
        %v2490 = vmul.f32 %v1466, %v1466
        %v2491 = vmul.f32 %v1467, %v1467
        %v2492 = vmul.f32 %v1468, %v1468
        %v2493 = vmul.f32 %v1469, %v1469
        %v2494 = vmul.f32 %v1470, %v1470
        %v2495 = vmul.f32 %v1471, %v1471
        %v2496 = vmul.f32 %v1472, %v1472
        %v2497 = vmul.f32 %v1473, %v1473
        %v2498 = vmul.f32 %v1474, %v1474
        %v2499 = vmul.f32 %v1475, %v1475
        %v2500 = vmul.f32 %v1476, %v1476
        %v2501 = vmul.f32 %v1477, %v1477
        %v2502 = vmul.f32 %v1478, %v1478
        %v2503 = vmul.f32 %v1479, %v1479
        %v2504 = vmul.f32 %v1480, %v1480
        %v2505 = vmul.f32 %v1481, %v1481
        %v2506 = vmul.f32 %v1482, %v1482
        %v2507 = vmul.f32 %v1483, %v1483
        %v2508 = vmul.f32 %v1484, %v1484
        %v2509 = vmul.f32 %v1485, %v1485
        %v2510 = vmul.f32 %v1486, %v1486
        %v2511 = vmul.f32 %v1487, %v1487
        %v2512 = vmul.f32 %v1488, %v1488
        %v2513 = vmul.f32 %v1489, %v1489
        %v2514 = vmul.f32 %v1490, %v1490
        %v2515 = vmul.f32 %v1491, %v1491
        %v2516 = vmul.f32 %v1492, %v1492
        %v2517 = vmul.f32 %v1493, %v1493
        %v2518 = vmul.f32 %v1494, %v1494
        %v2519 = vmul.f32 %v1495, %v1495
        %v2520 = vmul.f32 %v1496, %v1496
        %v2521 = vmul.f32 %v1497, %v1497
        %v2522 = vmul.f32 %v1498, %v1498
        %v2523 = vmul.f32 %v1499, %v1499
        %v2524 = vmul.f32 %v1500, %v1500
        %v2525 = vmul.f32 %v1501, %v1501
        %v2526 = vmul.f32 %v1502, %v1502
        %v2527 = vmul.f32 %v1503, %v1503
        %v2528 = vmul.f32 %v1504, %v1504
        %v2529 = vmul.f32 %v1505, %v1505
        %v2530 = vmul.f32 %v1506, %v1506
        %v2531 = vmul.f32 %v1507, %v1507
        %v2532 = vmul.f32 %v1508, %v1508
        %v2533 = vmul.f32 %v1509, %v1509
        %v2534 = vmul.f32 %v1510, %v1510
        %v2535 = vmul.f32 %v1511, %v1511
        %v2536 = vmul.f32 %v1512, %v1512
        %v2537 = vmul.f32 %v1513, %v1513
        %v2538 = vmul.f32 %v1514, %v1514
        %v2539 = vmul.f32 %v1515, %v1515
        %v2540 = vmul.f32 %v1516, %v1516
        %v2541 = vmul.f32 %v1517, %v1517
        %v2542 = vmul.f32 %v1518, %v1518
        %v2543 = vmul.f32 %v1519, %v1519
        %v2544 = vmul.f32 %v1520, %v1520
        %v2545 = vmul.f32 %v1521, %v1521
        %v2546 = vmul.f32 %v1522, %v1522
        %v2547 = vmul.f32 %v1523, %v1523
        %v2548 = vmul.f32 %v1524, %v1524
        %v2549 = vmul.f32 %v1525, %v1525
        %v2550 = vmul.f32 %v1526, %v1526
        %v2551 = vmul.f32 %v1527, %v1527
        %v2552 = vmul.f32 %v1528, %v1528
        %v2553 = vmul.f32 %v1529, %v1529
        %v2554 = vmul.f32 %v1530, %v1530
        %v2555 = vmul.f32 %v1531, %v1531
        %v2556 = vmul.f32 %v1532, %v1532
        %v2557 = vmul.f32 %v1533, %v1533
        %v2558 = vmul.f32 %v1534, %v1534
        %v2559 = vmul.f32 %v1535, %v1535
        %v2560 = vmul.f32 %v1536, %v1536
        %v2561 = vmul.f32 %v1537, %v1537
        %v2562 = vmul.f32 %v1538, %v1538
        %v2563 = vmul.f32 %v1539, %v1539
        %v2564 = vmul.f32 %v1540, %v1540
        %v2565 = vmul.f32 %v1541, %v1541
        %v2566 = vmul.f32 %v1542, %v1542
        %v2567 = vmul.f32 %v1543, %v1543
        %v2568 = vmul.f32 %v1544, %v1544
        %v2569 = vmul.f32 %v1545, %v1545
        %v2570 = vmul.f32 %v1546, %v1546
        %v2571 = vmul.f32 %v1547, %v1547
        %v2572 = vmul.f32 %v1548, %v1548
        %v2573 = vmul.f32 %v1549, %v1549
        %v2574 = vmul.f32 %v1550, %v1550
        %v2575 = vmul.f32 %v1551, %v1551
        %v2576 = vmul.f32 %v1552, %v1552
        %v2577 = vmul.f32 %v1553, %v1553
        %v2578 = vmul.f32 %v1554, %v1554
        %v2579 = vmul.f32 %v1555, %v1555
        %v2580 = vmul.f32 %v1556, %v1556
        %v2581 = vmul.f32 %v1557, %v1557
        %v2582 = vmul.f32 %v1558, %v1558
        %v2583 = vmul.f32 %v1559, %v1559
        %v2584 = vmul.f32 %v1560, %v1560
        %v2585 = vmul.f32 %v1561, %v1561
        %v2586 = vmul.f32 %v1562, %v1562
        %v2587 = vmul.f32 %v1563, %v1563
        %v2588 = vmul.f32 %v1564, %v1564
        %v2589 = vmul.f32 %v1565, %v1565
        %v2590 = vmul.f32 %v1566, %v1566
        %v2591 = vmul.f32 %v1567, %v1567
        %v2592 = vmul.f32 %v1568, %v1568
        %v2593 = vmul.f32 %v1569, %v1569
        %v2594 = vmul.f32 %v1570, %v1570
        %v2595 = vmul.f32 %v1571, %v1571
        %v2596 = vmul.f32 %v1572, %v1572
        %v2597 = vmul.f32 %v1573, %v1573
        %v2598 = vmul.f32 %v1574, %v1574
        %v2599 = vmul.f32 %v1575, %v1575
        %v2600 = vmul.f32 %v1576, %v1576
        %v2601 = vmul.f32 %v1577, %v1577
        %v2602 = vmul.f32 %v1578, %v1578
        %v2603 = vmul.f32 %v1579, %v1579
        %v2604 = vmul.f32 %v1580, %v1580
        %v2605 = vmul.f32 %v1581, %v1581
        %v2606 = vmul.f32 %v1582, %v1582
        %v2607 = vmul.f32 %v1583, %v1583
        %v2608 = vmul.f32 %v1584, %v1584
        %v2609 = vmul.f32 %v1585, %v1585
        %v2610 = vmul.f32 %v1586, %v1586
        %v2611 = vmul.f32 %v1587, %v1587
        %v2612 = vmul.f32 %v1588, %v1588
        %v2613 = vmul.f32 %v1589, %v1589
        %v2614 = vmul.f32 %v1590, %v1590
        %v2615 = vmul.f32 %v1591, %v1591
        %v2616 = vmul.f32 %v1592, %v1592
        %v2617 = vmul.f32 %v1593, %v1593
        %v2618 = vmul.f32 %v1594, %v1594
        %v2619 = vmul.f32 %v1595, %v1595
        %v2620 = vmul.f32 %v1596, %v1596
        %v2621 = vmul.f32 %v1597, %v1597
        %v2622 = vmul.f32 %v1598, %v1598
        %v2623 = vmul.f32 %v1599, %v1599
        %v2624 = vmul.f32 %v1600, %v1600
        %v2625 = vmul.f32 %v1601, %v1601
        %v2626 = vmul.f32 %v1602, %v1602
        %v2627 = vmul.f32 %v1603, %v1603
        %v2628 = vmul.f32 %v1604, %v1604
        %v2629 = vmul.f32 %v1605, %v1605
        %v2630 = vmul.f32 %v1606, %v1606
        %v2631 = vmul.f32 %v1607, %v1607
        %v2632 = vmul.f32 %v1608, %v1608
        %v2633 = vmul.f32 %v1609, %v1609
        %v2634 = vmul.f32 %v1610, %v1610
        %v2635 = vmul.f32 %v1611, %v1611
        %v2636 = vmul.f32 %v1612, %v1612
        %v2637 = vmul.f32 %v1613, %v1613
        %v2638 = vmul.f32 %v1614, %v1614
        %v2639 = vmul.f32 %v1615, %v1615
        %v2640 = vmul.f32 %v1616, %v1616
        %v2641 = vmul.f32 %v1617, %v1617
        %v2642 = vmul.f32 %v1618, %v1618
        %v2643 = vmul.f32 %v1619, %v1619
        %v2644 = vmul.f32 %v1620, %v1620
        %v2645 = vmul.f32 %v1621, %v1621
        %v2646 = vmul.f32 %v1622, %v1622
        %v2647 = vmul.f32 %v1623, %v1623
        %v2648 = vmul.f32 %v1624, %v1624
        %v2649 = vmul.f32 %v1625, %v1625
        %v2650 = vmul.f32 %v1626, %v1626
        %v2651 = vmul.f32 %v1627, %v1627
        %v2652 = vmul.f32 %v1628, %v1628
        %v2653 = vmul.f32 %v1629, %v1629
        %v2654 = vmul.f32 %v1630, %v1630
        %v2655 = vmul.f32 %v1631, %v1631
        %v2656 = vmul.f32 %v1632, %v1632
        %v2657 = vmul.f32 %v1633, %v1633
        %v2658 = vmul.f32 %v1634, %v1634
        %v2659 = vmul.f32 %v1635, %v1635
        %v2660 = vmul.f32 %v1636, %v1636
        %v2661 = vmul.f32 %v1637, %v1637
        %v2662 = vmul.f32 %v1638, %v1638
        %v2663 = vmul.f32 %v1639, %v1639
        %v2664 = vmul.f32 %v1640, %v1640
        %v2665 = vmul.f32 %v1641, %v1641
        %v2666 = vmul.f32 %v1642, %v1642
        %v2667 = vmul.f32 %v1643, %v1643
        %v2668 = vmul.f32 %v1644, %v1644
        %v2669 = vmul.f32 %v1645, %v1645
        %v2670 = vmul.f32 %v1646, %v1646
        %v2671 = vmul.f32 %v1647, %v1647
        %v2672 = vmul.f32 %v1648, %v1648
        %v2673 = vmul.f32 %v1649, %v1649
        %v2674 = vmul.f32 %v1650, %v1650
        %v2675 = vmul.f32 %v1651, %v1651
        %v2676 = vmul.f32 %v1652, %v1652
        %v2677 = vmul.f32 %v1653, %v1653
        %v2678 = vmul.f32 %v1654, %v1654
        %v2679 = vmul.f32 %v1655, %v1655
        %v2680 = vmul.f32 %v1656, %v1656
        %v2681 = vmul.f32 %v1657, %v1657
        %v2682 = vmul.f32 %v1658, %v1658
        %v2683 = vmul.f32 %v1659, %v1659
        %v2684 = vmul.f32 %v1660, %v1660
        %v2685 = vmul.f32 %v1661, %v1661
        %v2686 = vmul.f32 %v1662, %v1662
        %v2687 = vmul.f32 %v1663, %v1663
        %v2688 = vmul.f32 %v1664, %v1664
        %v2689 = vmul.f32 %v1665, %v1665
        %v2690 = vmul.f32 %v1666, %v1666
        %v2691 = vmul.f32 %v1667, %v1667
        %v2692 = vmul.f32 %v1668, %v1668
        %v2693 = vmul.f32 %v1669, %v1669
        %v2694 = vmul.f32 %v1670, %v1670
        %v2695 = vmul.f32 %v1671, %v1671
        %v2696 = vmul.f32 %v1672, %v1672
        %v2697 = vmul.f32 %v1673, %v1673
        %v2698 = vmul.f32 %v1674, %v1674
        %v2699 = vmul.f32 %v1675, %v1675
        %v2700 = vmul.f32 %v1676, %v1676
        %v2701 = vmul.f32 %v1677, %v1677
        %v2702 = vmul.f32 %v1678, %v1678
        %v2703 = vmul.f32 %v1679, %v1679
        %v2704 = vmul.f32 %v1680, %v1680
        %v2705 = vmul.f32 %v1681, %v1681
        %v2706 = vmul.f32 %v1682, %v1682
        %v2707 = vmul.f32 %v1683, %v1683
        %v2708 = vmul.f32 %v1684, %v1684
        %v2709 = vmul.f32 %v1685, %v1685
        %v2710 = vmul.f32 %v1686, %v1686
        %v2711 = vmul.f32 %v1687, %v1687
        %v2712 = vmul.f32 %v1688, %v1688
        %v2713 = vmul.f32 %v1689, %v1689
        %v2714 = vmul.f32 %v1690, %v1690
        %v2715 = vmul.f32 %v1691, %v1691
        %v2716 = vmul.f32 %v1692, %v1692
        %v2717 = vmul.f32 %v1693, %v1693
        %v2718 = vmul.f32 %v1694, %v1694
        %v2719 = vmul.f32 %v1695, %v1695
        %v2720 = vmul.f32 %v1696, %v1696
        %v2721 = vmul.f32 %v1697, %v1697
        %v2722 = vmul.f32 %v1698, %v1698
        %v2723 = vmul.f32 %v1699, %v1699
        %v2724 = vmul.f32 %v1700, %v1700
        %v2725 = vmul.f32 %v1701, %v1701
        %v2726 = vmul.f32 %v1702, %v1702
        %v2727 = vmul.f32 %v1703, %v1703
        %v2728 = vmul.f32 %v1704, %v1704
        %v2729 = vmul.f32 %v1705, %v1705
        %v2730 = vmul.f32 %v1706, %v1706
        %v2731 = vmul.f32 %v1707, %v1707
        %v2732 = vmul.f32 %v1708, %v1708
        %v2733 = vmul.f32 %v1709, %v1709
        %v2734 = vmul.f32 %v1710, %v1710
        %v2735 = vmul.f32 %v1711, %v1711
        %v2736 = vmul.f32 %v1712, %v1712
        %v2737 = vmul.f32 %v1713, %v1713
        %v2738 = vmul.f32 %v1714, %v1714
        %v2739 = vmul.f32 %v1715, %v1715
        %v2740 = vmul.f32 %v1716, %v1716
        %v2741 = vmul.f32 %v1717, %v1717
        %v2742 = vmul.f32 %v1718, %v1718
        %v2743 = vmul.f32 %v1719, %v1719
        %v2744 = vmul.f32 %v1720, %v1720
        %v2745 = vmul.f32 %v1721, %v1721
        %v2746 = vmul.f32 %v1722, %v1722
        %v2747 = vmul.f32 %v1723, %v1723
        %v2748 = vmul.f32 %v1724, %v1724
        %v2749 = vmul.f32 %v1725, %v1725
        %v2750 = vmul.f32 %v1726, %v1726
        %v2751 = vmul.f32 %v1727, %v1727
        %v2752 = vmul.f32 %v1728, %v1728
        %v2753 = vmul.f32 %v1729, %v1729
        %v2754 = vmul.f32 %v1730, %v1730
        %v2755 = vmul.f32 %v1731, %v1731
        %v2756 = vmul.f32 %v1732, %v1732
        %v2757 = vmul.f32 %v1733, %v1733
        %v2758 = vmul.f32 %v1734, %v1734
        %v2759 = vmul.f32 %v1735, %v1735
        %v2760 = vmul.f32 %v1736, %v1736
        %v2761 = vmul.f32 %v1737, %v1737
        %v2762 = vmul.f32 %v1738, %v1738
        %v2763 = vmul.f32 %v1739, %v1739
        %v2764 = vmul.f32 %v1740, %v1740
        %v2765 = vmul.f32 %v1741, %v1741
        %v2766 = vmul.f32 %v1742, %v1742
        %v2767 = vmul.f32 %v1743, %v1743
        %v2768 = vmul.f32 %v1744, %v1744
        %v2769 = vmul.f32 %v1745, %v1745
        %v2770 = vmul.f32 %v1746, %v1746
        %v2771 = vmul.f32 %v1747, %v1747
        %v2772 = vmul.f32 %v1748, %v1748
        %v2773 = vmul.f32 %v1749, %v1749
        %v2774 = vmul.f32 %v1750, %v1750
        %v2775 = vmul.f32 %v1751, %v1751
        %v2776 = vmul.f32 %v1752, %v1752
        %v2777 = vmul.f32 %v1753, %v1753
        %v2778 = vmul.f32 %v1754, %v1754
        %v2779 = vmul.f32 %v1755, %v1755
        %v2780 = vmul.f32 %v1756, %v1756
        %v2781 = vmul.f32 %v1757, %v1757
        %v2782 = vmul.f32 %v1758, %v1758
        %v2783 = vmul.f32 %v1759, %v1759
        %v2784 = vmul.f32 %v1760, %v1760
        %v2785 = vmul.f32 %v1761, %v1761
        %v2786 = vmul.f32 %v1762, %v1762
        %v2787 = vmul.f32 %v1763, %v1763
        %v2788 = vmul.f32 %v1764, %v1764
        %v2789 = vmul.f32 %v1765, %v1765
        %v2790 = vmul.f32 %v1766, %v1766
        %v2791 = vmul.f32 %v1767, %v1767
        %v2792 = vmul.f32 %v1768, %v1768
        %v2793 = vmul.f32 %v1769, %v1769
        %v2794 = vmul.f32 %v1770, %v1770
        %v2795 = vmul.f32 %v1771, %v1771
        %v2796 = vmul.f32 %v1772, %v1772
        %v2797 = vmul.f32 %v1773, %v1773
        %v2798 = vmul.f32 %v1774, %v1774
        %v2799 = vmul.f32 %v1775, %v1775
        %v2800 = vmul.f32 %v1776, %v1776
        %v2801 = vmul.f32 %v1777, %v1777
        %v2802 = vmul.f32 %v1778, %v1778
        %v2803 = vmul.f32 %v1779, %v1779
        %v2804 = vmul.f32 %v1780, %v1780
        %v2805 = vmul.f32 %v1781, %v1781
        %v2806 = vmul.f32 %v1782, %v1782
        %v2807 = vmul.f32 %v1783, %v1783
        %v2808 = vmul.f32 %v1784, %v1784
        %v2809 = vmul.f32 %v1785, %v1785
        %v2810 = vmul.f32 %v1786, %v1786
        %v2811 = vmul.f32 %v1787, %v1787
        %v2812 = vmul.f32 %v1788, %v1788
        %v2813 = vmul.f32 %v1789, %v1789
        %v2814 = vmul.f32 %v1790, %v1790
        %v2815 = vmul.f32 %v1791, %v1791
        %v2816 = vmul.f32 %v1792, %v1792
        %v2817 = vmul.f32 %v1793, %v1793
        %v2818 = vmul.f32 %v1794, %v1794
        %v2819 = vmul.f32 %v1795, %v1795
        %v2820 = vmul.f32 %v1796, %v1796
        %v2821 = vmul.f32 %v1797, %v1797
        %v2822 = vmul.f32 %v1798, %v1798
        %v2823 = vmul.f32 %v1799, %v1799
        %v2824 = vmul.f32 %v1800, %v1800
        %v2825 = vmul.f32 %v1801, %v1801
        %v2826 = vmul.f32 %v1802, %v1802
        %v2827 = vmul.f32 %v1803, %v1803
        %v2828 = vmul.f32 %v1804, %v1804
        %v2829 = vmul.f32 %v1805, %v1805
        %v2830 = vmul.f32 %v1806, %v1806
        %v2831 = vmul.f32 %v1807, %v1807
        %v2832 = vmul.f32 %v1808, %v1808
        %v2833 = vmul.f32 %v1809, %v1809
        %v2834 = vmul.f32 %v1810, %v1810
        %v2835 = vmul.f32 %v1811, %v1811
        %v2836 = vmul.f32 %v1812, %v1812
        %v2837 = vmul.f32 %v1813, %v1813
        %v2838 = vmul.f32 %v1814, %v1814
        %v2839 = vmul.f32 %v1815, %v1815
        %v2840 = vmul.f32 %v1816, %v1816
        %v2841 = vmul.f32 %v1817, %v1817
        %v2842 = vmul.f32 %v1818, %v1818
        %v2843 = vmul.f32 %v1819, %v1819
        %v2844 = vmul.f32 %v1820, %v1820
        %v2845 = vmul.f32 %v1821, %v1821
        %v2846 = vmul.f32 %v1822, %v1822
        %v2847 = vmul.f32 %v1823, %v1823
        %v2848 = vmul.f32 %v1824, %v1824
        %v2849 = vmul.f32 %v1825, %v1825
        %v2850 = vmul.f32 %v1826, %v1826
        %v2851 = vmul.f32 %v1827, %v1827
        %v2852 = vmul.f32 %v1828, %v1828
        %v2853 = vmul.f32 %v1829, %v1829
        %v2854 = vmul.f32 %v1830, %v1830
        %v2855 = vmul.f32 %v1831, %v1831
        %v2856 = vmul.f32 %v1832, %v1832
        %v2857 = vmul.f32 %v1833, %v1833
        %v2858 = vmul.f32 %v1834, %v1834
        %v2859 = vmul.f32 %v1835, %v1835
        %v2860 = vmul.f32 %v1836, %v1836
        %v2861 = vmul.f32 %v1837, %v1837
        %v2862 = vmul.f32 %v1838, %v1838
        %v2863 = vmul.f32 %v1839, %v1839
        %v2864 = vmul.f32 %v1840, %v1840
        %v2865 = vmul.f32 %v1841, %v1841
        %v2866 = vmul.f32 %v1842, %v1842
        %v2867 = vmul.f32 %v1843, %v1843
        %v2868 = vmul.f32 %v1844, %v1844
        %v2869 = vmul.f32 %v1845, %v1845
        %v2870 = vmul.f32 %v1846, %v1846
        %v2871 = vmul.f32 %v1847, %v1847
        %v2872 = vmul.f32 %v1848, %v1848
        %v2873 = vmul.f32 %v1849, %v1849
        %v2874 = vmul.f32 %v1850, %v1850
        %v2875 = vmul.f32 %v1851, %v1851
        %v2876 = vmul.f32 %v1852, %v1852
        %v2877 = vmul.f32 %v1853, %v1853
        %v2878 = vmul.f32 %v1854, %v1854
        %v2879 = vmul.f32 %v1855, %v1855
        %v2880 = vmul.f32 %v1856, %v1856
        %v2881 = vmul.f32 %v1857, %v1857
        %v2882 = vmul.f32 %v1858, %v1858
        %v2883 = vmul.f32 %v1859, %v1859
        %v2884 = vmul.f32 %v1860, %v1860
        %v2885 = vmul.f32 %v1861, %v1861
        %v2886 = vmul.f32 %v1862, %v1862
        %v2887 = vmul.f32 %v1863, %v1863
        %v2888 = vmul.f32 %v1864, %v1864
        %v2889 = vmul.f32 %v1865, %v1865
        %v2890 = vmul.f32 %v1866, %v1866
        %v2891 = vmul.f32 %v1867, %v1867
        %v2892 = vmul.f32 %v1868, %v1868
        %v2893 = vmul.f32 %v1869, %v1869
        %v2894 = vmul.f32 %v1870, %v1870
        %v2895 = vmul.f32 %v1871, %v1871
        %v2896 = vmul.f32 %v1872, %v1872
        %v2897 = vmul.f32 %v1873, %v1873
        %v2898 = vmul.f32 %v1874, %v1874
        %v2899 = vmul.f32 %v1875, %v1875
        %v2900 = vmul.f32 %v1876, %v1876
        %v2901 = vmul.f32 %v1877, %v1877
        %v2902 = vmul.f32 %v1878, %v1878
        %v2903 = vmul.f32 %v1879, %v1879
        %v2904 = vmul.f32 %v1880, %v1880
        %v2905 = vmul.f32 %v1881, %v1881
        %v2906 = vmul.f32 %v1882, %v1882
        %v2907 = vmul.f32 %v1883, %v1883
        %v2908 = vmul.f32 %v1884, %v1884
        %v2909 = vmul.f32 %v1885, %v1885
        %v2910 = vmul.f32 %v1886, %v1886
        %v2911 = vmul.f32 %v1887, %v1887
        %v2912 = vmul.f32 %v1888, %v1888
        %v2913 = vmul.f32 %v1889, %v1889
        %v2914 = vmul.f32 %v1890, %v1890
        %v2915 = vmul.f32 %v1891, %v1891
        %v2916 = vmul.f32 %v1892, %v1892
        %v2917 = vmul.f32 %v1893, %v1893
        %v2918 = vmul.f32 %v1894, %v1894
        %v2919 = vmul.f32 %v1895, %v1895
        %v2920 = vmul.f32 %v1896, %v1896
        %v2921 = vmul.f32 %v1897, %v1897
        %v2922 = vmul.f32 %v1898, %v1898
        %v2923 = vmul.f32 %v1899, %v1899
        %v2924 = vmul.f32 %v1900, %v1900
        %v2925 = vmul.f32 %v1901, %v1901
        %v2926 = vmul.f32 %v1902, %v1902
        %v2927 = vmul.f32 %v1903, %v1903
        %v2928 = vmul.f32 %v1904, %v1904
        %v2929 = vmul.f32 %v1905, %v1905
        %v2930 = vmul.f32 %v1906, %v1906
        %v2931 = vmul.f32 %v1907, %v1907
        %v2932 = vmul.f32 %v1908, %v1908
        %v2933 = vmul.f32 %v1909, %v1909
        %v2934 = vmul.f32 %v1910, %v1910
        %v2935 = vmul.f32 %v1911, %v1911
        %v2936 = vmul.f32 %v1912, %v1912
        %v2937 = vmul.f32 %v1913, %v1913
        %v2938 = vmul.f32 %v1914, %v1914
        %v2939 = vmul.f32 %v1915, %v1915
        %v2940 = vmul.f32 %v1916, %v1916
        %v2941 = vmul.f32 %v1917, %v1917
        %v2942 = vmul.f32 %v1918, %v1918
        %v2943 = vmul.f32 %v1919, %v1919
        %v2944 = vmul.f32 %v1920, %v1920
        %v2945 = vmul.f32 %v1921, %v1921
        %v2946 = vmul.f32 %v1922, %v1922
        %v2947 = vmul.f32 %v1923, %v1923
        %v2948 = vmul.f32 %v1924, %v1924
        %v2949 = vmul.f32 %v1925, %v1925
        %v2950 = vmul.f32 %v1926, %v1926
        %v2951 = vmul.f32 %v1927, %v1927
        %v2952 = vmul.f32 %v1928, %v1928
        %v2953 = vmul.f32 %v1929, %v1929
        %v2954 = vmul.f32 %v1930, %v1930
        %v2955 = vmul.f32 %v1931, %v1931
        %v2956 = vmul.f32 %v1932, %v1932
        %v2957 = vmul.f32 %v1933, %v1933
        %v2958 = vmul.f32 %v1934, %v1934
        %v2959 = vmul.f32 %v1935, %v1935
        %v2960 = vmul.f32 %v1936, %v1936
        %v2961 = vmul.f32 %v1937, %v1937
        %v2962 = vmul.f32 %v1938, %v1938
        %v2963 = vmul.f32 %v1939, %v1939
        %v2964 = vmul.f32 %v1940, %v1940
        %v2965 = vmul.f32 %v1941, %v1941
        %v2966 = vmul.f32 %v1942, %v1942
        %v2967 = vmul.f32 %v1943, %v1943
        %v2968 = vmul.f32 %v1944, %v1944
        %v2969 = vmul.f32 %v1945, %v1945
        %v2970 = vmul.f32 %v1946, %v1946
        %v2971 = vmul.f32 %v1947, %v1947
        %v2972 = vmul.f32 %v1948, %v1948
        %v2973 = vmul.f32 %v1949, %v1949
        %v2974 = vmul.f32 %v1950, %v1950
        %v2975 = vmul.f32 %v1951, %v1951
        %v2976 = vmul.f32 %v1952, %v1952
        %v2977 = vmul.f32 %v1953, %v1953
        %v2978 = vmul.f32 %v1954, %v1954
        %v2979 = vmul.f32 %v1955, %v1955
        %v2980 = vmul.f32 %v1956, %v1956
        %v2981 = vmul.f32 %v1957, %v1957
        %v2982 = vmul.f32 %v1958, %v1958
        %v2983 = vmul.f32 %v1959, %v1959
        %v2984 = vmul.f32 %v1960, %v1960
        %v2985 = vmul.f32 %v1961, %v1961
        %v2986 = vmul.f32 %v1962, %v1962
        %v2987 = vmul.f32 %v1963, %v1963
        %v2988 = vmul.f32 %v1964, %v1964
        %v2989 = vadd.f32 %v1965, %v2477
        %v2990 = vadd.f32 %v1966, %v2478
        %v2991 = vadd.f32 %v1967, %v2479
        %v2992 = vadd.f32 %v1968, %v2480
        %v2993 = vadd.f32 %v1969, %v2481
        %v2994 = vadd.f32 %v1970, %v2482
        %v2995 = vadd.f32 %v1971, %v2483
        %v2996 = vadd.f32 %v1972, %v2484
        %v2997 = vadd.f32 %v1973, %v2485
        %v2998 = vadd.f32 %v1974, %v2486
        %v2999 = vadd.f32 %v1975, %v2487
        %v3000 = vadd.f32 %v1976, %v2488
        %v3001 = vadd.f32 %v1977, %v2489
        %v3002 = vadd.f32 %v1978, %v2490
        %v3003 = vadd.f32 %v1979, %v2491
        %v3004 = vadd.f32 %v1980, %v2492
        %v3005 = vadd.f32 %v1981, %v2493
        %v3006 = vadd.f32 %v1982, %v2494
        %v3007 = vadd.f32 %v1983, %v2495
        %v3008 = vadd.f32 %v1984, %v2496
        %v3009 = vadd.f32 %v1985, %v2497
        %v3010 = vadd.f32 %v1986, %v2498
        %v3011 = vadd.f32 %v1987, %v2499
        %v3012 = vadd.f32 %v1988, %v2500
        %v3013 = vadd.f32 %v1989, %v2501
        %v3014 = vadd.f32 %v1990, %v2502
        %v3015 = vadd.f32 %v1991, %v2503
        %v3016 = vadd.f32 %v1992, %v2504
        %v3017 = vadd.f32 %v1993, %v2505
        %v3018 = vadd.f32 %v1994, %v2506
        %v3019 = vadd.f32 %v1995, %v2507
        %v3020 = vadd.f32 %v1996, %v2508
        %v3021 = vadd.f32 %v1997, %v2509
        %v3022 = vadd.f32 %v1998, %v2510
        %v3023 = vadd.f32 %v1999, %v2511
        %v3024 = vadd.f32 %v2000, %v2512
        %v3025 = vadd.f32 %v2001, %v2513
        %v3026 = vadd.f32 %v2002, %v2514
        %v3027 = vadd.f32 %v2003, %v2515
        %v3028 = vadd.f32 %v2004, %v2516
        %v3029 = vadd.f32 %v2005, %v2517
        %v3030 = vadd.f32 %v2006, %v2518
        %v3031 = vadd.f32 %v2007, %v2519
        %v3032 = vadd.f32 %v2008, %v2520
        %v3033 = vadd.f32 %v2009, %v2521
        %v3034 = vadd.f32 %v2010, %v2522
        %v3035 = vadd.f32 %v2011, %v2523
        %v3036 = vadd.f32 %v2012, %v2524
        %v3037 = vadd.f32 %v2013, %v2525
        %v3038 = vadd.f32 %v2014, %v2526
        %v3039 = vadd.f32 %v2015, %v2527
        %v3040 = vadd.f32 %v2016, %v2528
        %v3041 = vadd.f32 %v2017, %v2529
        %v3042 = vadd.f32 %v2018, %v2530
        %v3043 = vadd.f32 %v2019, %v2531
        %v3044 = vadd.f32 %v2020, %v2532
        %v3045 = vadd.f32 %v2021, %v2533
        %v3046 = vadd.f32 %v2022, %v2534
        %v3047 = vadd.f32 %v2023, %v2535
        %v3048 = vadd.f32 %v2024, %v2536
        %v3049 = vadd.f32 %v2025, %v2537
        %v3050 = vadd.f32 %v2026, %v2538
        %v3051 = vadd.f32 %v2027, %v2539
        %v3052 = vadd.f32 %v2028, %v2540
        %v3053 = vadd.f32 %v2029, %v2541
        %v3054 = vadd.f32 %v2030, %v2542
        %v3055 = vadd.f32 %v2031, %v2543
        %v3056 = vadd.f32 %v2032, %v2544
        %v3057 = vadd.f32 %v2033, %v2545
        %v3058 = vadd.f32 %v2034, %v2546
        %v3059 = vadd.f32 %v2035, %v2547
        %v3060 = vadd.f32 %v2036, %v2548
        %v3061 = vadd.f32 %v2037, %v2549
        %v3062 = vadd.f32 %v2038, %v2550
        %v3063 = vadd.f32 %v2039, %v2551
        %v3064 = vadd.f32 %v2040, %v2552
        %v3065 = vadd.f32 %v2041, %v2553
        %v3066 = vadd.f32 %v2042, %v2554
        %v3067 = vadd.f32 %v2043, %v2555
        %v3068 = vadd.f32 %v2044, %v2556
        %v3069 = vadd.f32 %v2045, %v2557
        %v3070 = vadd.f32 %v2046, %v2558
        %v3071 = vadd.f32 %v2047, %v2559
        %v3072 = vadd.f32 %v2048, %v2560
        %v3073 = vadd.f32 %v2049, %v2561
        %v3074 = vadd.f32 %v2050, %v2562
        %v3075 = vadd.f32 %v2051, %v2563
        %v3076 = vadd.f32 %v2052, %v2564
        %v3077 = vadd.f32 %v2053, %v2565
        %v3078 = vadd.f32 %v2054, %v2566
        %v3079 = vadd.f32 %v2055, %v2567
        %v3080 = vadd.f32 %v2056, %v2568
        %v3081 = vadd.f32 %v2057, %v2569
        %v3082 = vadd.f32 %v2058, %v2570
        %v3083 = vadd.f32 %v2059, %v2571
        %v3084 = vadd.f32 %v2060, %v2572
        %v3085 = vadd.f32 %v2061, %v2573
        %v3086 = vadd.f32 %v2062, %v2574
        %v3087 = vadd.f32 %v2063, %v2575
        %v3088 = vadd.f32 %v2064, %v2576
        %v3089 = vadd.f32 %v2065, %v2577
        %v3090 = vadd.f32 %v2066, %v2578
        %v3091 = vadd.f32 %v2067, %v2579
        %v3092 = vadd.f32 %v2068, %v2580
        %v3093 = vadd.f32 %v2069, %v2581
        %v3094 = vadd.f32 %v2070, %v2582
        %v3095 = vadd.f32 %v2071, %v2583
        %v3096 = vadd.f32 %v2072, %v2584
        %v3097 = vadd.f32 %v2073, %v2585
        %v3098 = vadd.f32 %v2074, %v2586
        %v3099 = vadd.f32 %v2075, %v2587
        %v3100 = vadd.f32 %v2076, %v2588
        %v3101 = vadd.f32 %v2077, %v2589
        %v3102 = vadd.f32 %v2078, %v2590
        %v3103 = vadd.f32 %v2079, %v2591
        %v3104 = vadd.f32 %v2080, %v2592
        %v3105 = vadd.f32 %v2081, %v2593
        %v3106 = vadd.f32 %v2082, %v2594
        %v3107 = vadd.f32 %v2083, %v2595
        %v3108 = vadd.f32 %v2084, %v2596
        %v3109 = vadd.f32 %v2085, %v2597
        %v3110 = vadd.f32 %v2086, %v2598
        %v3111 = vadd.f32 %v2087, %v2599
        %v3112 = vadd.f32 %v2088, %v2600
        %v3113 = vadd.f32 %v2089, %v2601
        %v3114 = vadd.f32 %v2090, %v2602
        %v3115 = vadd.f32 %v2091, %v2603
        %v3116 = vadd.f32 %v2092, %v2604
        %v3117 = vadd.f32 %v2093, %v2605
        %v3118 = vadd.f32 %v2094, %v2606
        %v3119 = vadd.f32 %v2095, %v2607
        %v3120 = vadd.f32 %v2096, %v2608
        %v3121 = vadd.f32 %v2097, %v2609
        %v3122 = vadd.f32 %v2098, %v2610
        %v3123 = vadd.f32 %v2099, %v2611
        %v3124 = vadd.f32 %v2100, %v2612
        %v3125 = vadd.f32 %v2101, %v2613
        %v3126 = vadd.f32 %v2102, %v2614
        %v3127 = vadd.f32 %v2103, %v2615
        %v3128 = vadd.f32 %v2104, %v2616
        %v3129 = vadd.f32 %v2105, %v2617
        %v3130 = vadd.f32 %v2106, %v2618
        %v3131 = vadd.f32 %v2107, %v2619
        %v3132 = vadd.f32 %v2108, %v2620
        %v3133 = vadd.f32 %v2109, %v2621
        %v3134 = vadd.f32 %v2110, %v2622
        %v3135 = vadd.f32 %v2111, %v2623
        %v3136 = vadd.f32 %v2112, %v2624
        %v3137 = vadd.f32 %v2113, %v2625
        %v3138 = vadd.f32 %v2114, %v2626
        %v3139 = vadd.f32 %v2115, %v2627
        %v3140 = vadd.f32 %v2116, %v2628
        %v3141 = vadd.f32 %v2117, %v2629
        %v3142 = vadd.f32 %v2118, %v2630
        %v3143 = vadd.f32 %v2119, %v2631
        %v3144 = vadd.f32 %v2120, %v2632
        %v3145 = vadd.f32 %v2121, %v2633
        %v3146 = vadd.f32 %v2122, %v2634
        %v3147 = vadd.f32 %v2123, %v2635
        %v3148 = vadd.f32 %v2124, %v2636
        %v3149 = vadd.f32 %v2125, %v2637
        %v3150 = vadd.f32 %v2126, %v2638
        %v3151 = vadd.f32 %v2127, %v2639
        %v3152 = vadd.f32 %v2128, %v2640
        %v3153 = vadd.f32 %v2129, %v2641
        %v3154 = vadd.f32 %v2130, %v2642
        %v3155 = vadd.f32 %v2131, %v2643
        %v3156 = vadd.f32 %v2132, %v2644
        %v3157 = vadd.f32 %v2133, %v2645
        %v3158 = vadd.f32 %v2134, %v2646
        %v3159 = vadd.f32 %v2135, %v2647
        %v3160 = vadd.f32 %v2136, %v2648
        %v3161 = vadd.f32 %v2137, %v2649
        %v3162 = vadd.f32 %v2138, %v2650
        %v3163 = vadd.f32 %v2139, %v2651
        %v3164 = vadd.f32 %v2140, %v2652
        %v3165 = vadd.f32 %v2141, %v2653
        %v3166 = vadd.f32 %v2142, %v2654
        %v3167 = vadd.f32 %v2143, %v2655
        %v3168 = vadd.f32 %v2144, %v2656
        %v3169 = vadd.f32 %v2145, %v2657
        %v3170 = vadd.f32 %v2146, %v2658
        %v3171 = vadd.f32 %v2147, %v2659
        %v3172 = vadd.f32 %v2148, %v2660
        %v3173 = vadd.f32 %v2149, %v2661
        %v3174 = vadd.f32 %v2150, %v2662
        %v3175 = vadd.f32 %v2151, %v2663
        %v3176 = vadd.f32 %v2152, %v2664
        %v3177 = vadd.f32 %v2153, %v2665
        %v3178 = vadd.f32 %v2154, %v2666
        %v3179 = vadd.f32 %v2155, %v2667
        %v3180 = vadd.f32 %v2156, %v2668
        %v3181 = vadd.f32 %v2157, %v2669
        %v3182 = vadd.f32 %v2158, %v2670
        %v3183 = vadd.f32 %v2159, %v2671
        %v3184 = vadd.f32 %v2160, %v2672
        %v3185 = vadd.f32 %v2161, %v2673
        %v3186 = vadd.f32 %v2162, %v2674
        %v3187 = vadd.f32 %v2163, %v2675
        %v3188 = vadd.f32 %v2164, %v2676
        %v3189 = vadd.f32 %v2165, %v2677
        %v3190 = vadd.f32 %v2166, %v2678
        %v3191 = vadd.f32 %v2167, %v2679
        %v3192 = vadd.f32 %v2168, %v2680
        %v3193 = vadd.f32 %v2169, %v2681
        %v3194 = vadd.f32 %v2170, %v2682
        %v3195 = vadd.f32 %v2171, %v2683
        %v3196 = vadd.f32 %v2172, %v2684
        %v3197 = vadd.f32 %v2173, %v2685
        %v3198 = vadd.f32 %v2174, %v2686
        %v3199 = vadd.f32 %v2175, %v2687
        %v3200 = vadd.f32 %v2176, %v2688
        %v3201 = vadd.f32 %v2177, %v2689
        %v3202 = vadd.f32 %v2178, %v2690
        %v3203 = vadd.f32 %v2179, %v2691
        %v3204 = vadd.f32 %v2180, %v2692
        %v3205 = vadd.f32 %v2181, %v2693
        %v3206 = vadd.f32 %v2182, %v2694
        %v3207 = vadd.f32 %v2183, %v2695
        %v3208 = vadd.f32 %v2184, %v2696
        %v3209 = vadd.f32 %v2185, %v2697
        %v3210 = vadd.f32 %v2186, %v2698
        %v3211 = vadd.f32 %v2187, %v2699
        %v3212 = vadd.f32 %v2188, %v2700
        %v3213 = vadd.f32 %v2189, %v2701
        %v3214 = vadd.f32 %v2190, %v2702
        %v3215 = vadd.f32 %v2191, %v2703
        %v3216 = vadd.f32 %v2192, %v2704
        %v3217 = vadd.f32 %v2193, %v2705
        %v3218 = vadd.f32 %v2194, %v2706
        %v3219 = vadd.f32 %v2195, %v2707
        %v3220 = vadd.f32 %v2196, %v2708
        %v3221 = vadd.f32 %v2197, %v2709
        %v3222 = vadd.f32 %v2198, %v2710
        %v3223 = vadd.f32 %v2199, %v2711
        %v3224 = vadd.f32 %v2200, %v2712
        %v3225 = vadd.f32 %v2201, %v2713
        %v3226 = vadd.f32 %v2202, %v2714
        %v3227 = vadd.f32 %v2203, %v2715
        %v3228 = vadd.f32 %v2204, %v2716
        %v3229 = vadd.f32 %v2205, %v2717
        %v3230 = vadd.f32 %v2206, %v2718
        %v3231 = vadd.f32 %v2207, %v2719
        %v3232 = vadd.f32 %v2208, %v2720
        %v3233 = vadd.f32 %v2209, %v2721
        %v3234 = vadd.f32 %v2210, %v2722
        %v3235 = vadd.f32 %v2211, %v2723
        %v3236 = vadd.f32 %v2212, %v2724
        %v3237 = vadd.f32 %v2213, %v2725
        %v3238 = vadd.f32 %v2214, %v2726
        %v3239 = vadd.f32 %v2215, %v2727
        %v3240 = vadd.f32 %v2216, %v2728
        %v3241 = vadd.f32 %v2217, %v2729
        %v3242 = vadd.f32 %v2218, %v2730
        %v3243 = vadd.f32 %v2219, %v2731
        %v3244 = vadd.f32 %v2220, %v2732
        %v3245 = vadd.f32 %v2221, %v2733
        %v3246 = vadd.f32 %v2222, %v2734
        %v3247 = vadd.f32 %v2223, %v2735
        %v3248 = vadd.f32 %v2224, %v2736
        %v3249 = vadd.f32 %v2225, %v2737
        %v3250 = vadd.f32 %v2226, %v2738
        %v3251 = vadd.f32 %v2227, %v2739
        %v3252 = vadd.f32 %v2228, %v2740
        %v3253 = vadd.f32 %v2229, %v2741
        %v3254 = vadd.f32 %v2230, %v2742
        %v3255 = vadd.f32 %v2231, %v2743
        %v3256 = vadd.f32 %v2232, %v2744
        %v3257 = vadd.f32 %v2233, %v2745
        %v3258 = vadd.f32 %v2234, %v2746
        %v3259 = vadd.f32 %v2235, %v2747
        %v3260 = vadd.f32 %v2236, %v2748
        %v3261 = vadd.f32 %v2237, %v2749
        %v3262 = vadd.f32 %v2238, %v2750
        %v3263 = vadd.f32 %v2239, %v2751
        %v3264 = vadd.f32 %v2240, %v2752
        %v3265 = vadd.f32 %v2241, %v2753
        %v3266 = vadd.f32 %v2242, %v2754
        %v3267 = vadd.f32 %v2243, %v2755
        %v3268 = vadd.f32 %v2244, %v2756
        %v3269 = vadd.f32 %v2245, %v2757
        %v3270 = vadd.f32 %v2246, %v2758
        %v3271 = vadd.f32 %v2247, %v2759
        %v3272 = vadd.f32 %v2248, %v2760
        %v3273 = vadd.f32 %v2249, %v2761
        %v3274 = vadd.f32 %v2250, %v2762
        %v3275 = vadd.f32 %v2251, %v2763
        %v3276 = vadd.f32 %v2252, %v2764
        %v3277 = vadd.f32 %v2253, %v2765
        %v3278 = vadd.f32 %v2254, %v2766
        %v3279 = vadd.f32 %v2255, %v2767
        %v3280 = vadd.f32 %v2256, %v2768
        %v3281 = vadd.f32 %v2257, %v2769
        %v3282 = vadd.f32 %v2258, %v2770
        %v3283 = vadd.f32 %v2259, %v2771
        %v3284 = vadd.f32 %v2260, %v2772
        %v3285 = vadd.f32 %v2261, %v2773
        %v3286 = vadd.f32 %v2262, %v2774
        %v3287 = vadd.f32 %v2263, %v2775
        %v3288 = vadd.f32 %v2264, %v2776
        %v3289 = vadd.f32 %v2265, %v2777
        %v3290 = vadd.f32 %v2266, %v2778
        %v3291 = vadd.f32 %v2267, %v2779
        %v3292 = vadd.f32 %v2268, %v2780
        %v3293 = vadd.f32 %v2269, %v2781
        %v3294 = vadd.f32 %v2270, %v2782
        %v3295 = vadd.f32 %v2271, %v2783
        %v3296 = vadd.f32 %v2272, %v2784
        %v3297 = vadd.f32 %v2273, %v2785
        %v3298 = vadd.f32 %v2274, %v2786
        %v3299 = vadd.f32 %v2275, %v2787
        %v3300 = vadd.f32 %v2276, %v2788
        %v3301 = vadd.f32 %v2277, %v2789
        %v3302 = vadd.f32 %v2278, %v2790
        %v3303 = vadd.f32 %v2279, %v2791
        %v3304 = vadd.f32 %v2280, %v2792
        %v3305 = vadd.f32 %v2281, %v2793
        %v3306 = vadd.f32 %v2282, %v2794
        %v3307 = vadd.f32 %v2283, %v2795
        %v3308 = vadd.f32 %v2284, %v2796
        %v3309 = vadd.f32 %v2285, %v2797
        %v3310 = vadd.f32 %v2286, %v2798
        %v3311 = vadd.f32 %v2287, %v2799
        %v3312 = vadd.f32 %v2288, %v2800
        %v3313 = vadd.f32 %v2289, %v2801
        %v3314 = vadd.f32 %v2290, %v2802
        %v3315 = vadd.f32 %v2291, %v2803
        %v3316 = vadd.f32 %v2292, %v2804
        %v3317 = vadd.f32 %v2293, %v2805
        %v3318 = vadd.f32 %v2294, %v2806
        %v3319 = vadd.f32 %v2295, %v2807
        %v3320 = vadd.f32 %v2296, %v2808
        %v3321 = vadd.f32 %v2297, %v2809
        %v3322 = vadd.f32 %v2298, %v2810
        %v3323 = vadd.f32 %v2299, %v2811
        %v3324 = vadd.f32 %v2300, %v2812
        %v3325 = vadd.f32 %v2301, %v2813
        %v3326 = vadd.f32 %v2302, %v2814
        %v3327 = vadd.f32 %v2303, %v2815
        %v3328 = vadd.f32 %v2304, %v2816
        %v3329 = vadd.f32 %v2305, %v2817
        %v3330 = vadd.f32 %v2306, %v2818
        %v3331 = vadd.f32 %v2307, %v2819
        %v3332 = vadd.f32 %v2308, %v2820
        %v3333 = vadd.f32 %v2309, %v2821
        %v3334 = vadd.f32 %v2310, %v2822
        %v3335 = vadd.f32 %v2311, %v2823
        %v3336 = vadd.f32 %v2312, %v2824
        %v3337 = vadd.f32 %v2313, %v2825
        %v3338 = vadd.f32 %v2314, %v2826
        %v3339 = vadd.f32 %v2315, %v2827
        %v3340 = vadd.f32 %v2316, %v2828
        %v3341 = vadd.f32 %v2317, %v2829
        %v3342 = vadd.f32 %v2318, %v2830
        %v3343 = vadd.f32 %v2319, %v2831
        %v3344 = vadd.f32 %v2320, %v2832
        %v3345 = vadd.f32 %v2321, %v2833
        %v3346 = vadd.f32 %v2322, %v2834
        %v3347 = vadd.f32 %v2323, %v2835
        %v3348 = vadd.f32 %v2324, %v2836
        %v3349 = vadd.f32 %v2325, %v2837
        %v3350 = vadd.f32 %v2326, %v2838
        %v3351 = vadd.f32 %v2327, %v2839
        %v3352 = vadd.f32 %v2328, %v2840
        %v3353 = vadd.f32 %v2329, %v2841
        %v3354 = vadd.f32 %v2330, %v2842
        %v3355 = vadd.f32 %v2331, %v2843
        %v3356 = vadd.f32 %v2332, %v2844
        %v3357 = vadd.f32 %v2333, %v2845
        %v3358 = vadd.f32 %v2334, %v2846
        %v3359 = vadd.f32 %v2335, %v2847
        %v3360 = vadd.f32 %v2336, %v2848
        %v3361 = vadd.f32 %v2337, %v2849
        %v3362 = vadd.f32 %v2338, %v2850
        %v3363 = vadd.f32 %v2339, %v2851
        %v3364 = vadd.f32 %v2340, %v2852
        %v3365 = vadd.f32 %v2341, %v2853
        %v3366 = vadd.f32 %v2342, %v2854
        %v3367 = vadd.f32 %v2343, %v2855
        %v3368 = vadd.f32 %v2344, %v2856
        %v3369 = vadd.f32 %v2345, %v2857
        %v3370 = vadd.f32 %v2346, %v2858
        %v3371 = vadd.f32 %v2347, %v2859
        %v3372 = vadd.f32 %v2348, %v2860
        %v3373 = vadd.f32 %v2349, %v2861
        %v3374 = vadd.f32 %v2350, %v2862
        %v3375 = vadd.f32 %v2351, %v2863
        %v3376 = vadd.f32 %v2352, %v2864
        %v3377 = vadd.f32 %v2353, %v2865
        %v3378 = vadd.f32 %v2354, %v2866
        %v3379 = vadd.f32 %v2355, %v2867
        %v3380 = vadd.f32 %v2356, %v2868
        %v3381 = vadd.f32 %v2357, %v2869
        %v3382 = vadd.f32 %v2358, %v2870
        %v3383 = vadd.f32 %v2359, %v2871
        %v3384 = vadd.f32 %v2360, %v2872
        %v3385 = vadd.f32 %v2361, %v2873
        %v3386 = vadd.f32 %v2362, %v2874
        %v3387 = vadd.f32 %v2363, %v2875
        %v3388 = vadd.f32 %v2364, %v2876
        %v3389 = vadd.f32 %v2365, %v2877
        %v3390 = vadd.f32 %v2366, %v2878
        %v3391 = vadd.f32 %v2367, %v2879
        %v3392 = vadd.f32 %v2368, %v2880
        %v3393 = vadd.f32 %v2369, %v2881
        %v3394 = vadd.f32 %v2370, %v2882
        %v3395 = vadd.f32 %v2371, %v2883
        %v3396 = vadd.f32 %v2372, %v2884
        %v3397 = vadd.f32 %v2373, %v2885
        %v3398 = vadd.f32 %v2374, %v2886
        %v3399 = vadd.f32 %v2375, %v2887
        %v3400 = vadd.f32 %v2376, %v2888
        %v3401 = vadd.f32 %v2377, %v2889
        %v3402 = vadd.f32 %v2378, %v2890
        %v3403 = vadd.f32 %v2379, %v2891
        %v3404 = vadd.f32 %v2380, %v2892
        %v3405 = vadd.f32 %v2381, %v2893
        %v3406 = vadd.f32 %v2382, %v2894
        %v3407 = vadd.f32 %v2383, %v2895
        %v3408 = vadd.f32 %v2384, %v2896
        %v3409 = vadd.f32 %v2385, %v2897
        %v3410 = vadd.f32 %v2386, %v2898
        %v3411 = vadd.f32 %v2387, %v2899
        %v3412 = vadd.f32 %v2388, %v2900
        %v3413 = vadd.f32 %v2389, %v2901
        %v3414 = vadd.f32 %v2390, %v2902
        %v3415 = vadd.f32 %v2391, %v2903
        %v3416 = vadd.f32 %v2392, %v2904
        %v3417 = vadd.f32 %v2393, %v2905
        %v3418 = vadd.f32 %v2394, %v2906
        %v3419 = vadd.f32 %v2395, %v2907
        %v3420 = vadd.f32 %v2396, %v2908
        %v3421 = vadd.f32 %v2397, %v2909
        %v3422 = vadd.f32 %v2398, %v2910
        %v3423 = vadd.f32 %v2399, %v2911
        %v3424 = vadd.f32 %v2400, %v2912
        %v3425 = vadd.f32 %v2401, %v2913
        %v3426 = vadd.f32 %v2402, %v2914
        %v3427 = vadd.f32 %v2403, %v2915
        %v3428 = vadd.f32 %v2404, %v2916
        %v3429 = vadd.f32 %v2405, %v2917
        %v3430 = vadd.f32 %v2406, %v2918
        %v3431 = vadd.f32 %v2407, %v2919
        %v3432 = vadd.f32 %v2408, %v2920
        %v3433 = vadd.f32 %v2409, %v2921
        %v3434 = vadd.f32 %v2410, %v2922
        %v3435 = vadd.f32 %v2411, %v2923
        %v3436 = vadd.f32 %v2412, %v2924
        %v3437 = vadd.f32 %v2413, %v2925
        %v3438 = vadd.f32 %v2414, %v2926
        %v3439 = vadd.f32 %v2415, %v2927
        %v3440 = vadd.f32 %v2416, %v2928
        %v3441 = vadd.f32 %v2417, %v2929
        %v3442 = vadd.f32 %v2418, %v2930
        %v3443 = vadd.f32 %v2419, %v2931
        %v3444 = vadd.f32 %v2420, %v2932
        %v3445 = vadd.f32 %v2421, %v2933
        %v3446 = vadd.f32 %v2422, %v2934
        %v3447 = vadd.f32 %v2423, %v2935
        %v3448 = vadd.f32 %v2424, %v2936
        %v3449 = vadd.f32 %v2425, %v2937
        %v3450 = vadd.f32 %v2426, %v2938
        %v3451 = vadd.f32 %v2427, %v2939
        %v3452 = vadd.f32 %v2428, %v2940
        %v3453 = vadd.f32 %v2429, %v2941
        %v3454 = vadd.f32 %v2430, %v2942
        %v3455 = vadd.f32 %v2431, %v2943
        %v3456 = vadd.f32 %v2432, %v2944
        %v3457 = vadd.f32 %v2433, %v2945
        %v3458 = vadd.f32 %v2434, %v2946
        %v3459 = vadd.f32 %v2435, %v2947
        %v3460 = vadd.f32 %v2436, %v2948
        %v3461 = vadd.f32 %v2437, %v2949
        %v3462 = vadd.f32 %v2438, %v2950
        %v3463 = vadd.f32 %v2439, %v2951
        %v3464 = vadd.f32 %v2440, %v2952
        %v3465 = vadd.f32 %v2441, %v2953
        %v3466 = vadd.f32 %v2442, %v2954
        %v3467 = vadd.f32 %v2443, %v2955
        %v3468 = vadd.f32 %v2444, %v2956
        %v3469 = vadd.f32 %v2445, %v2957
        %v3470 = vadd.f32 %v2446, %v2958
        %v3471 = vadd.f32 %v2447, %v2959
        %v3472 = vadd.f32 %v2448, %v2960
        %v3473 = vadd.f32 %v2449, %v2961
        %v3474 = vadd.f32 %v2450, %v2962
        %v3475 = vadd.f32 %v2451, %v2963
        %v3476 = vadd.f32 %v2452, %v2964
        %v3477 = vadd.f32 %v2453, %v2965
        %v3478 = vadd.f32 %v2454, %v2966
        %v3479 = vadd.f32 %v2455, %v2967
        %v3480 = vadd.f32 %v2456, %v2968
        %v3481 = vadd.f32 %v2457, %v2969
        %v3482 = vadd.f32 %v2458, %v2970
        %v3483 = vadd.f32 %v2459, %v2971
        %v3484 = vadd.f32 %v2460, %v2972
        %v3485 = vadd.f32 %v2461, %v2973
        %v3486 = vadd.f32 %v2462, %v2974
        %v3487 = vadd.f32 %v2463, %v2975
        %v3488 = vadd.f32 %v2464, %v2976
        %v3489 = vadd.f32 %v2465, %v2977
        %v3490 = vadd.f32 %v2466, %v2978
        %v3491 = vadd.f32 %v2467, %v2979
        %v3492 = vadd.f32 %v2468, %v2980
        %v3493 = vadd.f32 %v2469, %v2981
        %v3494 = vadd.f32 %v2470, %v2982
        %v3495 = vadd.f32 %v2471, %v2983
        %v3496 = vadd.f32 %v2472, %v2984
        %v3497 = vadd.f32 %v2473, %v2985
        %v3498 = vadd.f32 %v2474, %v2986
        %v3499 = vadd.f32 %v2475, %v2987
        %v3500 = vadd.f32 %v2476, %v2988
        %v3501 = vmin.f32 %v2989, %v2997
        %v3502 = vmin.f32 %v3501, %v3005
        %v3503 = vmin.f32 %v3502, %v3013
        %v3504 = vmin.f32 %v3503, %v3021
        %v3505 = vmin.f32 %v3504, %v3029
        %v3506 = vmin.f32 %v3505, %v3037
        %v3507 = vmin.f32 %v3506, %v3045
        %v3508 = vmin.f32 %v3507, %v3053
        %v3509 = vmin.f32 %v3508, %v3061
        %v3510 = vmin.f32 %v3509, %v3069
        %v3511 = vmin.f32 %v3510, %v3077
        %v3512 = vmin.f32 %v3511, %v3085
        %v3513 = vmin.f32 %v3512, %v3093
        %v3514 = vmin.f32 %v3513, %v3101
        %v3515 = vmin.f32 %v3514, %v3109
        %v3516 = vmin.f32 %v3515, %v3117
        %v3517 = vmin.f32 %v3516, %v3125
        %v3518 = vmin.f32 %v3517, %v3133
        %v3519 = vmin.f32 %v3518, %v3141
        %v3520 = vmin.f32 %v3519, %v3149
        %v3521 = vmin.f32 %v3520, %v3157
        %v3522 = vmin.f32 %v3521, %v3165
        %v3523 = vmin.f32 %v3522, %v3173
        %v3524 = vmin.f32 %v3523, %v3181
        %v3525 = vmin.f32 %v3524, %v3189
        %v3526 = vmin.f32 %v3525, %v3197
        %v3527 = vmin.f32 %v3526, %v3205
        %v3528 = vmin.f32 %v3527, %v3213
        %v3529 = vmin.f32 %v3528, %v3221
        %v3530 = vmin.f32 %v3529, %v3229
        %v3531 = vmin.f32 %v3530, %v3237
        %v3532 = vmin.f32 %v3531, %v3245
        %v3533 = vmin.f32 %v3532, %v3253
        %v3534 = vmin.f32 %v3533, %v3261
        %v3535 = vmin.f32 %v3534, %v3269
        %v3536 = vmin.f32 %v3535, %v3277
        %v3537 = vmin.f32 %v3536, %v3285
        %v3538 = vmin.f32 %v3537, %v3293
        %v3539 = vmin.f32 %v3538, %v3301
        %v3540 = vmin.f32 %v3539, %v3309
        %v3541 = vmin.f32 %v3540, %v3317
        %v3542 = vmin.f32 %v3541, %v3325
        %v3543 = vmin.f32 %v3542, %v3333
        %v3544 = vmin.f32 %v3543, %v3341
        %v3545 = vmin.f32 %v3544, %v3349
        %v3546 = vmin.f32 %v3545, %v3357
        %v3547 = vmin.f32 %v3546, %v3365
        %v3548 = vmin.f32 %v3547, %v3373
        %v3549 = vmin.f32 %v3548, %v3381
        %v3550 = vmin.f32 %v3549, %v3389
        %v3551 = vmin.f32 %v3550, %v3397
        %v3552 = vmin.f32 %v3551, %v3405
        %v3553 = vmin.f32 %v3552, %v3413
        %v3554 = vmin.f32 %v3553, %v3421
        %v3555 = vmin.f32 %v3554, %v3429
        %v3556 = vmin.f32 %v3555, %v3437
        %v3557 = vmin.f32 %v3556, %v3445
        %v3558 = vmin.f32 %v3557, %v3453
        %v3559 = vmin.f32 %v3558, %v3461
        %v3560 = vmin.f32 %v3559, %v3469
        %v3561 = vmin.f32 %v3560, %v3477
        %v3562 = vmin.f32 %v3561, %v3485
        %v3563 = vmin.f32 %v3562, %v3493
        %v3564 = vrot.slane %v3563, 4
        %v3565 = vmin.f32 %v3563, %v3564
        %v3566 = vrot.slane %v3565, 2
        %v3567 = vmin.f32 %v3565, %v3566
        %v3568 = vrot.slane %v3567, 1
        %v3569 = vmin.f32 %v3567, %v3568
        %v3570 = vmin.f32 %v2990, %v2998
        %v3571 = vmin.f32 %v3570, %v3006
        %v3572 = vmin.f32 %v3571, %v3014
        %v3573 = vmin.f32 %v3572, %v3022
        %v3574 = vmin.f32 %v3573, %v3030
        %v3575 = vmin.f32 %v3574, %v3038
        %v3576 = vmin.f32 %v3575, %v3046
        %v3577 = vmin.f32 %v3576, %v3054
        %v3578 = vmin.f32 %v3577, %v3062
        %v3579 = vmin.f32 %v3578, %v3070
        %v3580 = vmin.f32 %v3579, %v3078
        %v3581 = vmin.f32 %v3580, %v3086
        %v3582 = vmin.f32 %v3581, %v3094
        %v3583 = vmin.f32 %v3582, %v3102
        %v3584 = vmin.f32 %v3583, %v3110
        %v3585 = vmin.f32 %v3584, %v3118
        %v3586 = vmin.f32 %v3585, %v3126
        %v3587 = vmin.f32 %v3586, %v3134
        %v3588 = vmin.f32 %v3587, %v3142
        %v3589 = vmin.f32 %v3588, %v3150
        %v3590 = vmin.f32 %v3589, %v3158
        %v3591 = vmin.f32 %v3590, %v3166
        %v3592 = vmin.f32 %v3591, %v3174
        %v3593 = vmin.f32 %v3592, %v3182
        %v3594 = vmin.f32 %v3593, %v3190
        %v3595 = vmin.f32 %v3594, %v3198
        %v3596 = vmin.f32 %v3595, %v3206
        %v3597 = vmin.f32 %v3596, %v3214
        %v3598 = vmin.f32 %v3597, %v3222
        %v3599 = vmin.f32 %v3598, %v3230
        %v3600 = vmin.f32 %v3599, %v3238
        %v3601 = vmin.f32 %v3600, %v3246
        %v3602 = vmin.f32 %v3601, %v3254
        %v3603 = vmin.f32 %v3602, %v3262
        %v3604 = vmin.f32 %v3603, %v3270
        %v3605 = vmin.f32 %v3604, %v3278
        %v3606 = vmin.f32 %v3605, %v3286
        %v3607 = vmin.f32 %v3606, %v3294
        %v3608 = vmin.f32 %v3607, %v3302
        %v3609 = vmin.f32 %v3608, %v3310
        %v3610 = vmin.f32 %v3609, %v3318
        %v3611 = vmin.f32 %v3610, %v3326
        %v3612 = vmin.f32 %v3611, %v3334
        %v3613 = vmin.f32 %v3612, %v3342
        %v3614 = vmin.f32 %v3613, %v3350
        %v3615 = vmin.f32 %v3614, %v3358
        %v3616 = vmin.f32 %v3615, %v3366
        %v3617 = vmin.f32 %v3616, %v3374
        %v3618 = vmin.f32 %v3617, %v3382
        %v3619 = vmin.f32 %v3618, %v3390
        %v3620 = vmin.f32 %v3619, %v3398
        %v3621 = vmin.f32 %v3620, %v3406
        %v3622 = vmin.f32 %v3621, %v3414
        %v3623 = vmin.f32 %v3622, %v3422
        %v3624 = vmin.f32 %v3623, %v3430
        %v3625 = vmin.f32 %v3624, %v3438
        %v3626 = vmin.f32 %v3625, %v3446
        %v3627 = vmin.f32 %v3626, %v3454
        %v3628 = vmin.f32 %v3627, %v3462
        %v3629 = vmin.f32 %v3628, %v3470
        %v3630 = vmin.f32 %v3629, %v3478
        %v3631 = vmin.f32 %v3630, %v3486
        %v3632 = vmin.f32 %v3631, %v3494
        %v3633 = vrot.slane %v3632, 4
        %v3634 = vmin.f32 %v3632, %v3633
        %v3635 = vrot.slane %v3634, 2
        %v3636 = vmin.f32 %v3634, %v3635
        %v3637 = vrot.slane %v3636, 1
        %v3638 = vmin.f32 %v3636, %v3637
        %v3639 = vmin.f32 %v2991, %v2999
        %v3640 = vmin.f32 %v3639, %v3007
        %v3641 = vmin.f32 %v3640, %v3015
        %v3642 = vmin.f32 %v3641, %v3023
        %v3643 = vmin.f32 %v3642, %v3031
        %v3644 = vmin.f32 %v3643, %v3039
        %v3645 = vmin.f32 %v3644, %v3047
        %v3646 = vmin.f32 %v3645, %v3055
        %v3647 = vmin.f32 %v3646, %v3063
        %v3648 = vmin.f32 %v3647, %v3071
        %v3649 = vmin.f32 %v3648, %v3079
        %v3650 = vmin.f32 %v3649, %v3087
        %v3651 = vmin.f32 %v3650, %v3095
        %v3652 = vmin.f32 %v3651, %v3103
        %v3653 = vmin.f32 %v3652, %v3111
        %v3654 = vmin.f32 %v3653, %v3119
        %v3655 = vmin.f32 %v3654, %v3127
        %v3656 = vmin.f32 %v3655, %v3135
        %v3657 = vmin.f32 %v3656, %v3143
        %v3658 = vmin.f32 %v3657, %v3151
        %v3659 = vmin.f32 %v3658, %v3159
        %v3660 = vmin.f32 %v3659, %v3167
        %v3661 = vmin.f32 %v3660, %v3175
        %v3662 = vmin.f32 %v3661, %v3183
        %v3663 = vmin.f32 %v3662, %v3191
        %v3664 = vmin.f32 %v3663, %v3199
        %v3665 = vmin.f32 %v3664, %v3207
        %v3666 = vmin.f32 %v3665, %v3215
        %v3667 = vmin.f32 %v3666, %v3223
        %v3668 = vmin.f32 %v3667, %v3231
        %v3669 = vmin.f32 %v3668, %v3239
        %v3670 = vmin.f32 %v3669, %v3247
        %v3671 = vmin.f32 %v3670, %v3255
        %v3672 = vmin.f32 %v3671, %v3263
        %v3673 = vmin.f32 %v3672, %v3271
        %v3674 = vmin.f32 %v3673, %v3279
        %v3675 = vmin.f32 %v3674, %v3287
        %v3676 = vmin.f32 %v3675, %v3295
        %v3677 = vmin.f32 %v3676, %v3303
        %v3678 = vmin.f32 %v3677, %v3311
        %v3679 = vmin.f32 %v3678, %v3319
        %v3680 = vmin.f32 %v3679, %v3327
        %v3681 = vmin.f32 %v3680, %v3335
        %v3682 = vmin.f32 %v3681, %v3343
        %v3683 = vmin.f32 %v3682, %v3351
        %v3684 = vmin.f32 %v3683, %v3359
        %v3685 = vmin.f32 %v3684, %v3367
        %v3686 = vmin.f32 %v3685, %v3375
        %v3687 = vmin.f32 %v3686, %v3383
        %v3688 = vmin.f32 %v3687, %v3391
        %v3689 = vmin.f32 %v3688, %v3399
        %v3690 = vmin.f32 %v3689, %v3407
        %v3691 = vmin.f32 %v3690, %v3415
        %v3692 = vmin.f32 %v3691, %v3423
        %v3693 = vmin.f32 %v3692, %v3431
        %v3694 = vmin.f32 %v3693, %v3439
        %v3695 = vmin.f32 %v3694, %v3447
        %v3696 = vmin.f32 %v3695, %v3455
        %v3697 = vmin.f32 %v3696, %v3463
        %v3698 = vmin.f32 %v3697, %v3471
        %v3699 = vmin.f32 %v3698, %v3479
        %v3700 = vmin.f32 %v3699, %v3487
        %v3701 = vmin.f32 %v3700, %v3495
        %v3702 = vrot.slane %v3701, 4
        %v3703 = vmin.f32 %v3701, %v3702
        %v3704 = vrot.slane %v3703, 2
        %v3705 = vmin.f32 %v3703, %v3704
        %v3706 = vrot.slane %v3705, 1
        %v3707 = vmin.f32 %v3705, %v3706
        %v3708 = vmin.f32 %v2992, %v3000
        %v3709 = vmin.f32 %v3708, %v3008
        %v3710 = vmin.f32 %v3709, %v3016
        %v3711 = vmin.f32 %v3710, %v3024
        %v3712 = vmin.f32 %v3711, %v3032
        %v3713 = vmin.f32 %v3712, %v3040
        %v3714 = vmin.f32 %v3713, %v3048
        %v3715 = vmin.f32 %v3714, %v3056
        %v3716 = vmin.f32 %v3715, %v3064
        %v3717 = vmin.f32 %v3716, %v3072
        %v3718 = vmin.f32 %v3717, %v3080
        %v3719 = vmin.f32 %v3718, %v3088
        %v3720 = vmin.f32 %v3719, %v3096
        %v3721 = vmin.f32 %v3720, %v3104
        %v3722 = vmin.f32 %v3721, %v3112
        %v3723 = vmin.f32 %v3722, %v3120
        %v3724 = vmin.f32 %v3723, %v3128
        %v3725 = vmin.f32 %v3724, %v3136
        %v3726 = vmin.f32 %v3725, %v3144
        %v3727 = vmin.f32 %v3726, %v3152
        %v3728 = vmin.f32 %v3727, %v3160
        %v3729 = vmin.f32 %v3728, %v3168
        %v3730 = vmin.f32 %v3729, %v3176
        %v3731 = vmin.f32 %v3730, %v3184
        %v3732 = vmin.f32 %v3731, %v3192
        %v3733 = vmin.f32 %v3732, %v3200
        %v3734 = vmin.f32 %v3733, %v3208
        %v3735 = vmin.f32 %v3734, %v3216
        %v3736 = vmin.f32 %v3735, %v3224
        %v3737 = vmin.f32 %v3736, %v3232
        %v3738 = vmin.f32 %v3737, %v3240
        %v3739 = vmin.f32 %v3738, %v3248
        %v3740 = vmin.f32 %v3739, %v3256
        %v3741 = vmin.f32 %v3740, %v3264
        %v3742 = vmin.f32 %v3741, %v3272
        %v3743 = vmin.f32 %v3742, %v3280
        %v3744 = vmin.f32 %v3743, %v3288
        %v3745 = vmin.f32 %v3744, %v3296
        %v3746 = vmin.f32 %v3745, %v3304
        %v3747 = vmin.f32 %v3746, %v3312
        %v3748 = vmin.f32 %v3747, %v3320
        %v3749 = vmin.f32 %v3748, %v3328
        %v3750 = vmin.f32 %v3749, %v3336
        %v3751 = vmin.f32 %v3750, %v3344
        %v3752 = vmin.f32 %v3751, %v3352
        %v3753 = vmin.f32 %v3752, %v3360
        %v3754 = vmin.f32 %v3753, %v3368
        %v3755 = vmin.f32 %v3754, %v3376
        %v3756 = vmin.f32 %v3755, %v3384
        %v3757 = vmin.f32 %v3756, %v3392
        %v3758 = vmin.f32 %v3757, %v3400
        %v3759 = vmin.f32 %v3758, %v3408
        %v3760 = vmin.f32 %v3759, %v3416
        %v3761 = vmin.f32 %v3760, %v3424
        %v3762 = vmin.f32 %v3761, %v3432
        %v3763 = vmin.f32 %v3762, %v3440
        %v3764 = vmin.f32 %v3763, %v3448
        %v3765 = vmin.f32 %v3764, %v3456
        %v3766 = vmin.f32 %v3765, %v3464
        %v3767 = vmin.f32 %v3766, %v3472
        %v3768 = vmin.f32 %v3767, %v3480
        %v3769 = vmin.f32 %v3768, %v3488
        %v3770 = vmin.f32 %v3769, %v3496
        %v3771 = vrot.slane %v3770, 4
        %v3772 = vmin.f32 %v3770, %v3771
        %v3773 = vrot.slane %v3772, 2
        %v3774 = vmin.f32 %v3772, %v3773
        %v3775 = vrot.slane %v3774, 1
        %v3776 = vmin.f32 %v3774, %v3775
        %v3777 = vmin.f32 %v2993, %v3001
        %v3778 = vmin.f32 %v3777, %v3009
        %v3779 = vmin.f32 %v3778, %v3017
        %v3780 = vmin.f32 %v3779, %v3025
        %v3781 = vmin.f32 %v3780, %v3033
        %v3782 = vmin.f32 %v3781, %v3041
        %v3783 = vmin.f32 %v3782, %v3049
        %v3784 = vmin.f32 %v3783, %v3057
        %v3785 = vmin.f32 %v3784, %v3065
        %v3786 = vmin.f32 %v3785, %v3073
        %v3787 = vmin.f32 %v3786, %v3081
        %v3788 = vmin.f32 %v3787, %v3089
        %v3789 = vmin.f32 %v3788, %v3097
        %v3790 = vmin.f32 %v3789, %v3105
        %v3791 = vmin.f32 %v3790, %v3113
        %v3792 = vmin.f32 %v3791, %v3121
        %v3793 = vmin.f32 %v3792, %v3129
        %v3794 = vmin.f32 %v3793, %v3137
        %v3795 = vmin.f32 %v3794, %v3145
        %v3796 = vmin.f32 %v3795, %v3153
        %v3797 = vmin.f32 %v3796, %v3161
        %v3798 = vmin.f32 %v3797, %v3169
        %v3799 = vmin.f32 %v3798, %v3177
        %v3800 = vmin.f32 %v3799, %v3185
        %v3801 = vmin.f32 %v3800, %v3193
        %v3802 = vmin.f32 %v3801, %v3201
        %v3803 = vmin.f32 %v3802, %v3209
        %v3804 = vmin.f32 %v3803, %v3217
        %v3805 = vmin.f32 %v3804, %v3225
        %v3806 = vmin.f32 %v3805, %v3233
        %v3807 = vmin.f32 %v3806, %v3241
        %v3808 = vmin.f32 %v3807, %v3249
        %v3809 = vmin.f32 %v3808, %v3257
        %v3810 = vmin.f32 %v3809, %v3265
        %v3811 = vmin.f32 %v3810, %v3273
        %v3812 = vmin.f32 %v3811, %v3281
        %v3813 = vmin.f32 %v3812, %v3289
        %v3814 = vmin.f32 %v3813, %v3297
        %v3815 = vmin.f32 %v3814, %v3305
        %v3816 = vmin.f32 %v3815, %v3313
        %v3817 = vmin.f32 %v3816, %v3321
        %v3818 = vmin.f32 %v3817, %v3329
        %v3819 = vmin.f32 %v3818, %v3337
        %v3820 = vmin.f32 %v3819, %v3345
        %v3821 = vmin.f32 %v3820, %v3353
        %v3822 = vmin.f32 %v3821, %v3361
        %v3823 = vmin.f32 %v3822, %v3369
        %v3824 = vmin.f32 %v3823, %v3377
        %v3825 = vmin.f32 %v3824, %v3385
        %v3826 = vmin.f32 %v3825, %v3393
        %v3827 = vmin.f32 %v3826, %v3401
        %v3828 = vmin.f32 %v3827, %v3409
        %v3829 = vmin.f32 %v3828, %v3417
        %v3830 = vmin.f32 %v3829, %v3425
        %v3831 = vmin.f32 %v3830, %v3433
        %v3832 = vmin.f32 %v3831, %v3441
        %v3833 = vmin.f32 %v3832, %v3449
        %v3834 = vmin.f32 %v3833, %v3457
        %v3835 = vmin.f32 %v3834, %v3465
        %v3836 = vmin.f32 %v3835, %v3473
        %v3837 = vmin.f32 %v3836, %v3481
        %v3838 = vmin.f32 %v3837, %v3489
        %v3839 = vmin.f32 %v3838, %v3497
        %v3840 = vrot.slane %v3839, 4
        %v3841 = vmin.f32 %v3839, %v3840
        %v3842 = vrot.slane %v3841, 2
        %v3843 = vmin.f32 %v3841, %v3842
        %v3844 = vrot.slane %v3843, 1
        %v3845 = vmin.f32 %v3843, %v3844
        %v3846 = vmin.f32 %v2994, %v3002
        %v3847 = vmin.f32 %v3846, %v3010
        %v3848 = vmin.f32 %v3847, %v3018
        %v3849 = vmin.f32 %v3848, %v3026
        %v3850 = vmin.f32 %v3849, %v3034
        %v3851 = vmin.f32 %v3850, %v3042
        %v3852 = vmin.f32 %v3851, %v3050
        %v3853 = vmin.f32 %v3852, %v3058
        %v3854 = vmin.f32 %v3853, %v3066
        %v3855 = vmin.f32 %v3854, %v3074
        %v3856 = vmin.f32 %v3855, %v3082
        %v3857 = vmin.f32 %v3856, %v3090
        %v3858 = vmin.f32 %v3857, %v3098
        %v3859 = vmin.f32 %v3858, %v3106
        %v3860 = vmin.f32 %v3859, %v3114
        %v3861 = vmin.f32 %v3860, %v3122
        %v3862 = vmin.f32 %v3861, %v3130
        %v3863 = vmin.f32 %v3862, %v3138
        %v3864 = vmin.f32 %v3863, %v3146
        %v3865 = vmin.f32 %v3864, %v3154
        %v3866 = vmin.f32 %v3865, %v3162
        %v3867 = vmin.f32 %v3866, %v3170
        %v3868 = vmin.f32 %v3867, %v3178
        %v3869 = vmin.f32 %v3868, %v3186
        %v3870 = vmin.f32 %v3869, %v3194
        %v3871 = vmin.f32 %v3870, %v3202
        %v3872 = vmin.f32 %v3871, %v3210
        %v3873 = vmin.f32 %v3872, %v3218
        %v3874 = vmin.f32 %v3873, %v3226
        %v3875 = vmin.f32 %v3874, %v3234
        %v3876 = vmin.f32 %v3875, %v3242
        %v3877 = vmin.f32 %v3876, %v3250
        %v3878 = vmin.f32 %v3877, %v3258
        %v3879 = vmin.f32 %v3878, %v3266
        %v3880 = vmin.f32 %v3879, %v3274
        %v3881 = vmin.f32 %v3880, %v3282
        %v3882 = vmin.f32 %v3881, %v3290
        %v3883 = vmin.f32 %v3882, %v3298
        %v3884 = vmin.f32 %v3883, %v3306
        %v3885 = vmin.f32 %v3884, %v3314
        %v3886 = vmin.f32 %v3885, %v3322
        %v3887 = vmin.f32 %v3886, %v3330
        %v3888 = vmin.f32 %v3887, %v3338
        %v3889 = vmin.f32 %v3888, %v3346
        %v3890 = vmin.f32 %v3889, %v3354
        %v3891 = vmin.f32 %v3890, %v3362
        %v3892 = vmin.f32 %v3891, %v3370
        %v3893 = vmin.f32 %v3892, %v3378
        %v3894 = vmin.f32 %v3893, %v3386
        %v3895 = vmin.f32 %v3894, %v3394
        %v3896 = vmin.f32 %v3895, %v3402
        %v3897 = vmin.f32 %v3896, %v3410
        %v3898 = vmin.f32 %v3897, %v3418
        %v3899 = vmin.f32 %v3898, %v3426
        %v3900 = vmin.f32 %v3899, %v3434
        %v3901 = vmin.f32 %v3900, %v3442
        %v3902 = vmin.f32 %v3901, %v3450
        %v3903 = vmin.f32 %v3902, %v3458
        %v3904 = vmin.f32 %v3903, %v3466
        %v3905 = vmin.f32 %v3904, %v3474
        %v3906 = vmin.f32 %v3905, %v3482
        %v3907 = vmin.f32 %v3906, %v3490
        %v3908 = vmin.f32 %v3907, %v3498
        %v3909 = vrot.slane %v3908, 4
        %v3910 = vmin.f32 %v3908, %v3909
        %v3911 = vrot.slane %v3910, 2
        %v3912 = vmin.f32 %v3910, %v3911
        %v3913 = vrot.slane %v3912, 1
        %v3914 = vmin.f32 %v3912, %v3913
        %v3915 = vmin.f32 %v2995, %v3003
        %v3916 = vmin.f32 %v3915, %v3011
        %v3917 = vmin.f32 %v3916, %v3019
        %v3918 = vmin.f32 %v3917, %v3027
        %v3919 = vmin.f32 %v3918, %v3035
        %v3920 = vmin.f32 %v3919, %v3043
        %v3921 = vmin.f32 %v3920, %v3051
        %v3922 = vmin.f32 %v3921, %v3059
        %v3923 = vmin.f32 %v3922, %v3067
        %v3924 = vmin.f32 %v3923, %v3075
        %v3925 = vmin.f32 %v3924, %v3083
        %v3926 = vmin.f32 %v3925, %v3091
        %v3927 = vmin.f32 %v3926, %v3099
        %v3928 = vmin.f32 %v3927, %v3107
        %v3929 = vmin.f32 %v3928, %v3115
        %v3930 = vmin.f32 %v3929, %v3123
        %v3931 = vmin.f32 %v3930, %v3131
        %v3932 = vmin.f32 %v3931, %v3139
        %v3933 = vmin.f32 %v3932, %v3147
        %v3934 = vmin.f32 %v3933, %v3155
        %v3935 = vmin.f32 %v3934, %v3163
        %v3936 = vmin.f32 %v3935, %v3171
        %v3937 = vmin.f32 %v3936, %v3179
        %v3938 = vmin.f32 %v3937, %v3187
        %v3939 = vmin.f32 %v3938, %v3195
        %v3940 = vmin.f32 %v3939, %v3203
        %v3941 = vmin.f32 %v3940, %v3211
        %v3942 = vmin.f32 %v3941, %v3219
        %v3943 = vmin.f32 %v3942, %v3227
        %v3944 = vmin.f32 %v3943, %v3235
        %v3945 = vmin.f32 %v3944, %v3243
        %v3946 = vmin.f32 %v3945, %v3251
        %v3947 = vmin.f32 %v3946, %v3259
        %v3948 = vmin.f32 %v3947, %v3267
        %v3949 = vmin.f32 %v3948, %v3275
        %v3950 = vmin.f32 %v3949, %v3283
        %v3951 = vmin.f32 %v3950, %v3291
        %v3952 = vmin.f32 %v3951, %v3299
        %v3953 = vmin.f32 %v3952, %v3307
        %v3954 = vmin.f32 %v3953, %v3315
        %v3955 = vmin.f32 %v3954, %v3323
        %v3956 = vmin.f32 %v3955, %v3331
        %v3957 = vmin.f32 %v3956, %v3339
        %v3958 = vmin.f32 %v3957, %v3347
        %v3959 = vmin.f32 %v3958, %v3355
        %v3960 = vmin.f32 %v3959, %v3363
        %v3961 = vmin.f32 %v3960, %v3371
        %v3962 = vmin.f32 %v3961, %v3379
        %v3963 = vmin.f32 %v3962, %v3387
        %v3964 = vmin.f32 %v3963, %v3395
        %v3965 = vmin.f32 %v3964, %v3403
        %v3966 = vmin.f32 %v3965, %v3411
        %v3967 = vmin.f32 %v3966, %v3419
        %v3968 = vmin.f32 %v3967, %v3427
        %v3969 = vmin.f32 %v3968, %v3435
        %v3970 = vmin.f32 %v3969, %v3443
        %v3971 = vmin.f32 %v3970, %v3451
        %v3972 = vmin.f32 %v3971, %v3459
        %v3973 = vmin.f32 %v3972, %v3467
        %v3974 = vmin.f32 %v3973, %v3475
        %v3975 = vmin.f32 %v3974, %v3483
        %v3976 = vmin.f32 %v3975, %v3491
        %v3977 = vmin.f32 %v3976, %v3499
        %v3978 = vrot.slane %v3977, 4
        %v3979 = vmin.f32 %v3977, %v3978
        %v3980 = vrot.slane %v3979, 2
        %v3981 = vmin.f32 %v3979, %v3980
        %v3982 = vrot.slane %v3981, 1
        %v3983 = vmin.f32 %v3981, %v3982
        %v3984 = vmin.f32 %v2996, %v3004
        %v3985 = vmin.f32 %v3984, %v3012
        %v3986 = vmin.f32 %v3985, %v3020
        %v3987 = vmin.f32 %v3986, %v3028
        %v3988 = vmin.f32 %v3987, %v3036
        %v3989 = vmin.f32 %v3988, %v3044
        %v3990 = vmin.f32 %v3989, %v3052
        %v3991 = vmin.f32 %v3990, %v3060
        %v3992 = vmin.f32 %v3991, %v3068
        %v3993 = vmin.f32 %v3992, %v3076
        %v3994 = vmin.f32 %v3993, %v3084
        %v3995 = vmin.f32 %v3994, %v3092
        %v3996 = vmin.f32 %v3995, %v3100
        %v3997 = vmin.f32 %v3996, %v3108
        %v3998 = vmin.f32 %v3997, %v3116
        %v3999 = vmin.f32 %v3998, %v3124
        %v4000 = vmin.f32 %v3999, %v3132
        %v4001 = vmin.f32 %v4000, %v3140
        %v4002 = vmin.f32 %v4001, %v3148
        %v4003 = vmin.f32 %v4002, %v3156
        %v4004 = vmin.f32 %v4003, %v3164
        %v4005 = vmin.f32 %v4004, %v3172
        %v4006 = vmin.f32 %v4005, %v3180
        %v4007 = vmin.f32 %v4006, %v3188
        %v4008 = vmin.f32 %v4007, %v3196
        %v4009 = vmin.f32 %v4008, %v3204
        %v4010 = vmin.f32 %v4009, %v3212
        %v4011 = vmin.f32 %v4010, %v3220
        %v4012 = vmin.f32 %v4011, %v3228
        %v4013 = vmin.f32 %v4012, %v3236
        %v4014 = vmin.f32 %v4013, %v3244
        %v4015 = vmin.f32 %v4014, %v3252
        %v4016 = vmin.f32 %v4015, %v3260
        %v4017 = vmin.f32 %v4016, %v3268
        %v4018 = vmin.f32 %v4017, %v3276
        %v4019 = vmin.f32 %v4018, %v3284
        %v4020 = vmin.f32 %v4019, %v3292
        %v4021 = vmin.f32 %v4020, %v3300
        %v4022 = vmin.f32 %v4021, %v3308
        %v4023 = vmin.f32 %v4022, %v3316
        %v4024 = vmin.f32 %v4023, %v3324
        %v4025 = vmin.f32 %v4024, %v3332
        %v4026 = vmin.f32 %v4025, %v3340
        %v4027 = vmin.f32 %v4026, %v3348
        %v4028 = vmin.f32 %v4027, %v3356
        %v4029 = vmin.f32 %v4028, %v3364
        %v4030 = vmin.f32 %v4029, %v3372
        %v4031 = vmin.f32 %v4030, %v3380
        %v4032 = vmin.f32 %v4031, %v3388
        %v4033 = vmin.f32 %v4032, %v3396
        %v4034 = vmin.f32 %v4033, %v3404
        %v4035 = vmin.f32 %v4034, %v3412
        %v4036 = vmin.f32 %v4035, %v3420
        %v4037 = vmin.f32 %v4036, %v3428
        %v4038 = vmin.f32 %v4037, %v3436
        %v4039 = vmin.f32 %v4038, %v3444
        %v4040 = vmin.f32 %v4039, %v3452
        %v4041 = vmin.f32 %v4040, %v3460
        %v4042 = vmin.f32 %v4041, %v3468
        %v4043 = vmin.f32 %v4042, %v3476
        %v4044 = vmin.f32 %v4043, %v3484
        %v4045 = vmin.f32 %v4044, %v3492
        %v4046 = vmin.f32 %v4045, %v3500
        %v4047 = vrot.slane %v4046, 4
        %v4048 = vmin.f32 %v4046, %v4047
        %v4049 = vrot.slane %v4048, 2
        %v4050 = vmin.f32 %v4048, %v4049
        %v4051 = vrot.slane %v4050, 1
        %v4052 = vmin.f32 %v4050, %v4051
        %p4053 = scmp.eq.s32.totalorder %s23, 0
        // Predicated region
        $region29: #{tpu_custom_call.1} parent=27 // pred_check
          %p4054 = pneg %p4053
        $region30: #{tpu_custom_call.1} parent=27 // pred_check_branch
          %4056 = sbr.rel (%p4054) target = $region32
        $region31: #{tpu_custom_call.1} parent=27 // pred_region
          %v4065 = vcombine.low %v3569, %v3638
          %v4066 = vcombine.low %v3707, %v3776
          %v4067 = vcombine.low %v3845, %v3914
          %v4068 = vcombine.low %v3983, %v4052
          %v4070 = vunpack.c.l.s4 1966171168
          %v4071 = vunpack.c.0.s8 %v4070
          %v4072 = vlaneseq
          %v4073 = vshrl.u32 %v4072, 7
          %v4074 = vsub.s32 %v4071, %v4073
          %v4075 = vrot.slane %v4065, %v4074
          %v4077 = vunpack.c.l.s4 1966171168
          %v4078 = vunpack.c.0.s8 %v4077
          %v4079 = vlaneseq
          %v4080 = vshrl.u32 %v4079, 7
          %v4081 = vsub.s32 %v4078, %v4080
          %v4082 = vrot.slane %v4066, %v4081
          %v4084 = vunpack.c.l.s4 1966171168
          %v4085 = vunpack.c.0.s8 %v4084
          %v4086 = vlaneseq
          %v4087 = vshrl.u32 %v4086, 7
          %v4088 = vsub.s32 %v4085, %v4087
          %v4089 = vrot.slane %v4067, %v4088
          %v4091 = vunpack.c.l.s4 1966171168
          %v4092 = vunpack.c.0.s8 %v4091
          %v4093 = vlaneseq
          %v4094 = vshrl.u32 %v4093, 7
          %v4095 = vsub.s32 %v4092, %v4094
          %v4096 = vrot.slane %v4068, %v4095
          %v4097 = vcombine.low %v4075, %v4082
          %v4098 = vcombine.low %v4089, %v4096
          %v4100 = vunpack.c.l.s4 1966171168
          %v4101 = vunpack.c.0.s8 %v4100
          %v4102 = vlaneseq
          %v4103 = vshrl.u32 %v4102, 7
          %v4104 = vsub.s32 %v4101, %v4103
          %v4105 = vrot.slane %v4097, %v4104
          %v4107 = vunpack.c.l.s4 1966171168
          %v4108 = vunpack.c.0.s8 %v4107
          %v4109 = vlaneseq
          %v4110 = vshrl.u32 %v4109, 7
          %v4111 = vsub.s32 %v4108, %v4110
          %v4112 = vrot.slane %v4098, %v4111
          %v4113 = vcombine.low %v4105, %v4112
          %4115 = vst [vmem:[%s194] sm:$0xff] %v4113
        $region32: #{tpu_custom_call.1} parent=27 // pred_fallthru
          _
        %p4116 = scmp.ne.s32.totalorder %s23, 0
        // Predicated region
        $region33: #{tpu_custom_call.1} parent=27 // pred_check
          %p4117 = pneg %p4116
        $region34: #{tpu_custom_call.1} parent=27 // pred_check_branch
          %4119 = sbr.rel (%p4117) target = $region36
        $region35: #{tpu_custom_call.1} parent=27 // pred_region
          %v4120 = vld [vmem:[%s194] sm:$0xff]
          %v4129 = vcombine.low %v3569, %v3638
          %v4130 = vcombine.low %v3707, %v3776
          %v4131 = vcombine.low %v3845, %v3914
          %v4132 = vcombine.low %v3983, %v4052
          %v4134 = vunpack.c.l.s4 1966171168
          %v4135 = vunpack.c.0.s8 %v4134
          %v4136 = vlaneseq
          %v4137 = vshrl.u32 %v4136, 7
          %v4138 = vsub.s32 %v4135, %v4137
          %v4139 = vrot.slane %v4129, %v4138
          %v4141 = vunpack.c.l.s4 1966171168
          %v4142 = vunpack.c.0.s8 %v4141
          %v4143 = vlaneseq
          %v4144 = vshrl.u32 %v4143, 7
          %v4145 = vsub.s32 %v4142, %v4144
          %v4146 = vrot.slane %v4130, %v4145
          %v4148 = vunpack.c.l.s4 1966171168
          %v4149 = vunpack.c.0.s8 %v4148
          %v4150 = vlaneseq
          %v4151 = vshrl.u32 %v4150, 7
          %v4152 = vsub.s32 %v4149, %v4151
          %v4153 = vrot.slane %v4131, %v4152
          %v4155 = vunpack.c.l.s4 1966171168
          %v4156 = vunpack.c.0.s8 %v4155
          %v4157 = vlaneseq
          %v4158 = vshrl.u32 %v4157, 7
          %v4159 = vsub.s32 %v4156, %v4158
          %v4160 = vrot.slane %v4132, %v4159
          %v4161 = vcombine.low %v4139, %v4146
          %v4162 = vcombine.low %v4153, %v4160
          %v4164 = vunpack.c.l.s4 1966171168
          %v4165 = vunpack.c.0.s8 %v4164
          %v4166 = vlaneseq
          %v4167 = vshrl.u32 %v4166, 7
          %v4168 = vsub.s32 %v4165, %v4167
          %v4169 = vrot.slane %v4161, %v4168
          %v4171 = vunpack.c.l.s4 1966171168
          %v4172 = vunpack.c.0.s8 %v4171
          %v4173 = vlaneseq
          %v4174 = vshrl.u32 %v4173, 7
          %v4175 = vsub.s32 %v4172, %v4174
          %v4176 = vrot.slane %v4162, %v4175
          %v4177 = vcombine.low %v4169, %v4176
          %v4179 = vmin.f32 %v4120, %v4177
          %4180 = vst [vmem:[%s194] sm:$0xff] %v4179
        $region36: #{tpu_custom_call.1} parent=27 // pred_fallthru
          _
        %p4181 = scmp.eq.s32.totalorder %s23, 1
        // Predicated region
        $region37: #{tpu_custom_call.1} parent=27 // pred_check
          %p4182 = pneg %p4181
        $region38: #{tpu_custom_call.1} parent=27 // pred_check_branch
          %4184 = sbr.rel (%p4182) target = $region40
        $region39: #{tpu_custom_call.1} parent=27 // pred_region
          %v4185 = vld [vmem:[%s194] sm:$0xff]
          %vm4186 = vcmp.lt.f32.partialorder %v4185, 4.0
          %v4187 = vsel %vm4186, 1.0, 0.0
          %4188 = vst [vmem:[%s194] sm:$0xff] %v4187
        $region40: #{tpu_custom_call.1} parent=27 // pred_fallthru
          _
        %s4189 = sand.u32 %s101, 1
        %s4190 = scalar_lea.sflag [#allocation3], %s4189
        %s4191 = sand.u32 %s101, 1
        %s4192 = smul.addr %s4191, 8
        %s4193 = scalar_lea.vmem [#allocation2], %s4192
        // Predicated region
        $region41: #{tpu_custom_call.1} parent=27 // pred_check
          %p4194 = pneg %p111
        $region42: #{tpu_custom_call.1} parent=27 // pred_check_branch
          %4196 = sbr.rel (%p4194) target = $region44
        $region43: #{tpu_custom_call.1} parent=27 // pred_region
          %s4197 = smul.u32 8, %s22
          %s4199 = ssub.s32 128, 128
          %4200 = vsyncadd %s4190, %s4199
          %s4201 = smul.addr %s21, 8
          %s4202 = sadd.s32 %s4197, %s4201
          %s4203 = smul.addr %s4202, 16
          %s4204 = scalar_lea.hbm %s2, %s4203
          %s4206 = sshll.u32 %s4193, 4
          %s4207 = int_to_ptr.vmem [resolvable:$true] %s4206
          %4209 = dma.vmem_to_hbm [thread:$0]  %s4207, 128, %s4204, %s4190
        $region44: #{tpu_custom_call.1} parent=27 // pred_fallthru
          _
      $region28: #{tpu_custom_call.1} parent=5 // pred_fallthru
        _
      %p4210 = scmp.le.s32.totalorder 2, %s11
      // Predicated region
      $region45: #{tpu_custom_call.1} parent=5 // pred_check
        %p4211 = pneg %p4210
      $region46: #{tpu_custom_call.1} parent=5 // pred_check_branch
        %4213 = sbr.rel (%p4211) target = $region48
      $region47: #{tpu_custom_call.1} parent=5 // pred_region
        %s4214 = ssub.s32 %s11, 2
        // Predicated region
        $region49: #{tpu_custom_call.1} parent=47 // pred_check
          %p4215 = pneg %p117
        $region50: #{tpu_custom_call.1} parent=47 // pred_check_branch
          %4217 = sbr.rel (%p4215) target = $region52
        $region51: #{tpu_custom_call.1} parent=47 // pred_region
          %s4218 = sand.u32 %s102, 1
          %s4219 = scalar_lea.sflag [#allocation3], %s4218
          %s4220 = sand.u32 %s102, 1
          %s4221 = smul.addr %s4220, 8
          %s4222 = scalar_lea.vmem [#allocation2], %s4221
          %4223 = dma.done %s4219, 128
        $region52: #{tpu_custom_call.1} parent=47 // pred_fallthru
          _
      $region48: #{tpu_custom_call.1} parent=5 // pred_fallthru
        _
    $region6: #{tpu_custom_call.1} parent=1 // loop_footer
      %s15 = sadd.s32 1, %s11
    $region7: #{tpu_custom_call.1} parent=1 // loop_footer_branch
      %10 = sbr.rel target = $region3
    $region8: #{tpu_custom_call.1} parent=1 // loop_exit
      _
    %4224 = vsyncpa [#allocation3], 1
    %s4225 = scalar_lea.sflag [#allocation3], 1
    %4226 = vsyncpa %s4225, 1

</llo_original>
